<compile_context>
chip_gen: v5e
topology: v5e:2x2
jax: 0.10.0
libtpu: 0.0.40
codegen_flags: <defaults>
</compile_context>

<pallas_src>
import functools

import jax
import jax.numpy as jnp
from jax.experimental import pallas as pl
from jax.experimental.pallas import tpu as pltpu

# ----------------------------- config (small synthetic shapes) -----------------------------
B = 2                              # batch of images
C, H, W = 4, 16, 16                # NCHW image
CHW = C * H * W
VIS_DIM = 32                       # clip_model.visual.output_dim
CTX_DIM = 32                       # clip_model.ln_final.weight.shape[0]
META_HIDDEN = VIS_DIM // 16        # meta_net hidden = 2
N_CLS = 3
N_CTX = 4
N_ATT1, N_ATT2 = 2, 2              # ATPrompt, atp_num = 2
N_HEADS = 4
HEAD_DIM = CTX_DIM // N_HEADS      # 8
SEQ_LEN = 16
CTX_START = 1 + N_ATT1 + 1 + N_ATT2 + 1          # = 7 (prefix|att1|mid1|att2|mid2| ctx ...)
N_SUF = SEQ_LEN - (CTX_START + N_CTX)            # = 5
MLP_HIDDEN = 4 * CTX_DIM           # 128
OUT_PAD = 128                      # lane-dense padded class dim for the output slab
DTYPE = jnp.float32


# ----------------------------- the single fused kernel (grid over images) -----------------------------
def _fused_clip_kernel(eot_pos,
                       x_ref, base_ref,
                       wimg_ref, bimg_ref, mw1_ref, mb1_ref, mw2_ref, mb2_ref,
                       ln1g_ref, ln1b_ref,
                       wq_ref, bq_ref, wk_ref, bk_ref, wv_ref, bv_ref,
                       wo_ref, bo_ref,
                       ln2g_ref, ln2b_ref,
                       fw1_ref, fb1_ref, fw2_ref, fb2_ref,
                       lnfg_ref, lnfb_ref,
                       tproj_ref, scale_ref,
                       o_ref):
    f32, bf16 = jnp.float32, jnp.bfloat16
    M = N_CLS * SEQ_LEN

    def ln(v, g_ref, b_ref):
        mu = jnp.mean(v, axis=-1, keepdims=True)
        var = jnp.mean((v - mu) ** 2, axis=-1, keepdims=True)
        return (v - mu) * jax.lax.rsqrt(var + 1e-5) * g_ref[...] + b_ref[...]

    # ---- image stem -> L2 normalise -> meta_net (CoCoOp per-image bias) ----
    x_img = x_ref[...]                                                     # [1, CHW]
    feat = jnp.dot(x_img.astype(bf16), wimg_ref[...],
                   preferred_element_type=f32) + bimg_ref[...]             # [1, VIS]
    feat = feat * jax.lax.rsqrt(jnp.sum(feat * feat, axis=-1, keepdims=True) + 1e-12)
    hid = jnp.maximum(jnp.dot(feat, mw1_ref[...], preferred_element_type=f32)
                      + mb1_ref[...], 0.0)                                 # ReLU, [1, VIS//16]
    bias = jnp.dot(hid, mw2_ref[...], preferred_element_type=f32) + mb2_ref[...]   # [1, D]

    # ---- prompt assembly: base already holds (prefix|att1|mid1|att2|mid2|ctx|suffix)+pos;
    #      only the ctx rows get the per-image bias (mask built from iota, no extra input) ----
    pos_in_seq = jax.lax.broadcasted_iota(jnp.int32, (N_CLS, SEQ_LEN, 1), 1).reshape(M, 1)
    ctx_rows = ((pos_in_seq >= CTX_START) & (pos_in_seq < CTX_START + N_CTX)).astype(f32)
    xf = base_ref[...] + ctx_rows * bias                                   # [M, D]

    # ---- residual attention block: x = x + attn(ln_1(x)); heads pre-split in the weights ----
    h1 = ln(xf, ln1g_ref, ln1b_ref).astype(bf16)
    qpos = jax.lax.broadcasted_iota(jnp.int32, (SEQ_LEN, SEQ_LEN), 0)
    kpos = jax.lax.broadcasted_iota(jnp.int32, (SEQ_LEN, SEQ_LEN), 1)
    causal = jnp.where(kpos > qpos, -1e9, 0.0).astype(f32)[None]           # [1, L, L]
    att_scale = float(HEAD_DIM) ** -0.5

    attn = jnp.zeros((M, CTX_DIM), f32)
    for hsel in range(N_HEADS):                     # static loop; no lane slicing / lane concat
        qh = jnp.dot(h1, wq_ref[hsel], preferred_element_type=f32) + bq_ref[hsel]   # [M, hd]
        kh = jnp.dot(h1, wk_ref[hsel], preferred_element_type=f32) + bk_ref[hsel]
        vh = jnp.dot(h1, wv_ref[hsel], preferred_element_type=f32) + bv_ref[hsel]
        q3 = qh.reshape(N_CLS, SEQ_LEN, HEAD_DIM).astype(bf16)
        k3 = kh.reshape(N_CLS, SEQ_LEN, HEAD_DIM).astype(bf16)
        v3 = vh.reshape(N_CLS, SEQ_LEN, HEAD_DIM).astype(bf16)
        s = jnp.einsum("bqd,bkd->bqk", q3, k3,
                       preferred_element_type=f32) * att_scale + causal    # [n_cls, L, L]
        s = s - jnp.max(s, axis=-1, keepdims=True)
        pexp = jnp.exp(s)
        pexp = pexp * pl.reciprocal(jnp.sum(pexp, axis=-1, keepdims=True), approx=True)
        oh = jnp.einsum("bqk,bkd->bqd", pexp.astype(bf16), v3,
                        preferred_element_type=f32)                        # [n_cls, L, hd]
        # fold the output projection per head and accumulate (no head concat needed)
        attn = attn + jnp.dot(oh.reshape(M, HEAD_DIM).astype(bf16), wo_ref[hsel],
                              preferred_element_type=f32)
    xf = xf + attn + bo_ref[...]

    # ---- x = x + mlp(ln_2(x))   (QuickGELU, as in CLIP) ----
    h2 = ln(xf, ln2g_ref, ln2b_ref)
    m = jnp.dot(h2.astype(bf16), fw1_ref[...], preferred_element_type=f32) + fb1_ref[...]
    m = m * jax.nn.sigmoid(1.702 * m)
    xf = xf + jnp.dot(m.astype(bf16), fw2_ref[...], preferred_element_type=f32) + fb2_ref[...]

    # ---- ln_final -> EOT row select (iota one-hot padded to OUT_PAD rows, built in-kernel)
    #      -> text projection -> L2 normalise ----
    xf = ln(xf, lnfg_ref, lnfb_ref)                                        # [M, D]
    col = jax.lax.broadcasted_iota(jnp.int32, (OUT_PAD, M), 1)
    row = jax.lax.broadcasted_iota(jnp.int32, (OUT_PAD, M), 0)
    sel = jnp.zeros((OUT_PAD, M), f32)
    for c in range(N_CLS):                          # eot_pos is a static Python tuple
        sel = sel + jnp.where((row == c) & (col == c * SEQ_LEN + int(eot_pos[c])), 1.0, 0.0)
    x_eot = jnp.dot(sel, xf, preferred_element_type=f32)                   # [OUT_PAD, D] (rows >= N_CLS are 0)
    tfeat = jnp.dot(x_eot.astype(bf16), tproj_ref[...],
                    preferred_element_type=f32)                            # [OUT_PAD, VIS]
    tfeat = tfeat * jax.lax.rsqrt(jnp.sum(tfeat * tfeat, axis=-1, keepdims=True) + 1e-12)

    # ---- logits for this image, written lane-dense (padded lanes are exact zeros) ----
    logits = jax.lax.dot_general(feat, tfeat, (((1,), (1,)), ((), ())),
                                 preferred_element_type=f32)               # [1, OUT_PAD]
    o_ref[...] = (scale_ref[0, 0] * logits).astype(o_ref.dtype)


def _resident(shape):
    """Grid-invariant full-block spec (stays VMEM-resident across grid steps)."""
    rank = len(shape)
    return pl.BlockSpec(shape, lambda b, rank=rank: (0,) * rank)


# ----------------------------- model forward (one pallas_call) -----------------------------
def custom_clip_forward(p, image, eot_pos):
    b_sz = image.shape[0]
    x_rows = image.reshape(b_sz, 1, CHW).astype(DTYPE)

    # Image-independent prompt slab (prefix|att1|mid1|att2|mid2|ctx|suffix) + pos emb,
    # flattened to [N_CLS*L, D].  Built once per forward on the XLA side (tiny).
    ctx_bc = jnp.broadcast_to(p["ctx"][None], (N_CLS, N_CTX, CTX_DIM))
    att1_bc = jnp.broadcast_to(p["ctx_att1"][None], (N_CLS, N_ATT1, CTX_DIM))
    att2_bc = jnp.broadcast_to(p["ctx_att2"][None], (N_CLS, N_ATT2, CTX_DIM))
    base = jnp.concatenate(
        [p["token_prefix"], att1_bc, p["token_middle1"],
         att2_bc, p["token_middle2"], ctx_bc, p["token_suffix"]], axis=1)   # [N_CLS, L, D]
    base = (base + p["pos_emb"][None, :, :]).reshape(N_CLS * SEQ_LEN, CTX_DIM)

    scale_11 = jnp.exp(p["logit_scale"]).reshape(1, 1)

    kernel = functools.partial(_fused_clip_kernel, eot_pos)
    out = pl.pallas_call(
        kernel,
        grid=(b_sz,),
        out_shape=jax.ShapeDtypeStruct((b_sz, 1, OUT_PAD), DTYPE),
        in_specs=[
            pl.BlockSpec((None, 1, CHW), lambda b: (b, 0, 0)),              # image row (per step)
            _resident((N_CLS * SEQ_LEN, CTX_DIM)),                          # base prompts (+pos)
            _resident((CHW, VIS_DIM)), _resident((1, VIS_DIM)),             # image stem
            _resident((VIS_DIM, META_HIDDEN)), _resident((1, META_HIDDEN)), # meta_net l1
            _resident((META_HIDDEN, CTX_DIM)), _resident((1, CTX_DIM)),     # meta_net l2
            _resident((1, CTX_DIM)), _resident((1, CTX_DIM)),               # ln_1
            _resident((N_HEADS, CTX_DIM, HEAD_DIM)), _resident((N_HEADS, 1, HEAD_DIM)),  # Wq,bq
            _resident((N_HEADS, CTX_DIM, HEAD_DIM)), _resident((N_HEADS, 1, HEAD_DIM)),  # Wk,bk
            _resident((N_HEADS, CTX_DIM, HEAD_DIM)), _resident((N_HEADS, 1, HEAD_DIM)),  # Wv,bv
            _resident((N_HEADS, HEAD_DIM, CTX_DIM)), _resident((1, CTX_DIM)),            # Wo,bo
            _resident((1, CTX_DIM)), _resident((1, CTX_DIM)),               # ln_2
            _resident((CTX_DIM, MLP_HIDDEN)), _resident((1, MLP_HIDDEN)),   # mlp c_fc
            _resident((MLP_HIDDEN, CTX_DIM)), _resident((1, CTX_DIM)),      # mlp c_proj
            _resident((1, CTX_DIM)), _resident((1, CTX_DIM)),               # ln_final
            _resident((CTX_DIM, VIS_DIM)),                                  # text projection
            pl.BlockSpec((1, 1), lambda b: (0, 0),
                         memory_space=pltpu.MemorySpace.SMEM),              # logit scale
        ],
        out_specs=pl.BlockSpec((None, 1, OUT_PAD), lambda b: (b, 0, 0)),
        compiler_params=pltpu.CompilerParams(dimension_semantics=("parallel",)),
    )(x_rows, base,
      p["w_img"], p["b_img"], p["meta_w1"], p["meta_b1"], p["meta_w2"], p["meta_b2"],
      p["ln1_g"], p["ln1_b"],
      p["wq_h"], p["bq_h"], p["wk_h"], p["bk_h"], p["wv_h"], p["bv_h"],
      p["wo_h"], p["bo"],
      p["ln2_g"], p["ln2_b"],
      p["mlp_w1"], p["mlp_b1"], p["mlp_w2"], p["mlp_b2"],
      p["lnf_g"], p["lnf_b"],
      p["text_proj"], scale_11)

    # eval path (module not in training mode) -> return logits
    # TODO(synk): training branch (F.cross_entropy over logits/label) not implemented.
    return out.reshape(b_sz, OUT_PAD)[:, :N_CLS]


# ----------------------------- parameter init (deterministic, synthetic) -----------------------------
def init_params(key):
    ks = iter(jax.random.split(key, 32))

    def nrm(shape, std=0.02):
        return (std * jax.random.normal(next(ks), shape)).astype(DTYPE)

    bf16 = jnp.bfloat16
    p = {}
    # synthetic image encoder stem (stands in for clip_model.visual); MXU weight stored bf16
    p["w_img"] = nrm((CHW, VIS_DIM)).astype(bf16)
    p["b_img"] = jnp.zeros((1, VIS_DIM), DTYPE)
    # PromptLearner parameters / buffers
    p["ctx"] = nrm((N_CTX, CTX_DIM), 0.02)
    p["ctx_att1"] = nrm((N_ATT1, CTX_DIM), 0.01)
    p["ctx_att2"] = nrm((N_ATT2, CTX_DIM), 0.01)
    p["ctx_att3"] = nrm((1, CTX_DIM), 0.01)            # defined but unused (atp_num == 2)
    p["token_prefix"] = nrm((N_CLS, 1, CTX_DIM))
    p["token_middle1"] = nrm((N_CLS, 1, CTX_DIM))
    p["token_middle2"] = nrm((N_CLS, 1, CTX_DIM))
    p["token_suffix"] = nrm((N_CLS, N_SUF, CTX_DIM))
    # meta_net: Linear(vis, vis//16) -> ReLU -> Linear(vis//16, ctx_dim)   (tiny, kept f32)
    p["meta_w1"] = nrm((VIS_DIM, META_HIDDEN))
    p["meta_b1"] = jnp.zeros((1, META_HIDDEN), DTYPE)
    p["meta_w2"] = nrm((META_HIDDEN, CTX_DIM))
    p["meta_b2"] = jnp.zeros((1, CTX_DIM), DTYPE)
    # TextEncoder: 1-layer synthetic CLIP text transformer; attention weights stored head-major
    p["pos_emb"] = nrm((SEQ_LEN, CTX_DIM), 0.01)
    p["ln1_g"] = jnp.ones((1, CTX_DIM), DTYPE); p["ln1_b"] = jnp.zeros((1, CTX_DIM), DTYPE)
    p["ln2_g"] = jnp.ones((1, CTX_DIM), DTYPE); p["ln2_b"] = jnp.zeros((1, CTX_DIM), DTYPE)
    p["lnf_g"] = jnp.ones((1, CTX_DIM), DTYPE); p["lnf_b"] = jnp.zeros((1, CTX_DIM), DTYPE)

    w_qkv = nrm((CTX_DIM, 3 * CTX_DIM))

    def head_in(w):          # [D, D] -> [H, D, hd]  (column block h*hd:(h+1)*hd of w)
        return w.reshape(CTX_DIM, N_HEADS, HEAD_DIM).transpose(1, 0, 2)

    p["wq_h"] = head_in(w_qkv[:, 0:CTX_DIM]).astype(bf16)
    p["wk_h"] = head_in(w_qkv[:, CTX_DIM:2 * CTX_DIM]).astype(bf16)
    p["wv_h"] = head_in(w_qkv[:, 2 * CTX_DIM:]).astype(bf16)
    p["bq_h"] = jnp.zeros((N_HEADS, 1, HEAD_DIM), DTYPE)
    p["bk_h"] = jnp.zeros((N_HEADS, 1, HEAD_DIM), DTYPE)
    p["bv_h"] = jnp.zeros((N_HEADS, 1, HEAD_DIM), DTYPE)
    p["wo_h"] = nrm((CTX_DIM, CTX_DIM)).reshape(N_HEADS, HEAD_DIM, CTX_DIM).astype(bf16)
    p["bo"] = jnp.zeros((1, CTX_DIM), DTYPE)
    p["mlp_w1"] = nrm((CTX_DIM, MLP_HIDDEN)).astype(bf16)
    p["mlp_b1"] = jnp.zeros((1, MLP_HIDDEN), DTYPE)
    p["mlp_w2"] = nrm((MLP_HIDDEN, CTX_DIM)).astype(bf16)
    p["mlp_b2"] = jnp.zeros((1, CTX_DIM), DTYPE)
    p["text_proj"] = nrm((CTX_DIM, VIS_DIM)).astype(bf16)
    p["logit_scale"] = jnp.asarray(jnp.log(1.0 / 0.07), DTYPE)
    # synthetic tokenized prompts; EOT (largest id) at varying positions -> argmax gather
    tok = jnp.tile(jnp.arange(SEQ_LEN, dtype=jnp.int32)[None, :], (N_CLS, 1))
    eot_pos = jnp.array([13, 12, 14], dtype=jnp.int32)
    tok = tok.at[jnp.arange(N_CLS), eot_pos].set(49407)
    p["tokenized_prompts"] = tok
    return p


# ----------------------------- main -----------------------------
if __name__ == "__main__":
    root = jax.random.PRNGKey(0)
    k_params, k_img = jax.random.split(root)
    params = init_params(k_params)
    image = jax.random.normal(k_img, (B, C, H, W), dtype=jnp.float32)

    # EOT positions come from the constant tokenized-prompt buffer -> static gather indices
    eot_pos = tuple(int(i) for i in jnp.argmax(params["tokenized_prompts"], axis=-1))

    fwd = jax.jit(custom_clip_forward, static_argnums=(2,))
    logits = jax.block_until_ready(fwd(params, image, eot_pos))

    assert logits.shape == (B, N_CLS), logits.shape
    assert bool(jnp.all(jnp.isfinite(logits)))
    print("KERNEL_OK")
</pallas_src>

<mosaic_0001>
module attributes {stable_mosaic.version = 11 : i64} {
  func.func @_fused_clip_kernel(%arg0: i32, %arg1: memref<1x1x1024xf32, #tpu.memory_space<vmem>>, %arg2: memref<48x32xf32, #tpu.memory_space<vmem>>, %arg3: memref<1024x32xbf16, #tpu.memory_space<vmem>>, %arg4: memref<1x32xf32, #tpu.memory_space<vmem>>, %arg5: memref<32x2xf32, #tpu.memory_space<vmem>>, %arg6: memref<1x2xf32, #tpu.memory_space<vmem>>, %arg7: memref<2x32xf32, #tpu.memory_space<vmem>>, %arg8: memref<1x32xf32, #tpu.memory_space<vmem>>, %arg9: memref<1x32xf32, #tpu.memory_space<vmem>>, %arg10: memref<1x32xf32, #tpu.memory_space<vmem>>, %arg11: memref<4x32x8xbf16, #tpu.memory_space<vmem>>, %arg12: memref<4x1x8xf32, #tpu.memory_space<vmem>>, %arg13: memref<4x32x8xbf16, #tpu.memory_space<vmem>>, %arg14: memref<4x1x8xf32, #tpu.memory_space<vmem>>, %arg15: memref<4x32x8xbf16, #tpu.memory_space<vmem>>, %arg16: memref<4x1x8xf32, #tpu.memory_space<vmem>>, %arg17: memref<4x8x32xbf16, #tpu.memory_space<vmem>>, %arg18: memref<1x32xf32, #tpu.memory_space<vmem>>, %arg19: memref<1x32xf32, #tpu.memory_space<vmem>>, %arg20: memref<1x32xf32, #tpu.memory_space<vmem>>, %arg21: memref<32x128xbf16, #tpu.memory_space<vmem>>, %arg22: memref<1x128xf32, #tpu.memory_space<vmem>>, %arg23: memref<128x32xbf16, #tpu.memory_space<vmem>>, %arg24: memref<1x32xf32, #tpu.memory_space<vmem>>, %arg25: memref<1x32xf32, #tpu.memory_space<vmem>>, %arg26: memref<1x32xf32, #tpu.memory_space<vmem>>, %arg27: memref<32x32xbf16, #tpu.memory_space<vmem>>, %arg28: memref<1x1xf32, #tpu.memory_space<smem>>, %arg29: memref<1x1x128xf32, #tpu.memory_space<vmem>>) attributes {dimension_semantics = [#tpu.dimension_semantics<parallel>], iteration_bounds = array<i64: 2>, scalar_prefetch = 0 : i64, scratch_operands = 0 : i64, tpu.core_type = #tpu.core_type<tc>, window_params = [{transform_indices = @transform_0, window_bounds = array<i64: 1, 1, 1024>}, {pipeline_mode = #tpu.pipeline_mode<synchronous>, transform_indices = @transform_1, window_bounds = array<i64: 48, 32>}, {pipeline_mode = #tpu.pipeline_mode<synchronous>, transform_indices = @transform_2, window_bounds = array<i64: 1024, 32>}, {pipeline_mode = #tpu.pipeline_mode<synchronous>, transform_indices = @transform_3, window_bounds = array<i64: 1, 32>}, {pipeline_mode = #tpu.pipeline_mode<synchronous>, transform_indices = @transform_4, window_bounds = array<i64: 32, 2>}, {pipeline_mode = #tpu.pipeline_mode<synchronous>, transform_indices = @transform_5, window_bounds = array<i64: 1, 2>}, {pipeline_mode = #tpu.pipeline_mode<synchronous>, transform_indices = @transform_6, window_bounds = array<i64: 2, 32>}, {pipeline_mode = #tpu.pipeline_mode<synchronous>, transform_indices = @transform_7, window_bounds = array<i64: 1, 32>}, {pipeline_mode = #tpu.pipeline_mode<synchronous>, transform_indices = @transform_8, window_bounds = array<i64: 1, 32>}, {pipeline_mode = #tpu.pipeline_mode<synchronous>, transform_indices = @transform_9, window_bounds = array<i64: 1, 32>}, {pipeline_mode = #tpu.pipeline_mode<synchronous>, transform_indices = @transform_10, window_bounds = array<i64: 4, 32, 8>}, {pipeline_mode = #tpu.pipeline_mode<synchronous>, transform_indices = @transform_11, window_bounds = array<i64: 4, 1, 8>}, {pipeline_mode = #tpu.pipeline_mode<synchronous>, transform_indices = @transform_12, window_bounds = array<i64: 4, 32, 8>}, {pipeline_mode = #tpu.pipeline_mode<synchronous>, transform_indices = @transform_13, window_bounds = array<i64: 4, 1, 8>}, {pipeline_mode = #tpu.pipeline_mode<synchronous>, transform_indices = @transform_14, window_bounds = array<i64: 4, 32, 8>}, {pipeline_mode = #tpu.pipeline_mode<synchronous>, transform_indices = @transform_15, window_bounds = array<i64: 4, 1, 8>}, {pipeline_mode = #tpu.pipeline_mode<synchronous>, transform_indices = @transform_16, window_bounds = array<i64: 4, 8, 32>}, {pipeline_mode = #tpu.pipeline_mode<synchronous>, transform_indices = @transform_17, window_bounds = array<i64: 1, 32>}, {pipeline_mode = #tpu.pipeline_mode<synchronous>, transform_indices = @transform_18, window_bounds = array<i64: 1, 32>}, {pipeline_mode = #tpu.pipeline_mode<synchronous>, transform_indices = @transform_19, window_bounds = array<i64: 1, 32>}, {pipeline_mode = #tpu.pipeline_mode<synchronous>, transform_indices = @transform_20, window_bounds = array<i64: 32, 128>}, {pipeline_mode = #tpu.pipeline_mode<synchronous>, transform_indices = @transform_21, window_bounds = array<i64: 1, 128>}, {pipeline_mode = #tpu.pipeline_mode<synchronous>, transform_indices = @transform_22, window_bounds = array<i64: 128, 32>}, {pipeline_mode = #tpu.pipeline_mode<synchronous>, transform_indices = @transform_23, window_bounds = array<i64: 1, 32>}, {pipeline_mode = #tpu.pipeline_mode<synchronous>, transform_indices = @transform_24, window_bounds = array<i64: 1, 32>}, {pipeline_mode = #tpu.pipeline_mode<synchronous>, transform_indices = @transform_25, window_bounds = array<i64: 1, 32>}, {pipeline_mode = #tpu.pipeline_mode<synchronous>, transform_indices = @transform_26, window_bounds = array<i64: 32, 32>}, {transform_indices = @transform_27, window_bounds = array<i64: 1, 1>}, {transform_indices = @transform_28, window_bounds = array<i64: 1, 1, 128>}]} {
    %c0 = arith.constant 0 : index
    %c0_0 = arith.constant 0 : index
    %c0_1 = arith.constant 0 : index
    %0 = vector.load %arg1[%c0, %c0_0, %c0_1] : memref<1x1x1024xf32, #tpu.memory_space<vmem>>, vector<1x1x1024xf32>
    %1 = vector.shape_cast %0 : vector<1x1x1024xf32> to vector<1x1024xf32>
    %2 = arith.truncf %1 : vector<1x1024xf32> to vector<1x1024xbf16>
    %c0_2 = arith.constant 0 : index
    %c0_3 = arith.constant 0 : index
    %3 = vector.load %arg3[%c0_2, %c0_3] : memref<1024x32xbf16, #tpu.memory_space<vmem>>, vector<1024x32xbf16>
    %cst = arith.constant dense<0.000000e+00> : vector<1x32xf32>
    %4 = tpu.matmul %2, %3, %cst {dimension_numbers = #tpu.dot_dimension_numbers<[1], [0], [0], [1], [0, 0, 1, 1], [], []>} : vector<1x1024xbf16>, vector<1024x32xbf16>, vector<1x32xf32> -> vector<1x32xf32>
    %c0_4 = arith.constant 0 : index
    %c0_5 = arith.constant 0 : index
    %5 = vector.load %arg4[%c0_4, %c0_5] : memref<1x32xf32, #tpu.memory_space<vmem>>, vector<1x32xf32>
    %6 = arith.addf %4, %5 : vector<1x32xf32>
    %7 = arith.mulf %6, %6 : vector<1x32xf32>
    %cst_6 = arith.constant dense<0.000000e+00> : vector<1xf32>
    %8 = vector.multi_reduction <add>, %7, %cst_6 [1] : vector<1x32xf32> to vector<1xf32>
    %9 = vector.shape_cast %8 : vector<1xf32> to vector<1x1xf32>
    %cst_7 = arith.constant 9.99999996E-13 : f32
    %10 = vector.broadcast %cst_7 : f32 to vector<1x1xf32>
    %11 = arith.addf %9, %10 : vector<1x1xf32>
    %12 = math.rsqrt %11 : vector<1x1xf32>
    %13 = vector.broadcast %12 : vector<1x1xf32> to vector<1x32xf32>
    %14 = arith.mulf %6, %13 : vector<1x32xf32>
    %c0_8 = arith.constant 0 : index
    %c0_9 = arith.constant 0 : index
    %15 = vector.load %arg5[%c0_8, %c0_9] : memref<32x2xf32, #tpu.memory_space<vmem>>, vector<32x2xf32>
    %cst_10 = arith.constant dense<0.000000e+00> : vector<1x2xf32>
    %16 = tpu.matmul %14, %15, %cst_10 {dimension_numbers = #tpu.dot_dimension_numbers<[1], [0], [0], [1], [0, 0, 1, 1], [], []>} : vector<1x32xf32>, vector<32x2xf32>, vector<1x2xf32> -> vector<1x2xf32>
    %c0_11 = arith.constant 0 : index
    %c0_12 = arith.constant 0 : index
    %17 = vector.load %arg6[%c0_11, %c0_12] : memref<1x2xf32, #tpu.memory_space<vmem>>, vector<1x2xf32>
    %18 = arith.addf %16, %17 : vector<1x2xf32>
    %cst_13 = arith.constant 0.000000e+00 : f32
    %19 = vector.broadcast %cst_13 : f32 to vector<1x2xf32>
    %20 = arith.maximumf %18, %19 : vector<1x2xf32>
    %c0_14 = arith.constant 0 : index
    %c0_15 = arith.constant 0 : index
    %21 = vector.load %arg7[%c0_14, %c0_15] : memref<2x32xf32, #tpu.memory_space<vmem>>, vector<2x32xf32>
    %cst_16 = arith.constant dense<0.000000e+00> : vector<1x32xf32>
    %22 = tpu.matmul %20, %21, %cst_16 {dimension_numbers = #tpu.dot_dimension_numbers<[1], [0], [0], [1], [0, 0, 1, 1], [], []>} : vector<1x2xf32>, vector<2x32xf32>, vector<1x32xf32> -> vector<1x32xf32>
    %c0_17 = arith.constant 0 : index
    %c0_18 = arith.constant 0 : index
    %23 = vector.load %arg8[%c0_17, %c0_18] : memref<1x32xf32, #tpu.memory_space<vmem>>, vector<1x32xf32>
    %24 = arith.addf %22, %23 : vector<1x32xf32>
    %25 = tpu.iota {dimensions = array<i32: 1>} : vector<3x16x1xi32>
    %26 = vector.shape_cast %25 : vector<3x16x1xi32> to vector<48x1xi32>
    %c7_i32 = arith.constant 7 : i32
    %27 = vector.broadcast %c7_i32 : i32 to vector<48x1xi32>
    %28 = arith.cmpi sge, %26, %27 : vector<48x1xi32>
    %c11_i32 = arith.constant 11 : i32
    %29 = vector.broadcast %c11_i32 : i32 to vector<48x1xi32>
    %30 = arith.cmpi slt, %26, %29 : vector<48x1xi32>
    %31 = arith.andi %28, %30 : vector<48x1xi1>
    %32 = arith.extui %31 : vector<48x1xi1> to vector<48x1xi32>
    %33 = arith.sitofp %32 : vector<48x1xi32> to vector<48x1xf32>
    %c0_19 = arith.constant 0 : index
    %c0_20 = arith.constant 0 : index
    %34 = vector.load %arg2[%c0_19, %c0_20] : memref<48x32xf32, #tpu.memory_space<vmem>>, vector<48x32xf32>
    %35 = vector.broadcast %33 : vector<48x1xf32> to vector<48x32xf32>
    %36 = vector.broadcast %24 : vector<1x32xf32> to vector<48x32xf32>
    %37 = arith.mulf %35, %36 : vector<48x32xf32>
    %38 = arith.addf %34, %37 : vector<48x32xf32>
    %cst_21 = arith.constant dense<0.000000e+00> : vector<48xf32>
    %39 = vector.multi_reduction <add>, %38, %cst_21 [1] : vector<48x32xf32> to vector<48xf32>
    %40 = vector.shape_cast %39 : vector<48xf32> to vector<48x1xf32>
    %cst_22 = arith.constant 3.200000e+01 : f32
    %41 = vector.broadcast %cst_22 : f32 to vector<48x1xf32>
    %42 = arith.divf %40, %41 : vector<48x1xf32>
    %43 = vector.broadcast %42 : vector<48x1xf32> to vector<48x32xf32>
    %44 = arith.subf %38, %43 : vector<48x32xf32>
    %45 = arith.mulf %44, %44 : vector<48x32xf32>
    %cst_23 = arith.constant dense<0.000000e+00> : vector<48xf32>
    %46 = vector.multi_reduction <add>, %45, %cst_23 [1] : vector<48x32xf32> to vector<48xf32>
    %47 = vector.shape_cast %46 : vector<48xf32> to vector<48x1xf32>
    %cst_24 = arith.constant 3.200000e+01 : f32
    %48 = vector.broadcast %cst_24 : f32 to vector<48x1xf32>
    %49 = arith.divf %47, %48 : vector<48x1xf32>
    %50 = vector.broadcast %42 : vector<48x1xf32> to vector<48x32xf32>
    %51 = arith.subf %38, %50 : vector<48x32xf32>
    %cst_25 = arith.constant 9.99999974E-6 : f32
    %52 = vector.broadcast %cst_25 : f32 to vector<48x1xf32>
    %53 = arith.addf %49, %52 : vector<48x1xf32>
    %54 = math.rsqrt %53 : vector<48x1xf32>
    %55 = vector.broadcast %54 : vector<48x1xf32> to vector<48x32xf32>
    %56 = arith.mulf %51, %55 : vector<48x32xf32>
    %c0_26 = arith.constant 0 : index
    %c0_27 = arith.constant 0 : index
    %57 = vector.load %arg9[%c0_26, %c0_27] : memref<1x32xf32, #tpu.memory_space<vmem>>, vector<1x32xf32>
    %58 = vector.broadcast %57 : vector<1x32xf32> to vector<48x32xf32>
    %59 = arith.mulf %56, %58 : vector<48x32xf32>
    %c0_28 = arith.constant 0 : index
    %c0_29 = arith.constant 0 : index
    %60 = vector.load %arg10[%c0_28, %c0_29] : memref<1x32xf32, #tpu.memory_space<vmem>>, vector<1x32xf32>
    %61 = vector.broadcast %60 : vector<1x32xf32> to vector<48x32xf32>
    %62 = arith.addf %59, %61 : vector<48x32xf32>
    %63 = arith.truncf %62 : vector<48x32xf32> to vector<48x32xbf16>
    %64 = tpu.iota {dimensions = array<i32: 0>} : vector<16x16xi32>
    %65 = tpu.iota {dimensions = array<i32: 1>} : vector<16x16xi32>
    %66 = arith.cmpi sgt, %65, %64 : vector<16x16xi32>
    %cst_30 = arith.constant -1.000000e+09 : f32
    %cst_31 = arith.constant 0.000000e+00 : f32
    %67 = vector.broadcast %cst_30 : f32 to vector<16x16xf32>
    %68 = vector.broadcast %cst_31 : f32 to vector<16x16xf32>
    %69 = arith.select %66, %67, %68 : vector<16x16xi1>, vector<16x16xf32>
    %70 = vector.shape_cast %69 : vector<16x16xf32> to vector<1x16x16xf32>
    %cst_32 = arith.constant 0.000000e+00 : f32
    %71 = vector.broadcast %cst_32 : f32 to vector<48x32xf32>
    %c0_33 = arith.constant 0 : index
    %c0_34 = arith.constant 0 : index
    %c0_35 = arith.constant 0 : index
    %72 = vector.load %arg11[%c0_33, %c0_34, %c0_35] : memref<4x32x8xbf16, #tpu.memory_space<vmem>>, vector<1x32x8xbf16>
    %73 = vector.shape_cast %72 : vector<1x32x8xbf16> to vector<32x8xbf16>
    %cst_36 = arith.constant dense<0.000000e+00> : vector<48x8xf32>
    %74 = tpu.matmul %63, %73, %cst_36 {dimension_numbers = #tpu.dot_dimension_numbers<[1], [0], [0], [1], [0, 0, 1, 1], [], []>} : vector<48x32xbf16>, vector<32x8xbf16>, vector<48x8xf32> -> vector<48x8xf32>
    %c0_37 = arith.constant 0 : index
    %c0_38 = arith.constant 0 : index
    %c0_39 = arith.constant 0 : index
    %75 = vector.load %arg12[%c0_37, %c0_38, %c0_39] : memref<4x1x8xf32, #tpu.memory_space<vmem>>, vector<1x1x8xf32>
    %76 = vector.shape_cast %75 : vector<1x1x8xf32> to vector<1x8xf32>
    %77 = vector.broadcast %76 : vector<1x8xf32> to vector<48x8xf32>
    %78 = arith.addf %74, %77 : vector<48x8xf32>
    %c0_40 = arith.constant 0 : index
    %c0_41 = arith.constant 0 : index
    %c0_42 = arith.constant 0 : index
    %79 = vector.load %arg13[%c0_40, %c0_41, %c0_42] : memref<4x32x8xbf16, #tpu.memory_space<vmem>>, vector<1x32x8xbf16>
    %80 = vector.shape_cast %79 : vector<1x32x8xbf16> to vector<32x8xbf16>
    %cst_43 = arith.constant dense<0.000000e+00> : vector<48x8xf32>
    %81 = tpu.matmul %63, %80, %cst_43 {dimension_numbers = #tpu.dot_dimension_numbers<[1], [0], [0], [1], [0, 0, 1, 1], [], []>} : vector<48x32xbf16>, vector<32x8xbf16>, vector<48x8xf32> -> vector<48x8xf32>
    %c0_44 = arith.constant 0 : index
    %c0_45 = arith.constant 0 : index
    %c0_46 = arith.constant 0 : index
    %82 = vector.load %arg14[%c0_44, %c0_45, %c0_46] : memref<4x1x8xf32, #tpu.memory_space<vmem>>, vector<1x1x8xf32>
    %83 = vector.shape_cast %82 : vector<1x1x8xf32> to vector<1x8xf32>
    %84 = vector.broadcast %83 : vector<1x8xf32> to vector<48x8xf32>
    %85 = arith.addf %81, %84 : vector<48x8xf32>
    %c0_47 = arith.constant 0 : index
    %c0_48 = arith.constant 0 : index
    %c0_49 = arith.constant 0 : index
    %86 = vector.load %arg15[%c0_47, %c0_48, %c0_49] : memref<4x32x8xbf16, #tpu.memory_space<vmem>>, vector<1x32x8xbf16>
    %87 = vector.shape_cast %86 : vector<1x32x8xbf16> to vector<32x8xbf16>
    %cst_50 = arith.constant dense<0.000000e+00> : vector<48x8xf32>
    %88 = tpu.matmul %63, %87, %cst_50 {dimension_numbers = #tpu.dot_dimension_numbers<[1], [0], [0], [1], [0, 0, 1, 1], [], []>} : vector<48x32xbf16>, vector<32x8xbf16>, vector<48x8xf32> -> vector<48x8xf32>
    %c0_51 = arith.constant 0 : index
    %c0_52 = arith.constant 0 : index
    %c0_53 = arith.constant 0 : index
    %89 = vector.load %arg16[%c0_51, %c0_52, %c0_53] : memref<4x1x8xf32, #tpu.memory_space<vmem>>, vector<1x1x8xf32>
    %90 = vector.shape_cast %89 : vector<1x1x8xf32> to vector<1x8xf32>
    %91 = vector.broadcast %90 : vector<1x8xf32> to vector<48x8xf32>
    %92 = arith.addf %88, %91 : vector<48x8xf32>
    %93 = vector.shape_cast %78 : vector<48x8xf32> to vector<3x16x8xf32>
    %94 = arith.truncf %93 : vector<3x16x8xf32> to vector<3x16x8xbf16>
    %95 = vector.shape_cast %85 : vector<48x8xf32> to vector<3x16x8xf32>
    %96 = arith.truncf %95 : vector<3x16x8xf32> to vector<3x16x8xbf16>
    %97 = vector.shape_cast %92 : vector<48x8xf32> to vector<3x16x8xf32>
    %98 = arith.truncf %97 : vector<3x16x8xf32> to vector<3x16x8xbf16>
    "tpu.trace_start"() <{level = 10 : i32, message = "bqd,bkd->bqk"}> : () -> ()
    %cst_54 = arith.constant dense<0.000000e+00> : vector<3x16x16xf32>
    %99 = tpu.matmul %94, %96, %cst_54 {dimension_numbers = #tpu.dot_dimension_numbers<[2], [2], [1], [1], [0, 0, 0, 1, 1, 1], [0], [0]>} : vector<3x16x8xbf16>, vector<3x16x8xbf16>, vector<3x16x16xf32> -> vector<3x16x16xf32>
    "tpu.trace_stop"() : () -> ()
    %cst_55 = arith.constant 0.353553385 : f32
    %100 = vector.broadcast %cst_55 : f32 to vector<3x16x16xf32>
    %101 = arith.mulf %99, %100 : vector<3x16x16xf32>
    %102 = vector.broadcast %70 : vector<1x16x16xf32> to vector<3x16x16xf32>
    %103 = arith.addf %101, %102 : vector<3x16x16xf32>
    %cst_56 = arith.constant dense<0xFF800000> : vector<3x16xf32>
    %104 = vector.multi_reduction <maximumf>, %103, %cst_56 [2] : vector<3x16x16xf32> to vector<3x16xf32>
    %105 = vector.shape_cast %104 : vector<3x16xf32> to vector<3x16x1xf32>
    %106 = vector.broadcast %105 : vector<3x16x1xf32> to vector<3x16x16xf32>
    %107 = arith.subf %103, %106 : vector<3x16x16xf32>
    %108 = math.exp %107 : vector<3x16x16xf32>
    %cst_57 = arith.constant dense<0.000000e+00> : vector<3x16xf32>
    %109 = vector.multi_reduction <add>, %108, %cst_57 [2] : vector<3x16x16xf32> to vector<3x16xf32>
    %110 = vector.shape_cast %109 : vector<3x16xf32> to vector<3x16x1xf32>
    %111 = tpu.reciprocal %110 {approx = true} : vector<3x16x1xf32> -> vector<3x16x1xf32>
    %112 = vector.broadcast %111 : vector<3x16x1xf32> to vector<3x16x16xf32>
    %113 = arith.mulf %108, %112 : vector<3x16x16xf32>
    %114 = arith.truncf %113 : vector<3x16x16xf32> to vector<3x16x16xbf16>
    "tpu.trace_start"() <{level = 10 : i32, message = "bqk,bkd->bqd"}> : () -> ()
    %cst_58 = arith.constant dense<0.000000e+00> : vector<3x16x8xf32>
    %115 = tpu.matmul %114, %98, %cst_58 {dimension_numbers = #tpu.dot_dimension_numbers<[2], [1], [1], [2], [0, 0, 0, 1, 1, 2], [0], [0]>} : vector<3x16x16xbf16>, vector<3x16x8xbf16>, vector<3x16x8xf32> -> vector<3x16x8xf32>
    "tpu.trace_stop"() : () -> ()
    %116 = vector.shape_cast %115 : vector<3x16x8xf32> to vector<48x8xf32>
    %117 = arith.truncf %116 : vector<48x8xf32> to vector<48x8xbf16>
    %c0_59 = arith.constant 0 : index
    %c0_60 = arith.constant 0 : index
    %c0_61 = arith.constant 0 : index
    %118 = vector.load %arg17[%c0_59, %c0_60, %c0_61] : memref<4x8x32xbf16, #tpu.memory_space<vmem>>, vector<1x8x32xbf16>
    %119 = vector.shape_cast %118 : vector<1x8x32xbf16> to vector<8x32xbf16>
    %cst_62 = arith.constant dense<0.000000e+00> : vector<48x32xf32>
    %120 = tpu.matmul %117, %119, %cst_62 {dimension_numbers = #tpu.dot_dimension_numbers<[1], [0], [0], [1], [0, 0, 1, 1], [], []>} : vector<48x8xbf16>, vector<8x32xbf16>, vector<48x32xf32> -> vector<48x32xf32>
    %121 = arith.addf %71, %120 : vector<48x32xf32>
    %c1 = arith.constant 1 : index
    %c0_63 = arith.constant 0 : index
    %c0_64 = arith.constant 0 : index
    %122 = vector.load %arg11[%c1, %c0_63, %c0_64] : memref<4x32x8xbf16, #tpu.memory_space<vmem>>, vector<1x32x8xbf16>
    %123 = vector.shape_cast %122 : vector<1x32x8xbf16> to vector<32x8xbf16>
    %cst_65 = arith.constant dense<0.000000e+00> : vector<48x8xf32>
    %124 = tpu.matmul %63, %123, %cst_65 {dimension_numbers = #tpu.dot_dimension_numbers<[1], [0], [0], [1], [0, 0, 1, 1], [], []>} : vector<48x32xbf16>, vector<32x8xbf16>, vector<48x8xf32> -> vector<48x8xf32>
    %c1_66 = arith.constant 1 : index
    %c0_67 = arith.constant 0 : index
    %c0_68 = arith.constant 0 : index
    %125 = vector.load %arg12[%c1_66, %c0_67, %c0_68] : memref<4x1x8xf32, #tpu.memory_space<vmem>>, vector<1x1x8xf32>
    %126 = vector.shape_cast %125 : vector<1x1x8xf32> to vector<1x8xf32>
    %127 = vector.broadcast %126 : vector<1x8xf32> to vector<48x8xf32>
    %128 = arith.addf %124, %127 : vector<48x8xf32>
    %c1_69 = arith.constant 1 : index
    %c0_70 = arith.constant 0 : index
    %c0_71 = arith.constant 0 : index
    %129 = vector.load %arg13[%c1_69, %c0_70, %c0_71] : memref<4x32x8xbf16, #tpu.memory_space<vmem>>, vector<1x32x8xbf16>
    %130 = vector.shape_cast %129 : vector<1x32x8xbf16> to vector<32x8xbf16>
    %cst_72 = arith.constant dense<0.000000e+00> : vector<48x8xf32>
    %131 = tpu.matmul %63, %130, %cst_72 {dimension_numbers = #tpu.dot_dimension_numbers<[1], [0], [0], [1], [0, 0, 1, 1], [], []>} : vector<48x32xbf16>, vector<32x8xbf16>, vector<48x8xf32> -> vector<48x8xf32>
    %c1_73 = arith.constant 1 : index
    %c0_74 = arith.constant 0 : index
    %c0_75 = arith.constant 0 : index
    %132 = vector.load %arg14[%c1_73, %c0_74, %c0_75] : memref<4x1x8xf32, #tpu.memory_space<vmem>>, vector<1x1x8xf32>
    %133 = vector.shape_cast %132 : vector<1x1x8xf32> to vector<1x8xf32>
    %134 = vector.broadcast %133 : vector<1x8xf32> to vector<48x8xf32>
    %135 = arith.addf %131, %134 : vector<48x8xf32>
    %c1_76 = arith.constant 1 : index
    %c0_77 = arith.constant 0 : index
    %c0_78 = arith.constant 0 : index
    %136 = vector.load %arg15[%c1_76, %c0_77, %c0_78] : memref<4x32x8xbf16, #tpu.memory_space<vmem>>, vector<1x32x8xbf16>
    %137 = vector.shape_cast %136 : vector<1x32x8xbf16> to vector<32x8xbf16>
    %cst_79 = arith.constant dense<0.000000e+00> : vector<48x8xf32>
    %138 = tpu.matmul %63, %137, %cst_79 {dimension_numbers = #tpu.dot_dimension_numbers<[1], [0], [0], [1], [0, 0, 1, 1], [], []>} : vector<48x32xbf16>, vector<32x8xbf16>, vector<48x8xf32> -> vector<48x8xf32>
    %c1_80 = arith.constant 1 : index
    %c0_81 = arith.constant 0 : index
    %c0_82 = arith.constant 0 : index
    %139 = vector.load %arg16[%c1_80, %c0_81, %c0_82] : memref<4x1x8xf32, #tpu.memory_space<vmem>>, vector<1x1x8xf32>
    %140 = vector.shape_cast %139 : vector<1x1x8xf32> to vector<1x8xf32>
    %141 = vector.broadcast %140 : vector<1x8xf32> to vector<48x8xf32>
    %142 = arith.addf %138, %141 : vector<48x8xf32>
    %143 = vector.shape_cast %128 : vector<48x8xf32> to vector<3x16x8xf32>
    %144 = arith.truncf %143 : vector<3x16x8xf32> to vector<3x16x8xbf16>
    %145 = vector.shape_cast %135 : vector<48x8xf32> to vector<3x16x8xf32>
    %146 = arith.truncf %145 : vector<3x16x8xf32> to vector<3x16x8xbf16>
    %147 = vector.shape_cast %142 : vector<48x8xf32> to vector<3x16x8xf32>
    %148 = arith.truncf %147 : vector<3x16x8xf32> to vector<3x16x8xbf16>
    "tpu.trace_start"() <{level = 10 : i32, message = "bqd,bkd->bqk"}> : () -> ()
    %cst_83 = arith.constant dense<0.000000e+00> : vector<3x16x16xf32>
    %149 = tpu.matmul %144, %146, %cst_83 {dimension_numbers = #tpu.dot_dimension_numbers<[2], [2], [1], [1], [0, 0, 0, 1, 1, 1], [0], [0]>} : vector<3x16x8xbf16>, vector<3x16x8xbf16>, vector<3x16x16xf32> -> vector<3x16x16xf32>
    "tpu.trace_stop"() : () -> ()
    %cst_84 = arith.constant 0.353553385 : f32
    %150 = vector.broadcast %cst_84 : f32 to vector<3x16x16xf32>
    %151 = arith.mulf %149, %150 : vector<3x16x16xf32>
    %152 = vector.broadcast %70 : vector<1x16x16xf32> to vector<3x16x16xf32>
    %153 = arith.addf %151, %152 : vector<3x16x16xf32>
    %cst_85 = arith.constant dense<0xFF800000> : vector<3x16xf32>
    %154 = vector.multi_reduction <maximumf>, %153, %cst_85 [2] : vector<3x16x16xf32> to vector<3x16xf32>
    %155 = vector.shape_cast %154 : vector<3x16xf32> to vector<3x16x1xf32>
    %156 = vector.broadcast %155 : vector<3x16x1xf32> to vector<3x16x16xf32>
    %157 = arith.subf %153, %156 : vector<3x16x16xf32>
    %158 = math.exp %157 : vector<3x16x16xf32>
    %cst_86 = arith.constant dense<0.000000e+00> : vector<3x16xf32>
    %159 = vector.multi_reduction <add>, %158, %cst_86 [2] : vector<3x16x16xf32> to vector<3x16xf32>
    %160 = vector.shape_cast %159 : vector<3x16xf32> to vector<3x16x1xf32>
    %161 = tpu.reciprocal %160 {approx = true} : vector<3x16x1xf32> -> vector<3x16x1xf32>
    %162 = vector.broadcast %161 : vector<3x16x1xf32> to vector<3x16x16xf32>
    %163 = arith.mulf %158, %162 : vector<3x16x16xf32>
    %164 = arith.truncf %163 : vector<3x16x16xf32> to vector<3x16x16xbf16>
    "tpu.trace_start"() <{level = 10 : i32, message = "bqk,bkd->bqd"}> : () -> ()
    %cst_87 = arith.constant dense<0.000000e+00> : vector<3x16x8xf32>
    %165 = tpu.matmul %164, %148, %cst_87 {dimension_numbers = #tpu.dot_dimension_numbers<[2], [1], [1], [2], [0, 0, 0, 1, 1, 2], [0], [0]>} : vector<3x16x16xbf16>, vector<3x16x8xbf16>, vector<3x16x8xf32> -> vector<3x16x8xf32>
    "tpu.trace_stop"() : () -> ()
    %166 = vector.shape_cast %165 : vector<3x16x8xf32> to vector<48x8xf32>
    %167 = arith.truncf %166 : vector<48x8xf32> to vector<48x8xbf16>
    %c1_88 = arith.constant 1 : index
    %c0_89 = arith.constant 0 : index
    %c0_90 = arith.constant 0 : index
    %168 = vector.load %arg17[%c1_88, %c0_89, %c0_90] : memref<4x8x32xbf16, #tpu.memory_space<vmem>>, vector<1x8x32xbf16>
    %169 = vector.shape_cast %168 : vector<1x8x32xbf16> to vector<8x32xbf16>
    %cst_91 = arith.constant dense<0.000000e+00> : vector<48x32xf32>
    %170 = tpu.matmul %167, %169, %cst_91 {dimension_numbers = #tpu.dot_dimension_numbers<[1], [0], [0], [1], [0, 0, 1, 1], [], []>} : vector<48x8xbf16>, vector<8x32xbf16>, vector<48x32xf32> -> vector<48x32xf32>
    %171 = arith.addf %121, %170 : vector<48x32xf32>
    %c2 = arith.constant 2 : index
    %c0_92 = arith.constant 0 : index
    %c0_93 = arith.constant 0 : index
    %172 = vector.load %arg11[%c2, %c0_92, %c0_93] : memref<4x32x8xbf16, #tpu.memory_space<vmem>>, vector<1x32x8xbf16>
    %173 = vector.shape_cast %172 : vector<1x32x8xbf16> to vector<32x8xbf16>
    %cst_94 = arith.constant dense<0.000000e+00> : vector<48x8xf32>
    %174 = tpu.matmul %63, %173, %cst_94 {dimension_numbers = #tpu.dot_dimension_numbers<[1], [0], [0], [1], [0, 0, 1, 1], [], []>} : vector<48x32xbf16>, vector<32x8xbf16>, vector<48x8xf32> -> vector<48x8xf32>
    %c2_95 = arith.constant 2 : index
    %c0_96 = arith.constant 0 : index
    %c0_97 = arith.constant 0 : index
    %175 = vector.load %arg12[%c2_95, %c0_96, %c0_97] : memref<4x1x8xf32, #tpu.memory_space<vmem>>, vector<1x1x8xf32>
    %176 = vector.shape_cast %175 : vector<1x1x8xf32> to vector<1x8xf32>
    %177 = vector.broadcast %176 : vector<1x8xf32> to vector<48x8xf32>
    %178 = arith.addf %174, %177 : vector<48x8xf32>
    %c2_98 = arith.constant 2 : index
    %c0_99 = arith.constant 0 : index
    %c0_100 = arith.constant 0 : index
    %179 = vector.load %arg13[%c2_98, %c0_99, %c0_100] : memref<4x32x8xbf16, #tpu.memory_space<vmem>>, vector<1x32x8xbf16>
    %180 = vector.shape_cast %179 : vector<1x32x8xbf16> to vector<32x8xbf16>
    %cst_101 = arith.constant dense<0.000000e+00> : vector<48x8xf32>
    %181 = tpu.matmul %63, %180, %cst_101 {dimension_numbers = #tpu.dot_dimension_numbers<[1], [0], [0], [1], [0, 0, 1, 1], [], []>} : vector<48x32xbf16>, vector<32x8xbf16>, vector<48x8xf32> -> vector<48x8xf32>
    %c2_102 = arith.constant 2 : index
    %c0_103 = arith.constant 0 : index
    %c0_104 = arith.constant 0 : index
    %182 = vector.load %arg14[%c2_102, %c0_103, %c0_104] : memref<4x1x8xf32, #tpu.memory_space<vmem>>, vector<1x1x8xf32>
    %183 = vector.shape_cast %182 : vector<1x1x8xf32> to vector<1x8xf32>
    %184 = vector.broadcast %183 : vector<1x8xf32> to vector<48x8xf32>
    %185 = arith.addf %181, %184 : vector<48x8xf32>
    %c2_105 = arith.constant 2 : index
    %c0_106 = arith.constant 0 : index
    %c0_107 = arith.constant 0 : index
    %186 = vector.load %arg15[%c2_105, %c0_106, %c0_107] : memref<4x32x8xbf16, #tpu.memory_space<vmem>>, vector<1x32x8xbf16>
    %187 = vector.shape_cast %186 : vector<1x32x8xbf16> to vector<32x8xbf16>
    %cst_108 = arith.constant dense<0.000000e+00> : vector<48x8xf32>
    %188 = tpu.matmul %63, %187, %cst_108 {dimension_numbers = #tpu.dot_dimension_numbers<[1], [0], [0], [1], [0, 0, 1, 1], [], []>} : vector<48x32xbf16>, vector<32x8xbf16>, vector<48x8xf32> -> vector<48x8xf32>
    %c2_109 = arith.constant 2 : index
    %c0_110 = arith.constant 0 : index
    %c0_111 = arith.constant 0 : index
    %189 = vector.load %arg16[%c2_109, %c0_110, %c0_111] : memref<4x1x8xf32, #tpu.memory_space<vmem>>, vector<1x1x8xf32>
    %190 = vector.shape_cast %189 : vector<1x1x8xf32> to vector<1x8xf32>
    %191 = vector.broadcast %190 : vector<1x8xf32> to vector<48x8xf32>
    %192 = arith.addf %188, %191 : vector<48x8xf32>
    %193 = vector.shape_cast %178 : vector<48x8xf32> to vector<3x16x8xf32>
    %194 = arith.truncf %193 : vector<3x16x8xf32> to vector<3x16x8xbf16>
    %195 = vector.shape_cast %185 : vector<48x8xf32> to vector<3x16x8xf32>
    %196 = arith.truncf %195 : vector<3x16x8xf32> to vector<3x16x8xbf16>
    %197 = vector.shape_cast %192 : vector<48x8xf32> to vector<3x16x8xf32>
    %198 = arith.truncf %197 : vector<3x16x8xf32> to vector<3x16x8xbf16>
    "tpu.trace_start"() <{level = 10 : i32, message = "bqd,bkd->bqk"}> : () -> ()
    %cst_112 = arith.constant dense<0.000000e+00> : vector<3x16x16xf32>
    %199 = tpu.matmul %194, %196, %cst_112 {dimension_numbers = #tpu.dot_dimension_numbers<[2], [2], [1], [1], [0, 0, 0, 1, 1, 1], [0], [0]>} : vector<3x16x8xbf16>, vector<3x16x8xbf16>, vector<3x16x16xf32> -> vector<3x16x16xf32>
    "tpu.trace_stop"() : () -> ()
    %cst_113 = arith.constant 0.353553385 : f32
    %200 = vector.broadcast %cst_113 : f32 to vector<3x16x16xf32>
    %201 = arith.mulf %199, %200 : vector<3x16x16xf32>
    %202 = vector.broadcast %70 : vector<1x16x16xf32> to vector<3x16x16xf32>
    %203 = arith.addf %201, %202 : vector<3x16x16xf32>
    %cst_114 = arith.constant dense<0xFF800000> : vector<3x16xf32>
    %204 = vector.multi_reduction <maximumf>, %203, %cst_114 [2] : vector<3x16x16xf32> to vector<3x16xf32>
    %205 = vector.shape_cast %204 : vector<3x16xf32> to vector<3x16x1xf32>
    %206 = vector.broadcast %205 : vector<3x16x1xf32> to vector<3x16x16xf32>
    %207 = arith.subf %203, %206 : vector<3x16x16xf32>
    %208 = math.exp %207 : vector<3x16x16xf32>
    %cst_115 = arith.constant dense<0.000000e+00> : vector<3x16xf32>
    %209 = vector.multi_reduction <add>, %208, %cst_115 [2] : vector<3x16x16xf32> to vector<3x16xf32>
    %210 = vector.shape_cast %209 : vector<3x16xf32> to vector<3x16x1xf32>
    %211 = tpu.reciprocal %210 {approx = true} : vector<3x16x1xf32> -> vector<3x16x1xf32>
    %212 = vector.broadcast %211 : vector<3x16x1xf32> to vector<3x16x16xf32>
    %213 = arith.mulf %208, %212 : vector<3x16x16xf32>
    %214 = arith.truncf %213 : vector<3x16x16xf32> to vector<3x16x16xbf16>
    "tpu.trace_start"() <{level = 10 : i32, message = "bqk,bkd->bqd"}> : () -> ()
    %cst_116 = arith.constant dense<0.000000e+00> : vector<3x16x8xf32>
    %215 = tpu.matmul %214, %198, %cst_116 {dimension_numbers = #tpu.dot_dimension_numbers<[2], [1], [1], [2], [0, 0, 0, 1, 1, 2], [0], [0]>} : vector<3x16x16xbf16>, vector<3x16x8xbf16>, vector<3x16x8xf32> -> vector<3x16x8xf32>
    "tpu.trace_stop"() : () -> ()
    %216 = vector.shape_cast %215 : vector<3x16x8xf32> to vector<48x8xf32>
    %217 = arith.truncf %216 : vector<48x8xf32> to vector<48x8xbf16>
    %c2_117 = arith.constant 2 : index
    %c0_118 = arith.constant 0 : index
    %c0_119 = arith.constant 0 : index
    %218 = vector.load %arg17[%c2_117, %c0_118, %c0_119] : memref<4x8x32xbf16, #tpu.memory_space<vmem>>, vector<1x8x32xbf16>
    %219 = vector.shape_cast %218 : vector<1x8x32xbf16> to vector<8x32xbf16>
    %cst_120 = arith.constant dense<0.000000e+00> : vector<48x32xf32>
    %220 = tpu.matmul %217, %219, %cst_120 {dimension_numbers = #tpu.dot_dimension_numbers<[1], [0], [0], [1], [0, 0, 1, 1], [], []>} : vector<48x8xbf16>, vector<8x32xbf16>, vector<48x32xf32> -> vector<48x32xf32>
    %221 = arith.addf %171, %220 : vector<48x32xf32>
    %c3 = arith.constant 3 : index
    %c0_121 = arith.constant 0 : index
    %c0_122 = arith.constant 0 : index
    %222 = vector.load %arg11[%c3, %c0_121, %c0_122] : memref<4x32x8xbf16, #tpu.memory_space<vmem>>, vector<1x32x8xbf16>
    %223 = vector.shape_cast %222 : vector<1x32x8xbf16> to vector<32x8xbf16>
    %cst_123 = arith.constant dense<0.000000e+00> : vector<48x8xf32>
    %224 = tpu.matmul %63, %223, %cst_123 {dimension_numbers = #tpu.dot_dimension_numbers<[1], [0], [0], [1], [0, 0, 1, 1], [], []>} : vector<48x32xbf16>, vector<32x8xbf16>, vector<48x8xf32> -> vector<48x8xf32>
    %c3_124 = arith.constant 3 : index
    %c0_125 = arith.constant 0 : index
    %c0_126 = arith.constant 0 : index
    %225 = vector.load %arg12[%c3_124, %c0_125, %c0_126] : memref<4x1x8xf32, #tpu.memory_space<vmem>>, vector<1x1x8xf32>
    %226 = vector.shape_cast %225 : vector<1x1x8xf32> to vector<1x8xf32>
    %227 = vector.broadcast %226 : vector<1x8xf32> to vector<48x8xf32>
    %228 = arith.addf %224, %227 : vector<48x8xf32>
    %c3_127 = arith.constant 3 : index
    %c0_128 = arith.constant 0 : index
    %c0_129 = arith.constant 0 : index
    %229 = vector.load %arg13[%c3_127, %c0_128, %c0_129] : memref<4x32x8xbf16, #tpu.memory_space<vmem>>, vector<1x32x8xbf16>
    %230 = vector.shape_cast %229 : vector<1x32x8xbf16> to vector<32x8xbf16>
    %cst_130 = arith.constant dense<0.000000e+00> : vector<48x8xf32>
    %231 = tpu.matmul %63, %230, %cst_130 {dimension_numbers = #tpu.dot_dimension_numbers<[1], [0], [0], [1], [0, 0, 1, 1], [], []>} : vector<48x32xbf16>, vector<32x8xbf16>, vector<48x8xf32> -> vector<48x8xf32>
    %c3_131 = arith.constant 3 : index
    %c0_132 = arith.constant 0 : index
    %c0_133 = arith.constant 0 : index
    %232 = vector.load %arg14[%c3_131, %c0_132, %c0_133] : memref<4x1x8xf32, #tpu.memory_space<vmem>>, vector<1x1x8xf32>
    %233 = vector.shape_cast %232 : vector<1x1x8xf32> to vector<1x8xf32>
    %234 = vector.broadcast %233 : vector<1x8xf32> to vector<48x8xf32>
    %235 = arith.addf %231, %234 : vector<48x8xf32>
    %c3_134 = arith.constant 3 : index
    %c0_135 = arith.constant 0 : index
    %c0_136 = arith.constant 0 : index
    %236 = vector.load %arg15[%c3_134, %c0_135, %c0_136] : memref<4x32x8xbf16, #tpu.memory_space<vmem>>, vector<1x32x8xbf16>
    %237 = vector.shape_cast %236 : vector<1x32x8xbf16> to vector<32x8xbf16>
    %cst_137 = arith.constant dense<0.000000e+00> : vector<48x8xf32>
    %238 = tpu.matmul %63, %237, %cst_137 {dimension_numbers = #tpu.dot_dimension_numbers<[1], [0], [0], [1], [0, 0, 1, 1], [], []>} : vector<48x32xbf16>, vector<32x8xbf16>, vector<48x8xf32> -> vector<48x8xf32>
    %c3_138 = arith.constant 3 : index
    %c0_139 = arith.constant 0 : index
    %c0_140 = arith.constant 0 : index
    %239 = vector.load %arg16[%c3_138, %c0_139, %c0_140] : memref<4x1x8xf32, #tpu.memory_space<vmem>>, vector<1x1x8xf32>
    %240 = vector.shape_cast %239 : vector<1x1x8xf32> to vector<1x8xf32>
    %241 = vector.broadcast %240 : vector<1x8xf32> to vector<48x8xf32>
    %242 = arith.addf %238, %241 : vector<48x8xf32>
    %243 = vector.shape_cast %228 : vector<48x8xf32> to vector<3x16x8xf32>
    %244 = arith.truncf %243 : vector<3x16x8xf32> to vector<3x16x8xbf16>
    %245 = vector.shape_cast %235 : vector<48x8xf32> to vector<3x16x8xf32>
    %246 = arith.truncf %245 : vector<3x16x8xf32> to vector<3x16x8xbf16>
    %247 = vector.shape_cast %242 : vector<48x8xf32> to vector<3x16x8xf32>
    %248 = arith.truncf %247 : vector<3x16x8xf32> to vector<3x16x8xbf16>
    "tpu.trace_start"() <{level = 10 : i32, message = "bqd,bkd->bqk"}> : () -> ()
    %cst_141 = arith.constant dense<0.000000e+00> : vector<3x16x16xf32>
    %249 = tpu.matmul %244, %246, %cst_141 {dimension_numbers = #tpu.dot_dimension_numbers<[2], [2], [1], [1], [0, 0, 0, 1, 1, 1], [0], [0]>} : vector<3x16x8xbf16>, vector<3x16x8xbf16>, vector<3x16x16xf32> -> vector<3x16x16xf32>
    "tpu.trace_stop"() : () -> ()
    %cst_142 = arith.constant 0.353553385 : f32
    %250 = vector.broadcast %cst_142 : f32 to vector<3x16x16xf32>
    %251 = arith.mulf %249, %250 : vector<3x16x16xf32>
    %252 = vector.broadcast %70 : vector<1x16x16xf32> to vector<3x16x16xf32>
    %253 = arith.addf %251, %252 : vector<3x16x16xf32>
    %cst_143 = arith.constant dense<0xFF800000> : vector<3x16xf32>
    %254 = vector.multi_reduction <maximumf>, %253, %cst_143 [2] : vector<3x16x16xf32> to vector<3x16xf32>
    %255 = vector.shape_cast %254 : vector<3x16xf32> to vector<3x16x1xf32>
    %256 = vector.broadcast %255 : vector<3x16x1xf32> to vector<3x16x16xf32>
    %257 = arith.subf %253, %256 : vector<3x16x16xf32>
    %258 = math.exp %257 : vector<3x16x16xf32>
    %cst_144 = arith.constant dense<0.000000e+00> : vector<3x16xf32>
    %259 = vector.multi_reduction <add>, %258, %cst_144 [2] : vector<3x16x16xf32> to vector<3x16xf32>
    %260 = vector.shape_cast %259 : vector<3x16xf32> to vector<3x16x1xf32>
    %261 = tpu.reciprocal %260 {approx = true} : vector<3x16x1xf32> -> vector<3x16x1xf32>
    %262 = vector.broadcast %261 : vector<3x16x1xf32> to vector<3x16x16xf32>
    %263 = arith.mulf %258, %262 : vector<3x16x16xf32>
    %264 = arith.truncf %263 : vector<3x16x16xf32> to vector<3x16x16xbf16>
    "tpu.trace_start"() <{level = 10 : i32, message = "bqk,bkd->bqd"}> : () -> ()
    %cst_145 = arith.constant dense<0.000000e+00> : vector<3x16x8xf32>
    %265 = tpu.matmul %264, %248, %cst_145 {dimension_numbers = #tpu.dot_dimension_numbers<[2], [1], [1], [2], [0, 0, 0, 1, 1, 2], [0], [0]>} : vector<3x16x16xbf16>, vector<3x16x8xbf16>, vector<3x16x8xf32> -> vector<3x16x8xf32>
    "tpu.trace_stop"() : () -> ()
    %266 = vector.shape_cast %265 : vector<3x16x8xf32> to vector<48x8xf32>
    %267 = arith.truncf %266 : vector<48x8xf32> to vector<48x8xbf16>
    %c3_146 = arith.constant 3 : index
    %c0_147 = arith.constant 0 : index
    %c0_148 = arith.constant 0 : index
    %268 = vector.load %arg17[%c3_146, %c0_147, %c0_148] : memref<4x8x32xbf16, #tpu.memory_space<vmem>>, vector<1x8x32xbf16>
    %269 = vector.shape_cast %268 : vector<1x8x32xbf16> to vector<8x32xbf16>
    %cst_149 = arith.constant dense<0.000000e+00> : vector<48x32xf32>
    %270 = tpu.matmul %267, %269, %cst_149 {dimension_numbers = #tpu.dot_dimension_numbers<[1], [0], [0], [1], [0, 0, 1, 1], [], []>} : vector<48x8xbf16>, vector<8x32xbf16>, vector<48x32xf32> -> vector<48x32xf32>
    %271 = arith.addf %221, %270 : vector<48x32xf32>
    %272 = arith.addf %38, %271 : vector<48x32xf32>
    %c0_150 = arith.constant 0 : index
    %c0_151 = arith.constant 0 : index
    %273 = vector.load %arg18[%c0_150, %c0_151] : memref<1x32xf32, #tpu.memory_space<vmem>>, vector<1x32xf32>
    %274 = vector.broadcast %273 : vector<1x32xf32> to vector<48x32xf32>
    %275 = arith.addf %272, %274 : vector<48x32xf32>
    %cst_152 = arith.constant dense<0.000000e+00> : vector<48xf32>
    %276 = vector.multi_reduction <add>, %275, %cst_152 [1] : vector<48x32xf32> to vector<48xf32>
    %277 = vector.shape_cast %276 : vector<48xf32> to vector<48x1xf32>
    %cst_153 = arith.constant 3.200000e+01 : f32
    %278 = vector.broadcast %cst_153 : f32 to vector<48x1xf32>
    %279 = arith.divf %277, %278 : vector<48x1xf32>
    %280 = vector.broadcast %279 : vector<48x1xf32> to vector<48x32xf32>
    %281 = arith.subf %275, %280 : vector<48x32xf32>
    %282 = arith.mulf %281, %281 : vector<48x32xf32>
    %cst_154 = arith.constant dense<0.000000e+00> : vector<48xf32>
    %283 = vector.multi_reduction <add>, %282, %cst_154 [1] : vector<48x32xf32> to vector<48xf32>
    %284 = vector.shape_cast %283 : vector<48xf32> to vector<48x1xf32>
    %cst_155 = arith.constant 3.200000e+01 : f32
    %285 = vector.broadcast %cst_155 : f32 to vector<48x1xf32>
    %286 = arith.divf %284, %285 : vector<48x1xf32>
    %287 = vector.broadcast %279 : vector<48x1xf32> to vector<48x32xf32>
    %288 = arith.subf %275, %287 : vector<48x32xf32>
    %cst_156 = arith.constant 9.99999974E-6 : f32
    %289 = vector.broadcast %cst_156 : f32 to vector<48x1xf32>
    %290 = arith.addf %286, %289 : vector<48x1xf32>
    %291 = math.rsqrt %290 : vector<48x1xf32>
    %292 = vector.broadcast %291 : vector<48x1xf32> to vector<48x32xf32>
    %293 = arith.mulf %288, %292 : vector<48x32xf32>
    %c0_157 = arith.constant 0 : index
    %c0_158 = arith.constant 0 : index
    %294 = vector.load %arg19[%c0_157, %c0_158] : memref<1x32xf32, #tpu.memory_space<vmem>>, vector<1x32xf32>
    %295 = vector.broadcast %294 : vector<1x32xf32> to vector<48x32xf32>
    %296 = arith.mulf %293, %295 : vector<48x32xf32>
    %c0_159 = arith.constant 0 : index
    %c0_160 = arith.constant 0 : index
    %297 = vector.load %arg20[%c0_159, %c0_160] : memref<1x32xf32, #tpu.memory_space<vmem>>, vector<1x32xf32>
    %298 = vector.broadcast %297 : vector<1x32xf32> to vector<48x32xf32>
    %299 = arith.addf %296, %298 : vector<48x32xf32>
    %300 = arith.truncf %299 : vector<48x32xf32> to vector<48x32xbf16>
    %c0_161 = arith.constant 0 : index
    %c0_162 = arith.constant 0 : index
    %301 = vector.load %arg21[%c0_161, %c0_162] : memref<32x128xbf16, #tpu.memory_space<vmem>>, vector<32x128xbf16>
    %cst_163 = arith.constant dense<0.000000e+00> : vector<48x128xf32>
    %302 = tpu.matmul %300, %301, %cst_163 {dimension_numbers = #tpu.dot_dimension_numbers<[1], [0], [0], [1], [0, 0, 1, 1], [], []>} : vector<48x32xbf16>, vector<32x128xbf16>, vector<48x128xf32> -> vector<48x128xf32>
    %c0_164 = arith.constant 0 : index
    %c0_165 = arith.constant 0 : index
    %303 = vector.load %arg22[%c0_164, %c0_165] : memref<1x128xf32, #tpu.memory_space<vmem>>, vector<1x128xf32>
    %304 = vector.broadcast %303 : vector<1x128xf32> to vector<48x128xf32>
    %305 = arith.addf %302, %304 : vector<48x128xf32>
    %cst_166 = arith.constant 1.702000e+00 : f32
    %306 = vector.broadcast %cst_166 : f32 to vector<48x128xf32>
    %307 = arith.mulf %306, %305 : vector<48x128xf32>
    %308 = arith.negf %307 : vector<48x128xf32>
    %309 = math.exp %308 : vector<48x128xf32>
    %cst_167 = arith.constant 1.000000e+00 : f32
    %310 = vector.broadcast %cst_167 : f32 to vector<48x128xf32>
    %311 = arith.addf %310, %309 : vector<48x128xf32>
    %312 = arith.divf %310, %311 : vector<48x128xf32>
    %313 = arith.mulf %305, %312 : vector<48x128xf32>
    %314 = arith.truncf %313 : vector<48x128xf32> to vector<48x128xbf16>
    %c0_168 = arith.constant 0 : index
    %c0_169 = arith.constant 0 : index
    %315 = vector.load %arg23[%c0_168, %c0_169] : memref<128x32xbf16, #tpu.memory_space<vmem>>, vector<128x32xbf16>
    %cst_170 = arith.constant dense<0.000000e+00> : vector<48x32xf32>
    %316 = tpu.matmul %314, %315, %cst_170 {dimension_numbers = #tpu.dot_dimension_numbers<[1], [0], [0], [1], [0, 0, 1, 1], [], []>} : vector<48x128xbf16>, vector<128x32xbf16>, vector<48x32xf32> -> vector<48x32xf32>
    %317 = arith.addf %275, %316 : vector<48x32xf32>
    %c0_171 = arith.constant 0 : index
    %c0_172 = arith.constant 0 : index
    %318 = vector.load %arg24[%c0_171, %c0_172] : memref<1x32xf32, #tpu.memory_space<vmem>>, vector<1x32xf32>
    %319 = vector.broadcast %318 : vector<1x32xf32> to vector<48x32xf32>
    %320 = arith.addf %317, %319 : vector<48x32xf32>
    %cst_173 = arith.constant dense<0.000000e+00> : vector<48xf32>
    %321 = vector.multi_reduction <add>, %320, %cst_173 [1] : vector<48x32xf32> to vector<48xf32>
    %322 = vector.shape_cast %321 : vector<48xf32> to vector<48x1xf32>
    %cst_174 = arith.constant 3.200000e+01 : f32
    %323 = vector.broadcast %cst_174 : f32 to vector<48x1xf32>
    %324 = arith.divf %322, %323 : vector<48x1xf32>
    %325 = vector.broadcast %324 : vector<48x1xf32> to vector<48x32xf32>
    %326 = arith.subf %320, %325 : vector<48x32xf32>
    %327 = arith.mulf %326, %326 : vector<48x32xf32>
    %cst_175 = arith.constant dense<0.000000e+00> : vector<48xf32>
    %328 = vector.multi_reduction <add>, %327, %cst_175 [1] : vector<48x32xf32> to vector<48xf32>
    %329 = vector.shape_cast %328 : vector<48xf32> to vector<48x1xf32>
    %cst_176 = arith.constant 3.200000e+01 : f32
    %330 = vector.broadcast %cst_176 : f32 to vector<48x1xf32>
    %331 = arith.divf %329, %330 : vector<48x1xf32>
    %332 = vector.broadcast %324 : vector<48x1xf32> to vector<48x32xf32>
    %333 = arith.subf %320, %332 : vector<48x32xf32>
    %cst_177 = arith.constant 9.99999974E-6 : f32
    %334 = vector.broadcast %cst_177 : f32 to vector<48x1xf32>
    %335 = arith.addf %331, %334 : vector<48x1xf32>
    %336 = math.rsqrt %335 : vector<48x1xf32>
    %337 = vector.broadcast %336 : vector<48x1xf32> to vector<48x32xf32>
    %338 = arith.mulf %333, %337 : vector<48x32xf32>
    %c0_178 = arith.constant 0 : index
    %c0_179 = arith.constant 0 : index
    %339 = vector.load %arg25[%c0_178, %c0_179] : memref<1x32xf32, #tpu.memory_space<vmem>>, vector<1x32xf32>
    %340 = vector.broadcast %339 : vector<1x32xf32> to vector<48x32xf32>
    %341 = arith.mulf %338, %340 : vector<48x32xf32>
    %c0_180 = arith.constant 0 : index
    %c0_181 = arith.constant 0 : index
    %342 = vector.load %arg26[%c0_180, %c0_181] : memref<1x32xf32, #tpu.memory_space<vmem>>, vector<1x32xf32>
    %343 = vector.broadcast %342 : vector<1x32xf32> to vector<48x32xf32>
    %344 = arith.addf %341, %343 : vector<48x32xf32>
    %345 = tpu.iota {dimensions = array<i32: 1>} : vector<128x48xi32>
    %346 = tpu.iota {dimensions = array<i32: 0>} : vector<128x48xi32>
    %cst_182 = arith.constant 0.000000e+00 : f32
    %347 = vector.broadcast %cst_182 : f32 to vector<128x48xf32>
    %c0_i32 = arith.constant 0 : i32
    %348 = vector.broadcast %c0_i32 : i32 to vector<128x48xi32>
    %349 = arith.cmpi eq, %346, %348 : vector<128x48xi32>
    %c13_i32 = arith.constant 13 : i32
    %350 = vector.broadcast %c13_i32 : i32 to vector<128x48xi32>
    %351 = arith.cmpi eq, %345, %350 : vector<128x48xi32>
    %352 = arith.andi %349, %351 : vector<128x48xi1>
    %cst_183 = arith.constant 1.000000e+00 : f32
    %cst_184 = arith.constant 0.000000e+00 : f32
    %353 = vector.broadcast %cst_183 : f32 to vector<128x48xf32>
    %354 = vector.broadcast %cst_184 : f32 to vector<128x48xf32>
    %355 = arith.select %352, %353, %354 : vector<128x48xi1>, vector<128x48xf32>
    %356 = arith.addf %347, %355 : vector<128x48xf32>
    %c1_i32 = arith.constant 1 : i32
    %357 = vector.broadcast %c1_i32 : i32 to vector<128x48xi32>
    %358 = arith.cmpi eq, %346, %357 : vector<128x48xi32>
    %c28_i32 = arith.constant 28 : i32
    %359 = vector.broadcast %c28_i32 : i32 to vector<128x48xi32>
    %360 = arith.cmpi eq, %345, %359 : vector<128x48xi32>
    %361 = arith.andi %358, %360 : vector<128x48xi1>
    %cst_185 = arith.constant 1.000000e+00 : f32
    %cst_186 = arith.constant 0.000000e+00 : f32
    %362 = vector.broadcast %cst_185 : f32 to vector<128x48xf32>
    %363 = vector.broadcast %cst_186 : f32 to vector<128x48xf32>
    %364 = arith.select %361, %362, %363 : vector<128x48xi1>, vector<128x48xf32>
    %365 = arith.addf %356, %364 : vector<128x48xf32>
    %c2_i32 = arith.constant 2 : i32
    %366 = vector.broadcast %c2_i32 : i32 to vector<128x48xi32>
    %367 = arith.cmpi eq, %346, %366 : vector<128x48xi32>
    %c46_i32 = arith.constant 46 : i32
    %368 = vector.broadcast %c46_i32 : i32 to vector<128x48xi32>
    %369 = arith.cmpi eq, %345, %368 : vector<128x48xi32>
    %370 = arith.andi %367, %369 : vector<128x48xi1>
    %cst_187 = arith.constant 1.000000e+00 : f32
    %cst_188 = arith.constant 0.000000e+00 : f32
    %371 = vector.broadcast %cst_187 : f32 to vector<128x48xf32>
    %372 = vector.broadcast %cst_188 : f32 to vector<128x48xf32>
    %373 = arith.select %370, %371, %372 : vector<128x48xi1>, vector<128x48xf32>
    %374 = arith.addf %365, %373 : vector<128x48xf32>
    %cst_189 = arith.constant dense<0.000000e+00> : vector<128x32xf32>
    %375 = tpu.matmul %374, %344, %cst_189 {dimension_numbers = #tpu.dot_dimension_numbers<[1], [0], [0], [1], [0, 0, 1, 1], [], []>} : vector<128x48xf32>, vector<48x32xf32>, vector<128x32xf32> -> vector<128x32xf32>
    %376 = arith.truncf %375 : vector<128x32xf32> to vector<128x32xbf16>
    %c0_190 = arith.constant 0 : index
    %c0_191 = arith.constant 0 : index
    %377 = vector.load %arg27[%c0_190, %c0_191] : memref<32x32xbf16, #tpu.memory_space<vmem>>, vector<32x32xbf16>
    %cst_192 = arith.constant dense<0.000000e+00> : vector<128x32xf32>
    %378 = tpu.matmul %376, %377, %cst_192 {dimension_numbers = #tpu.dot_dimension_numbers<[1], [0], [0], [1], [0, 0, 1, 1], [], []>} : vector<128x32xbf16>, vector<32x32xbf16>, vector<128x32xf32> -> vector<128x32xf32>
    %379 = arith.mulf %378, %378 : vector<128x32xf32>
    %cst_193 = arith.constant dense<0.000000e+00> : vector<128xf32>
    %380 = vector.multi_reduction <add>, %379, %cst_193 [1] : vector<128x32xf32> to vector<128xf32>
    %381 = vector.shape_cast %380 : vector<128xf32> to vector<128x1xf32>
    %cst_194 = arith.constant 9.99999996E-13 : f32
    %382 = vector.broadcast %cst_194 : f32 to vector<128x1xf32>
    %383 = arith.addf %381, %382 : vector<128x1xf32>
    %384 = math.rsqrt %383 : vector<128x1xf32>
    %385 = vector.broadcast %384 : vector<128x1xf32> to vector<128x32xf32>
    %386 = arith.mulf %378, %385 : vector<128x32xf32>
    %cst_195 = arith.constant dense<0.000000e+00> : vector<1x128xf32>
    %387 = tpu.matmul %14, %386, %cst_195 {dimension_numbers = #tpu.dot_dimension_numbers<[1], [1], [0], [0], [0, 0, 1, 0], [], []>} : vector<1x32xf32>, vector<128x32xf32>, vector<1x128xf32> -> vector<1x128xf32>
    %c0_196 = arith.constant 0 : index
    %c0_197 = arith.constant 0 : index
    %388 = memref.load %arg28[%c0_196, %c0_197] : memref<1x1xf32, #tpu.memory_space<smem>>
    %389 = vector.broadcast %388 : f32 to vector<1x128xf32>
    %390 = arith.mulf %389, %387 : vector<1x128xf32>
    %c0_198 = arith.constant 0 : index
    %c0_199 = arith.constant 0 : index
    %c0_200 = arith.constant 0 : index
    %391 = vector.load %arg29[%c0_198, %c0_199, %c0_200] : memref<1x1x128xf32, #tpu.memory_space<vmem>>, vector<1x1x128xf32>
    %392 = vector.shape_cast %391 : vector<1x1x128xf32> to vector<1x128xf32>
    %393 = vector.shape_cast %390 : vector<1x128xf32> to vector<1x1x128xf32>
    tpu.vector_store %arg29[%c0_198, %c0_199, %c0_200], %393 {strides = array<i32>} : memref<1x1x128xf32, #tpu.memory_space<vmem>>, vector<1x1x128xf32>,
    return
  }
  func.func @transform_0(%arg0: i32) -> (i32, i32, i32) {
    %c0_i32 = arith.constant 0 : i32
    %c0_i32_0 = arith.constant 0 : i32
    %c0_i32_1 = arith.constant 0 : i32
    return %arg0, %c0_i32, %c0_i32_0 : i32, i32, i32
  }
  func.func @transform_1(%arg0: i32) -> (i32, i32) {
    %c0_i32 = arith.constant 0 : i32
    %c0_i32_0 = arith.constant 0 : i32
    %c0_i32_1 = arith.constant 0 : i32
    return %c0_i32, %c0_i32_0 : i32, i32
  }
  func.func @transform_2(%arg0: i32) -> (i32, i32) {
    %c0_i32 = arith.constant 0 : i32
    %c0_i32_0 = arith.constant 0 : i32
    %c0_i32_1 = arith.constant 0 : i32
    return %c0_i32, %c0_i32_0 : i32, i32
  }
  func.func @transform_3(%arg0: i32) -> (i32, i32) {
    %c0_i32 = arith.constant 0 : i32
    %c0_i32_0 = arith.constant 0 : i32
    %c0_i32_1 = arith.constant 0 : i32
    return %c0_i32, %c0_i32_0 : i32, i32
  }
  func.func @transform_4(%arg0: i32) -> (i32, i32) {
    %c0_i32 = arith.constant 0 : i32
    %c0_i32_0 = arith.constant 0 : i32
    %c0_i32_1 = arith.constant 0 : i32
    return %c0_i32, %c0_i32_0 : i32, i32
  }
  func.func @transform_5(%arg0: i32) -> (i32, i32) {
    %c0_i32 = arith.constant 0 : i32
    %c0_i32_0 = arith.constant 0 : i32
    %c0_i32_1 = arith.constant 0 : i32
    return %c0_i32, %c0_i32_0 : i32, i32
  }
  func.func @transform_6(%arg0: i32) -> (i32, i32) {
    %c0_i32 = arith.constant 0 : i32
    %c0_i32_0 = arith.constant 0 : i32
    %c0_i32_1 = arith.constant 0 : i32
    return %c0_i32, %c0_i32_0 : i32, i32
  }
  func.func @transform_7(%arg0: i32) -> (i32, i32) {
    %c0_i32 = arith.constant 0 : i32
    %c0_i32_0 = arith.constant 0 : i32
    %c0_i32_1 = arith.constant 0 : i32
    return %c0_i32, %c0_i32_0 : i32, i32
  }
  func.func @transform_8(%arg0: i32) -> (i32, i32) {
    %c0_i32 = arith.constant 0 : i32
    %c0_i32_0 = arith.constant 0 : i32
    %c0_i32_1 = arith.constant 0 : i32
    return %c0_i32, %c0_i32_0 : i32, i32
  }
  func.func @transform_9(%arg0: i32) -> (i32, i32) {
    %c0_i32 = arith.constant 0 : i32
    %c0_i32_0 = arith.constant 0 : i32
    %c0_i32_1 = arith.constant 0 : i32
    return %c0_i32, %c0_i32_0 : i32, i32
  }
  func.func @transform_10(%arg0: i32) -> (i32, i32, i32) {
    %c0_i32 = arith.constant 0 : i32
    %c0_i32_0 = arith.constant 0 : i32
    %c0_i32_1 = arith.constant 0 : i32
    %c0_i32_2 = arith.constant 0 : i32
    return %c0_i32, %c0_i32_0, %c0_i32_1 : i32, i32, i32
  }
  func.func @transform_11(%arg0: i32) -> (i32, i32, i32) {
    %c0_i32 = arith.constant 0 : i32
    %c0_i32_0 = arith.constant 0 : i32
    %c0_i32_1 = arith.constant 0 : i32
    %c0_i32_2 = arith.constant 0 : i32
    return %c0_i32, %c0_i32_0, %c0_i32_1 : i32, i32, i32
  }
  func.func @transform_12(%arg0: i32) -> (i32, i32, i32) {
    %c0_i32 = arith.constant 0 : i32
    %c0_i32_0 = arith.constant 0 : i32
    %c0_i32_1 = arith.constant 0 : i32
    %c0_i32_2 = arith.constant 0 : i32
    return %c0_i32, %c0_i32_0, %c0_i32_1 : i32, i32, i32
  }
  func.func @transform_13(%arg0: i32) -> (i32, i32, i32) {
    %c0_i32 = arith.constant 0 : i32
    %c0_i32_0 = arith.constant 0 : i32
    %c0_i32_1 = arith.constant 0 : i32
    %c0_i32_2 = arith.constant 0 : i32
    return %c0_i32, %c0_i32_0, %c0_i32_1 : i32, i32, i32
  }
  func.func @transform_14(%arg0: i32) -> (i32, i32, i32) {
    %c0_i32 = arith.constant 0 : i32
    %c0_i32_0 = arith.constant 0 : i32
    %c0_i32_1 = arith.constant 0 : i32
    %c0_i32_2 = arith.constant 0 : i32
    return %c0_i32, %c0_i32_0, %c0_i32_1 : i32, i32, i32
  }
  func.func @transform_15(%arg0: i32) -> (i32, i32, i32) {
    %c0_i32 = arith.constant 0 : i32
    %c0_i32_0 = arith.constant 0 : i32
    %c0_i32_1 = arith.constant 0 : i32
    %c0_i32_2 = arith.constant 0 : i32
    return %c0_i32, %c0_i32_0, %c0_i32_1 : i32, i32, i32
  }
  func.func @transform_16(%arg0: i32) -> (i32, i32, i32) {
    %c0_i32 = arith.constant 0 : i32
    %c0_i32_0 = arith.constant 0 : i32
    %c0_i32_1 = arith.constant 0 : i32
    %c0_i32_2 = arith.constant 0 : i32
    return %c0_i32, %c0_i32_0, %c0_i32_1 : i32, i32, i32
  }
  func.func @transform_17(%arg0: i32) -> (i32, i32) {
    %c0_i32 = arith.constant 0 : i32
    %c0_i32_0 = arith.constant 0 : i32
    %c0_i32_1 = arith.constant 0 : i32
    return %c0_i32, %c0_i32_0 : i32, i32
  }
  func.func @transform_18(%arg0: i32) -> (i32, i32) {
    %c0_i32 = arith.constant 0 : i32
    %c0_i32_0 = arith.constant 0 : i32
    %c0_i32_1 = arith.constant 0 : i32
    return %c0_i32, %c0_i32_0 : i32, i32
  }
  func.func @transform_19(%arg0: i32) -> (i32, i32) {
    %c0_i32 = arith.constant 0 : i32
    %c0_i32_0 = arith.constant 0 : i32
    %c0_i32_1 = arith.constant 0 : i32
    return %c0_i32, %c0_i32_0 : i32, i32
  }
  func.func @transform_20(%arg0: i32) -> (i32, i32) {
    %c0_i32 = arith.constant 0 : i32
    %c0_i32_0 = arith.constant 0 : i32
    %c0_i32_1 = arith.constant 0 : i32
    return %c0_i32, %c0_i32_0 : i32, i32
  }
  func.func @transform_21(%arg0: i32) -> (i32, i32) {
    %c0_i32 = arith.constant 0 : i32
    %c0_i32_0 = arith.constant 0 : i32
    %c0_i32_1 = arith.constant 0 : i32
    return %c0_i32, %c0_i32_0 : i32, i32
  }
  func.func @transform_22(%arg0: i32) -> (i32, i32) {
    %c0_i32 = arith.constant 0 : i32
    %c0_i32_0 = arith.constant 0 : i32
    %c0_i32_1 = arith.constant 0 : i32
    return %c0_i32, %c0_i32_0 : i32, i32
  }
  func.func @transform_23(%arg0: i32) -> (i32, i32) {
    %c0_i32 = arith.constant 0 : i32
    %c0_i32_0 = arith.constant 0 : i32
    %c0_i32_1 = arith.constant 0 : i32
    return %c0_i32, %c0_i32_0 : i32, i32
  }
  func.func @transform_24(%arg0: i32) -> (i32, i32) {
    %c0_i32 = arith.constant 0 : i32
    %c0_i32_0 = arith.constant 0 : i32
    %c0_i32_1 = arith.constant 0 : i32
    return %c0_i32, %c0_i32_0 : i32, i32
  }
  func.func @transform_25(%arg0: i32) -> (i32, i32) {
    %c0_i32 = arith.constant 0 : i32
    %c0_i32_0 = arith.constant 0 : i32
    %c0_i32_1 = arith.constant 0 : i32
    return %c0_i32, %c0_i32_0 : i32, i32
  }
  func.func @transform_26(%arg0: i32) -> (i32, i32) {
    %c0_i32 = arith.constant 0 : i32
    %c0_i32_0 = arith.constant 0 : i32
    %c0_i32_1 = arith.constant 0 : i32
    return %c0_i32, %c0_i32_0 : i32, i32
  }
  func.func @transform_27(%arg0: i32) -> (i32, i32) {
    %c0_i32 = arith.constant 0 : i32
    %c0_i32_0 = arith.constant 0 : i32
    %c0_i32_1 = arith.constant 0 : i32
    return %c0_i32, %c0_i32_0 : i32, i32
  }
  func.func @transform_28(%arg0: i32) -> (i32, i32, i32) {
    %c0_i32 = arith.constant 0 : i32
    %c0_i32_0 = arith.constant 0 : i32
    %c0_i32_1 = arith.constant 0 : i32
    return %arg0, %c0_i32, %c0_i32_0 : i32, i32, i32
  }
}

</mosaic_0001>

<llo_original>
// kernel: custom_clip_forward.1
$region0: #{custom_clip_forward.1}
  #allocation0 [shape = 'u32[]', space=smem, size = 0x4, offset = 0x4, fixed_abs, tag = 'smem constant byte address 0x4 - core index']
  #allocation1 [shape = 'u32[72,128]{1,0:T(1,128)}', space=vmem, size = 0x9000, scoped, tag = 'internal scratch']
  #allocation2 [shape = 'f32[1,1]{1,0:T(1,128)S(6)}', space=smem, size = 0x200, scoped, tag = 'scoped memory for custom_clip_forward.1']
  %s0 = inlined_call_operand.vmem [shape: f32[2,1,1024], index: 0, kind: input, shape index: {}]
  %s1 = inlined_call_operand.vmem [shape: f32[48,32], index: 1, kind: input, shape index: {}]
  %s2 = inlined_call_operand.vmem [shape: bf16[1024,32], index: 2, kind: input, shape index: {}]
  %s3 = inlined_call_operand.vmem [shape: f32[1,32], index: 3, kind: input, shape index: {}]
  %s4 = inlined_call_operand.vmem [shape: f32[32,2], index: 4, kind: input, shape index: {}]
  %s5 = inlined_call_operand.vmem [shape: f32[1,2], index: 5, kind: input, shape index: {}]
  %s6 = inlined_call_operand.vmem [shape: f32[2,32], index: 6, kind: input, shape index: {}]
  %s7 = inlined_call_operand.vmem [shape: f32[1,32], index: 7, kind: input, shape index: {}]
  %s8 = inlined_call_operand.vmem [shape: f32[1,32], index: 8, kind: input, shape index: {}]
  %s9 = inlined_call_operand.vmem [shape: f32[1,32], index: 9, kind: input, shape index: {}]
  %s10 = inlined_call_operand.vmem [shape: bf16[4,32,8], index: 10, kind: input, shape index: {}]
  %s11 = inlined_call_operand.vmem [shape: f32[4,1,8], index: 11, kind: input, shape index: {}]
  %s12 = inlined_call_operand.vmem [shape: bf16[4,32,8], index: 12, kind: input, shape index: {}]
  %s13 = inlined_call_operand.vmem [shape: f32[4,1,8], index: 13, kind: input, shape index: {}]
  %s14 = inlined_call_operand.vmem [shape: bf16[4,32,8], index: 14, kind: input, shape index: {}]
  %s15 = inlined_call_operand.vmem [shape: f32[4,1,8], index: 15, kind: input, shape index: {}]
  %s16 = inlined_call_operand.vmem [shape: bf16[4,8,32], index: 16, kind: input, shape index: {}]
  %s17 = inlined_call_operand.vmem [shape: f32[1,32], index: 17, kind: input, shape index: {}]
  %s18 = inlined_call_operand.vmem [shape: f32[1,32], index: 18, kind: input, shape index: {}]
  %s19 = inlined_call_operand.vmem [shape: f32[1,32], index: 19, kind: input, shape index: {}]
  %s20 = inlined_call_operand.vmem [shape: bf16[32,128], index: 20, kind: input, shape index: {}]
  %s21 = inlined_call_operand.vmem [shape: f32[1,128], index: 21, kind: input, shape index: {}]
  %s22 = inlined_call_operand.vmem [shape: bf16[128,32], index: 22, kind: input, shape index: {}]
  %s23 = inlined_call_operand.vmem [shape: f32[1,32], index: 23, kind: input, shape index: {}]
  %s24 = inlined_call_operand.vmem [shape: f32[1,32], index: 24, kind: input, shape index: {}]
  %s25 = inlined_call_operand.vmem [shape: f32[1,32], index: 25, kind: input, shape index: {}]
  %s26 = inlined_call_operand.vmem [shape: bf16[32,32], index: 26, kind: input, shape index: {}]
  %s27 = inlined_call_operand.<no memory space> [shape: f32[1,1], index: 27, kind: input, shape index: {}]
  %s28 = inlined_call_operand.hbm [shape: f32[2,1,128], index: 28, kind: output, shape index: {}]
  %s29 = sld [smem:[#allocation0]]
  $region145: #{custom_clip_forward.1} parent=0
    _
  %s31 = ssub.s32 1, %s29
  %s32 = scalar_select 0, %s31, %s29
  %33 = sst [smem:[#allocation2]] %s27
  $region1: #{custom_clip_forward.1} parent=0
    #allocation3 [shape = 'u8[1024]{0}', space=vmem, size = 0x400, scoped, tag = 'output window, operand 0']
    #allocation4 [shape = 's32[2]{0}', space=sflag, size = 0x8, scoped, tag = 'scoped memory for custom_clip_forward.1']
    %34 = vsyncpa [#allocation4], 0
    %s35 = scalar_lea.sflag [#allocation4], 1
    %36 = vsyncpa %s35, 0
    loop: start=0, step=1, limit=4
    $region2: #{custom_clip_forward.1} parent=1 // loop_pre_header
      _
    $region3: #{custom_clip_forward.1} parent=1 // loop_header
      %s38 = sphi 0, %s42
      %p39 = scmp.ge.s32.totalorder %s38, 4
      %s48 = sphi 0, %s50
      %s51 = sphi 0, %s48
      %s52 = sphi 0, %s51
      %s68 = sphi 0, %s52
      %s72 = sphi 0, %s72
      %s74 = sphi 0, %s72
      %s75 = sphi 0, %s74
      %s89 = sphi 0, %s75
      %s93 = sphi 0, %s93
      %s95 = sphi 0, %s93
      %s96 = sphi 0, %s95
      %s110 = sphi 0, %s96
      %s114 = sphi 0, %s114
      %s116 = sphi 0, %s114
      %s117 = sphi 0, %s116
      %s131 = sphi 0, %s117
      %s135 = sphi 0, %s135
      %s137 = sphi 0, %s135
      %s138 = sphi 0, %s137
      %s152 = sphi 0, %s138
      %s156 = sphi 0, %s156
      %s158 = sphi 0, %s156
      %s159 = sphi 0, %s158
      %s173 = sphi 0, %s159
      %s177 = sphi 0, %s177
      %s179 = sphi 0, %s177
      %s180 = sphi 0, %s179
      %s194 = sphi 0, %s180
      %s198 = sphi 0, %s198
      %s200 = sphi 0, %s198
      %s201 = sphi 0, %s200
      %s215 = sphi 0, %s201
      %s219 = sphi 0, %s219
      %s221 = sphi 0, %s219
      %s222 = sphi 0, %s221
      %s236 = sphi 0, %s222
      %s240 = sphi 0, %s240
      %s242 = sphi 0, %s240
      %s243 = sphi 0, %s242
      %s257 = sphi 0, %s243
      %s261 = sphi 0, %s261
      %s263 = sphi 0, %s261
      %s264 = sphi 0, %s263
      %s278 = sphi 0, %s264
      %s282 = sphi 0, %s282
      %s284 = sphi 0, %s282
      %s285 = sphi 0, %s284
      %s299 = sphi 0, %s285
      %s303 = sphi 0, %s303
      %s305 = sphi 0, %s303
      %s306 = sphi 0, %s305
      %s320 = sphi 0, %s306
      %s324 = sphi 0, %s324
      %s326 = sphi 0, %s324
      %s327 = sphi 0, %s326
      %s341 = sphi 0, %s327
      %s345 = sphi 0, %s345
      %s347 = sphi 0, %s345
      %s348 = sphi 0, %s347
      %s362 = sphi 0, %s348
      %s366 = sphi 0, %s366
      %s368 = sphi 0, %s366
      %s369 = sphi 0, %s368
      %s383 = sphi 0, %s369
      %s387 = sphi 0, %s387
      %s389 = sphi 0, %s387
      %s390 = sphi 0, %s389
      %s404 = sphi 0, %s390
      %s408 = sphi 0, %s408
      %s410 = sphi 0, %s408
      %s411 = sphi 0, %s410
      %s425 = sphi 0, %s411
      %s429 = sphi 0, %s429
      %s431 = sphi 0, %s429
      %s432 = sphi 0, %s431
      %s446 = sphi 0, %s432
      %s450 = sphi 0, %s450
      %s452 = sphi 0, %s450
      %s453 = sphi 0, %s452
      %s467 = sphi 0, %s453
      %s471 = sphi 0, %s471
      %s473 = sphi 0, %s471
      %s474 = sphi 0, %s473
      %s488 = sphi 0, %s474
      %s492 = sphi 0, %s492
      %s494 = sphi 0, %s492
      %s495 = sphi 0, %s494
      %s509 = sphi 0, %s495
      %s513 = sphi 0, %s513
      %s515 = sphi 0, %s513
      %s516 = sphi 0, %s515
      %s530 = sphi 0, %s516
      %s534 = sphi 0, %s534
      %s536 = sphi 0, %s534
      %s537 = sphi 0, %s536
      %s551 = sphi 0, %s537
      %s555 = sphi 0, %s555
      %s557 = sphi 0, %s555
      %s558 = sphi 0, %s557
      %s572 = sphi 0, %s558
      %s576 = sphi 0, %s576
      %s578 = sphi 0, %s576
      %s579 = sphi 0, %s578
      %s593 = sphi 0, %s579
      %s597 = sphi 0, %s597
      %s599 = sphi 0, %s597
      %s600 = sphi 0, %s599
      %s614 = sphi 0, %s600
      %s618 = sphi 0, %s618
      %s620 = sphi 0, %s618
      %s621 = sphi 0, %s620
      %s635 = sphi 0, %s621
      %s641 = sphi 0, %s643
      %s644 = sphi 0, %s641
      %s645 = sphi 0, %s644
      %s661 = sphi 0, %s645
    $region4: #{custom_clip_forward.1} parent=1 // loop_header_branch
      %41 = sbr.rel (%p39) target = $region8
    $region5: #{custom_clip_forward.1} parent=1 // loop_body
      %s43 = ssub.s32 %s38, 1
      %s44 = ssub.s32 %s38, 2
      %s45 = sadd.s32 %s38, 1
      %s46 = ssub.s32 %s38, %s45
      %p47 = scmp.eq.s32.totalorder %s46, 0
      %s49 = sadd.s32 %s48, 1
      %s50 = scalar_select %p47, %s48, %s49
      %p53 = pneg %p47
      %p54 = scmp.eq.s32.totalorder %s38, 1
      %p55 = por %p53, %p54
      %p56 = scmp.ne.s32.totalorder %s48, %s51
      %p57 = scmp.eq.s32.totalorder %s38, 0
      %p58 = por %p56, %p57
      %p59 = scmp.ne.s32.totalorder %s48, %s51
      %p60 = scmp.eq.s32.totalorder %s43, 1
      %p61 = por %p59, %p60
      %p62 = scmp.ne.s32.totalorder %s51, %s52
      %p63 = scmp.eq.s32.totalorder %s43, 0
      %p64 = por %p62, %p63
      %p65 = scmp.ne.s32.totalorder %s51, %s52
      %p66 = scmp.eq.s32.totalorder %s44, 1
      %p67 = por %p65, %p66
      %p69 = scmp.ne.s32.totalorder %s52, %s68
      %p70 = scmp.eq.s32.totalorder %s44, 0
      %p71 = por %p69, %p70
      %s73 = sadd.s32 %s72, 1
      %p76 = scmp.eq.s32.totalorder %s38, 1
      %p77 = scmp.ne.s32.totalorder %s72, %s74
      %p78 = scmp.eq.s32.totalorder %s38, 0
      %p79 = por %p77, %p78
      %p80 = scmp.ne.s32.totalorder %s72, %s74
      %p81 = scmp.eq.s32.totalorder %s43, 1
      %p82 = por %p80, %p81
      %p83 = scmp.ne.s32.totalorder %s74, %s75
      %p84 = scmp.eq.s32.totalorder %s43, 0
      %p85 = por %p83, %p84
      %p86 = scmp.ne.s32.totalorder %s74, %s75
      %p87 = scmp.eq.s32.totalorder %s44, 1
      %p88 = por %p86, %p87
      %p90 = scmp.ne.s32.totalorder %s75, %s89
      %p91 = scmp.eq.s32.totalorder %s44, 0
      %p92 = por %p90, %p91
      %s94 = sadd.s32 %s93, 1
      %p97 = scmp.eq.s32.totalorder %s38, 1
      %p98 = scmp.ne.s32.totalorder %s93, %s95
      %p99 = scmp.eq.s32.totalorder %s38, 0
      %p100 = por %p98, %p99
      %p101 = scmp.ne.s32.totalorder %s93, %s95
      %p102 = scmp.eq.s32.totalorder %s43, 1
      %p103 = por %p101, %p102
      %p104 = scmp.ne.s32.totalorder %s95, %s96
      %p105 = scmp.eq.s32.totalorder %s43, 0
      %p106 = por %p104, %p105
      %p107 = scmp.ne.s32.totalorder %s95, %s96
      %p108 = scmp.eq.s32.totalorder %s44, 1
      %p109 = por %p107, %p108
      %p111 = scmp.ne.s32.totalorder %s96, %s110
      %p112 = scmp.eq.s32.totalorder %s44, 0
      %p113 = por %p111, %p112
      %s115 = sadd.s32 %s114, 1
      %p118 = scmp.eq.s32.totalorder %s38, 1
      %p119 = scmp.ne.s32.totalorder %s114, %s116
      %p120 = scmp.eq.s32.totalorder %s38, 0
      %p121 = por %p119, %p120
      %p122 = scmp.ne.s32.totalorder %s114, %s116
      %p123 = scmp.eq.s32.totalorder %s43, 1
      %p124 = por %p122, %p123
      %p125 = scmp.ne.s32.totalorder %s116, %s117
      %p126 = scmp.eq.s32.totalorder %s43, 0
      %p127 = por %p125, %p126
      %p128 = scmp.ne.s32.totalorder %s116, %s117
      %p129 = scmp.eq.s32.totalorder %s44, 1
      %p130 = por %p128, %p129
      %p132 = scmp.ne.s32.totalorder %s117, %s131
      %p133 = scmp.eq.s32.totalorder %s44, 0
      %p134 = por %p132, %p133
      %s136 = sadd.s32 %s135, 1
      %p139 = scmp.eq.s32.totalorder %s38, 1
      %p140 = scmp.ne.s32.totalorder %s135, %s137
      %p141 = scmp.eq.s32.totalorder %s38, 0
      %p142 = por %p140, %p141
      %p143 = scmp.ne.s32.totalorder %s135, %s137
      %p144 = scmp.eq.s32.totalorder %s43, 1
      %p145 = por %p143, %p144
      %p146 = scmp.ne.s32.totalorder %s137, %s138
      %p147 = scmp.eq.s32.totalorder %s43, 0
      %p148 = por %p146, %p147
      %p149 = scmp.ne.s32.totalorder %s137, %s138
      %p150 = scmp.eq.s32.totalorder %s44, 1
      %p151 = por %p149, %p150
      %p153 = scmp.ne.s32.totalorder %s138, %s152
      %p154 = scmp.eq.s32.totalorder %s44, 0
      %p155 = por %p153, %p154
      %s157 = sadd.s32 %s156, 1
      %p160 = scmp.eq.s32.totalorder %s38, 1
      %p161 = scmp.ne.s32.totalorder %s156, %s158
      %p162 = scmp.eq.s32.totalorder %s38, 0
      %p163 = por %p161, %p162
      %p164 = scmp.ne.s32.totalorder %s156, %s158
      %p165 = scmp.eq.s32.totalorder %s43, 1
      %p166 = por %p164, %p165
      %p167 = scmp.ne.s32.totalorder %s158, %s159
      %p168 = scmp.eq.s32.totalorder %s43, 0
      %p169 = por %p167, %p168
      %p170 = scmp.ne.s32.totalorder %s158, %s159
      %p171 = scmp.eq.s32.totalorder %s44, 1
      %p172 = por %p170, %p171
      %p174 = scmp.ne.s32.totalorder %s159, %s173
      %p175 = scmp.eq.s32.totalorder %s44, 0
      %p176 = por %p174, %p175
      %s178 = sadd.s32 %s177, 1
      %p181 = scmp.eq.s32.totalorder %s38, 1
      %p182 = scmp.ne.s32.totalorder %s177, %s179
      %p183 = scmp.eq.s32.totalorder %s38, 0
      %p184 = por %p182, %p183
      %p185 = scmp.ne.s32.totalorder %s177, %s179
      %p186 = scmp.eq.s32.totalorder %s43, 1
      %p187 = por %p185, %p186
      %p188 = scmp.ne.s32.totalorder %s179, %s180
      %p189 = scmp.eq.s32.totalorder %s43, 0
      %p190 = por %p188, %p189
      %p191 = scmp.ne.s32.totalorder %s179, %s180
      %p192 = scmp.eq.s32.totalorder %s44, 1
      %p193 = por %p191, %p192
      %p195 = scmp.ne.s32.totalorder %s180, %s194
      %p196 = scmp.eq.s32.totalorder %s44, 0
      %p197 = por %p195, %p196
      %s199 = sadd.s32 %s198, 1
      %p202 = scmp.eq.s32.totalorder %s38, 1
      %p203 = scmp.ne.s32.totalorder %s198, %s200
      %p204 = scmp.eq.s32.totalorder %s38, 0
      %p205 = por %p203, %p204
      %p206 = scmp.ne.s32.totalorder %s198, %s200
      %p207 = scmp.eq.s32.totalorder %s43, 1
      %p208 = por %p206, %p207
      %p209 = scmp.ne.s32.totalorder %s200, %s201
      %p210 = scmp.eq.s32.totalorder %s43, 0
      %p211 = por %p209, %p210
      %p212 = scmp.ne.s32.totalorder %s200, %s201
      %p213 = scmp.eq.s32.totalorder %s44, 1
      %p214 = por %p212, %p213
      %p216 = scmp.ne.s32.totalorder %s201, %s215
      %p217 = scmp.eq.s32.totalorder %s44, 0
      %p218 = por %p216, %p217
      %s220 = sadd.s32 %s219, 1
      %p223 = scmp.eq.s32.totalorder %s38, 1
      %p224 = scmp.ne.s32.totalorder %s219, %s221
      %p225 = scmp.eq.s32.totalorder %s38, 0
      %p226 = por %p224, %p225
      %p227 = scmp.ne.s32.totalorder %s219, %s221
      %p228 = scmp.eq.s32.totalorder %s43, 1
      %p229 = por %p227, %p228
      %p230 = scmp.ne.s32.totalorder %s221, %s222
      %p231 = scmp.eq.s32.totalorder %s43, 0
      %p232 = por %p230, %p231
      %p233 = scmp.ne.s32.totalorder %s221, %s222
      %p234 = scmp.eq.s32.totalorder %s44, 1
      %p235 = por %p233, %p234
      %p237 = scmp.ne.s32.totalorder %s222, %s236
      %p238 = scmp.eq.s32.totalorder %s44, 0
      %p239 = por %p237, %p238
      %s241 = sadd.s32 %s240, 1
      %p244 = scmp.eq.s32.totalorder %s38, 1
      %p245 = scmp.ne.s32.totalorder %s240, %s242
      %p246 = scmp.eq.s32.totalorder %s38, 0
      %p247 = por %p245, %p246
      %p248 = scmp.ne.s32.totalorder %s240, %s242
      %p249 = scmp.eq.s32.totalorder %s43, 1
      %p250 = por %p248, %p249
      %p251 = scmp.ne.s32.totalorder %s242, %s243
      %p252 = scmp.eq.s32.totalorder %s43, 0
      %p253 = por %p251, %p252
      %p254 = scmp.ne.s32.totalorder %s242, %s243
      %p255 = scmp.eq.s32.totalorder %s44, 1
      %p256 = por %p254, %p255
      %p258 = scmp.ne.s32.totalorder %s243, %s257
      %p259 = scmp.eq.s32.totalorder %s44, 0
      %p260 = por %p258, %p259
      %s262 = sadd.s32 %s261, 1
      %p265 = scmp.eq.s32.totalorder %s38, 1
      %p266 = scmp.ne.s32.totalorder %s261, %s263
      %p267 = scmp.eq.s32.totalorder %s38, 0
      %p268 = por %p266, %p267
      %p269 = scmp.ne.s32.totalorder %s261, %s263
      %p270 = scmp.eq.s32.totalorder %s43, 1
      %p271 = por %p269, %p270
      %p272 = scmp.ne.s32.totalorder %s263, %s264
      %p273 = scmp.eq.s32.totalorder %s43, 0
      %p274 = por %p272, %p273
      %p275 = scmp.ne.s32.totalorder %s263, %s264
      %p276 = scmp.eq.s32.totalorder %s44, 1
      %p277 = por %p275, %p276
      %p279 = scmp.ne.s32.totalorder %s264, %s278
      %p280 = scmp.eq.s32.totalorder %s44, 0
      %p281 = por %p279, %p280
      %s283 = sadd.s32 %s282, 1
      %p286 = scmp.eq.s32.totalorder %s38, 1
      %p287 = scmp.ne.s32.totalorder %s282, %s284
      %p288 = scmp.eq.s32.totalorder %s38, 0
      %p289 = por %p287, %p288
      %p290 = scmp.ne.s32.totalorder %s282, %s284
      %p291 = scmp.eq.s32.totalorder %s43, 1
      %p292 = por %p290, %p291
      %p293 = scmp.ne.s32.totalorder %s284, %s285
      %p294 = scmp.eq.s32.totalorder %s43, 0
      %p295 = por %p293, %p294
      %p296 = scmp.ne.s32.totalorder %s284, %s285
      %p297 = scmp.eq.s32.totalorder %s44, 1
      %p298 = por %p296, %p297
      %p300 = scmp.ne.s32.totalorder %s285, %s299
      %p301 = scmp.eq.s32.totalorder %s44, 0
      %p302 = por %p300, %p301
      %s304 = sadd.s32 %s303, 1
      %p307 = scmp.eq.s32.totalorder %s38, 1
      %p308 = scmp.ne.s32.totalorder %s303, %s305
      %p309 = scmp.eq.s32.totalorder %s38, 0
      %p310 = por %p308, %p309
      %p311 = scmp.ne.s32.totalorder %s303, %s305
      %p312 = scmp.eq.s32.totalorder %s43, 1
      %p313 = por %p311, %p312
      %p314 = scmp.ne.s32.totalorder %s305, %s306
      %p315 = scmp.eq.s32.totalorder %s43, 0
      %p316 = por %p314, %p315
      %p317 = scmp.ne.s32.totalorder %s305, %s306
      %p318 = scmp.eq.s32.totalorder %s44, 1
      %p319 = por %p317, %p318
      %p321 = scmp.ne.s32.totalorder %s306, %s320
      %p322 = scmp.eq.s32.totalorder %s44, 0
      %p323 = por %p321, %p322
      %s325 = sadd.s32 %s324, 1
      %p328 = scmp.eq.s32.totalorder %s38, 1
      %p329 = scmp.ne.s32.totalorder %s324, %s326
      %p330 = scmp.eq.s32.totalorder %s38, 0
      %p331 = por %p329, %p330
      %p332 = scmp.ne.s32.totalorder %s324, %s326
      %p333 = scmp.eq.s32.totalorder %s43, 1
      %p334 = por %p332, %p333
      %p335 = scmp.ne.s32.totalorder %s326, %s327
      %p336 = scmp.eq.s32.totalorder %s43, 0
      %p337 = por %p335, %p336
      %p338 = scmp.ne.s32.totalorder %s326, %s327
      %p339 = scmp.eq.s32.totalorder %s44, 1
      %p340 = por %p338, %p339
      %p342 = scmp.ne.s32.totalorder %s327, %s341
      %p343 = scmp.eq.s32.totalorder %s44, 0
      %p344 = por %p342, %p343
      %s346 = sadd.s32 %s345, 1
      %p349 = scmp.eq.s32.totalorder %s38, 1
      %p350 = scmp.ne.s32.totalorder %s345, %s347
      %p351 = scmp.eq.s32.totalorder %s38, 0
      %p352 = por %p350, %p351
      %p353 = scmp.ne.s32.totalorder %s345, %s347
      %p354 = scmp.eq.s32.totalorder %s43, 1
      %p355 = por %p353, %p354
      %p356 = scmp.ne.s32.totalorder %s347, %s348
      %p357 = scmp.eq.s32.totalorder %s43, 0
      %p358 = por %p356, %p357
      %p359 = scmp.ne.s32.totalorder %s347, %s348
      %p360 = scmp.eq.s32.totalorder %s44, 1
      %p361 = por %p359, %p360
      %p363 = scmp.ne.s32.totalorder %s348, %s362
      %p364 = scmp.eq.s32.totalorder %s44, 0
      %p365 = por %p363, %p364
      %s367 = sadd.s32 %s366, 1
      %p370 = scmp.eq.s32.totalorder %s38, 1
      %p371 = scmp.ne.s32.totalorder %s366, %s368
      %p372 = scmp.eq.s32.totalorder %s38, 0
      %p373 = por %p371, %p372
      %p374 = scmp.ne.s32.totalorder %s366, %s368
      %p375 = scmp.eq.s32.totalorder %s43, 1
      %p376 = por %p374, %p375
      %p377 = scmp.ne.s32.totalorder %s368, %s369
      %p378 = scmp.eq.s32.totalorder %s43, 0
      %p379 = por %p377, %p378
      %p380 = scmp.ne.s32.totalorder %s368, %s369
      %p381 = scmp.eq.s32.totalorder %s44, 1
      %p382 = por %p380, %p381
      %p384 = scmp.ne.s32.totalorder %s369, %s383
      %p385 = scmp.eq.s32.totalorder %s44, 0
      %p386 = por %p384, %p385
      %s388 = sadd.s32 %s387, 1
      %p391 = scmp.eq.s32.totalorder %s38, 1
      %p392 = scmp.ne.s32.totalorder %s387, %s389
      %p393 = scmp.eq.s32.totalorder %s38, 0
      %p394 = por %p392, %p393
      %p395 = scmp.ne.s32.totalorder %s387, %s389
      %p396 = scmp.eq.s32.totalorder %s43, 1
      %p397 = por %p395, %p396
      %p398 = scmp.ne.s32.totalorder %s389, %s390
      %p399 = scmp.eq.s32.totalorder %s43, 0
      %p400 = por %p398, %p399
      %p401 = scmp.ne.s32.totalorder %s389, %s390
      %p402 = scmp.eq.s32.totalorder %s44, 1
      %p403 = por %p401, %p402
      %p405 = scmp.ne.s32.totalorder %s390, %s404
      %p406 = scmp.eq.s32.totalorder %s44, 0
      %p407 = por %p405, %p406
      %s409 = sadd.s32 %s408, 1
      %p412 = scmp.eq.s32.totalorder %s38, 1
      %p413 = scmp.ne.s32.totalorder %s408, %s410
      %p414 = scmp.eq.s32.totalorder %s38, 0
      %p415 = por %p413, %p414
      %p416 = scmp.ne.s32.totalorder %s408, %s410
      %p417 = scmp.eq.s32.totalorder %s43, 1
      %p418 = por %p416, %p417
      %p419 = scmp.ne.s32.totalorder %s410, %s411
      %p420 = scmp.eq.s32.totalorder %s43, 0
      %p421 = por %p419, %p420
      %p422 = scmp.ne.s32.totalorder %s410, %s411
      %p423 = scmp.eq.s32.totalorder %s44, 1
      %p424 = por %p422, %p423
      %p426 = scmp.ne.s32.totalorder %s411, %s425
      %p427 = scmp.eq.s32.totalorder %s44, 0
      %p428 = por %p426, %p427
      %s430 = sadd.s32 %s429, 1
      %p433 = scmp.eq.s32.totalorder %s38, 1
      %p434 = scmp.ne.s32.totalorder %s429, %s431
      %p435 = scmp.eq.s32.totalorder %s38, 0
      %p436 = por %p434, %p435
      %p437 = scmp.ne.s32.totalorder %s429, %s431
      %p438 = scmp.eq.s32.totalorder %s43, 1
      %p439 = por %p437, %p438
      %p440 = scmp.ne.s32.totalorder %s431, %s432
      %p441 = scmp.eq.s32.totalorder %s43, 0
      %p442 = por %p440, %p441
      %p443 = scmp.ne.s32.totalorder %s431, %s432
      %p444 = scmp.eq.s32.totalorder %s44, 1
      %p445 = por %p443, %p444
      %p447 = scmp.ne.s32.totalorder %s432, %s446
      %p448 = scmp.eq.s32.totalorder %s44, 0
      %p449 = por %p447, %p448
      %s451 = sadd.s32 %s450, 1
      %p454 = scmp.eq.s32.totalorder %s38, 1
      %p455 = scmp.ne.s32.totalorder %s450, %s452
      %p456 = scmp.eq.s32.totalorder %s38, 0
      %p457 = por %p455, %p456
      %p458 = scmp.ne.s32.totalorder %s450, %s452
      %p459 = scmp.eq.s32.totalorder %s43, 1
      %p460 = por %p458, %p459
      %p461 = scmp.ne.s32.totalorder %s452, %s453
      %p462 = scmp.eq.s32.totalorder %s43, 0
      %p463 = por %p461, %p462
      %p464 = scmp.ne.s32.totalorder %s452, %s453
      %p465 = scmp.eq.s32.totalorder %s44, 1
      %p466 = por %p464, %p465
      %p468 = scmp.ne.s32.totalorder %s453, %s467
      %p469 = scmp.eq.s32.totalorder %s44, 0
      %p470 = por %p468, %p469
      %s472 = sadd.s32 %s471, 1
      %p475 = scmp.eq.s32.totalorder %s38, 1
      %p476 = scmp.ne.s32.totalorder %s471, %s473
      %p477 = scmp.eq.s32.totalorder %s38, 0
      %p478 = por %p476, %p477
      %p479 = scmp.ne.s32.totalorder %s471, %s473
      %p480 = scmp.eq.s32.totalorder %s43, 1
      %p481 = por %p479, %p480
      %p482 = scmp.ne.s32.totalorder %s473, %s474
      %p483 = scmp.eq.s32.totalorder %s43, 0
      %p484 = por %p482, %p483
      %p485 = scmp.ne.s32.totalorder %s473, %s474
      %p486 = scmp.eq.s32.totalorder %s44, 1
      %p487 = por %p485, %p486
      %p489 = scmp.ne.s32.totalorder %s474, %s488
      %p490 = scmp.eq.s32.totalorder %s44, 0
      %p491 = por %p489, %p490
      %s493 = sadd.s32 %s492, 1
      %p496 = scmp.eq.s32.totalorder %s38, 1
      %p497 = scmp.ne.s32.totalorder %s492, %s494
      %p498 = scmp.eq.s32.totalorder %s38, 0
      %p499 = por %p497, %p498
      %p500 = scmp.ne.s32.totalorder %s492, %s494
      %p501 = scmp.eq.s32.totalorder %s43, 1
      %p502 = por %p500, %p501
      %p503 = scmp.ne.s32.totalorder %s494, %s495
      %p504 = scmp.eq.s32.totalorder %s43, 0
      %p505 = por %p503, %p504
      %p506 = scmp.ne.s32.totalorder %s494, %s495
      %p507 = scmp.eq.s32.totalorder %s44, 1
      %p508 = por %p506, %p507
      %p510 = scmp.ne.s32.totalorder %s495, %s509
      %p511 = scmp.eq.s32.totalorder %s44, 0
      %p512 = por %p510, %p511
      %s514 = sadd.s32 %s513, 1
      %p517 = scmp.eq.s32.totalorder %s38, 1
      %p518 = scmp.ne.s32.totalorder %s513, %s515
      %p519 = scmp.eq.s32.totalorder %s38, 0
      %p520 = por %p518, %p519
      %p521 = scmp.ne.s32.totalorder %s513, %s515
      %p522 = scmp.eq.s32.totalorder %s43, 1
      %p523 = por %p521, %p522
      %p524 = scmp.ne.s32.totalorder %s515, %s516
      %p525 = scmp.eq.s32.totalorder %s43, 0
      %p526 = por %p524, %p525
      %p527 = scmp.ne.s32.totalorder %s515, %s516
      %p528 = scmp.eq.s32.totalorder %s44, 1
      %p529 = por %p527, %p528
      %p531 = scmp.ne.s32.totalorder %s516, %s530
      %p532 = scmp.eq.s32.totalorder %s44, 0
      %p533 = por %p531, %p532
      %s535 = sadd.s32 %s534, 1
      %p538 = scmp.eq.s32.totalorder %s38, 1
      %p539 = scmp.ne.s32.totalorder %s534, %s536
      %p540 = scmp.eq.s32.totalorder %s38, 0
      %p541 = por %p539, %p540
      %p542 = scmp.ne.s32.totalorder %s534, %s536
      %p543 = scmp.eq.s32.totalorder %s43, 1
      %p544 = por %p542, %p543
      %p545 = scmp.ne.s32.totalorder %s536, %s537
      %p546 = scmp.eq.s32.totalorder %s43, 0
      %p547 = por %p545, %p546
      %p548 = scmp.ne.s32.totalorder %s536, %s537
      %p549 = scmp.eq.s32.totalorder %s44, 1
      %p550 = por %p548, %p549
      %p552 = scmp.ne.s32.totalorder %s537, %s551
      %p553 = scmp.eq.s32.totalorder %s44, 0
      %p554 = por %p552, %p553
      %s556 = sadd.s32 %s555, 1
      %p559 = scmp.eq.s32.totalorder %s38, 1
      %p560 = scmp.ne.s32.totalorder %s555, %s557
      %p561 = scmp.eq.s32.totalorder %s38, 0
      %p562 = por %p560, %p561
      %p563 = scmp.ne.s32.totalorder %s555, %s557
      %p564 = scmp.eq.s32.totalorder %s43, 1
      %p565 = por %p563, %p564
      %p566 = scmp.ne.s32.totalorder %s557, %s558
      %p567 = scmp.eq.s32.totalorder %s43, 0
      %p568 = por %p566, %p567
      %p569 = scmp.ne.s32.totalorder %s557, %s558
      %p570 = scmp.eq.s32.totalorder %s44, 1
      %p571 = por %p569, %p570
      %p573 = scmp.ne.s32.totalorder %s558, %s572
      %p574 = scmp.eq.s32.totalorder %s44, 0
      %p575 = por %p573, %p574
      %s577 = sadd.s32 %s576, 1
      %p580 = scmp.eq.s32.totalorder %s38, 1
      %p581 = scmp.ne.s32.totalorder %s576, %s578
      %p582 = scmp.eq.s32.totalorder %s38, 0
      %p583 = por %p581, %p582
      %p584 = scmp.ne.s32.totalorder %s576, %s578
      %p585 = scmp.eq.s32.totalorder %s43, 1
      %p586 = por %p584, %p585
      %p587 = scmp.ne.s32.totalorder %s578, %s579
      %p588 = scmp.eq.s32.totalorder %s43, 0
      %p589 = por %p587, %p588
      %p590 = scmp.ne.s32.totalorder %s578, %s579
      %p591 = scmp.eq.s32.totalorder %s44, 1
      %p592 = por %p590, %p591
      %p594 = scmp.ne.s32.totalorder %s579, %s593
      %p595 = scmp.eq.s32.totalorder %s44, 0
      %p596 = por %p594, %p595
      %s598 = sadd.s32 %s597, 1
      %p601 = scmp.eq.s32.totalorder %s38, 1
      %p602 = scmp.ne.s32.totalorder %s597, %s599
      %p603 = scmp.eq.s32.totalorder %s38, 0
      %p604 = por %p602, %p603
      %p605 = scmp.ne.s32.totalorder %s597, %s599
      %p606 = scmp.eq.s32.totalorder %s43, 1
      %p607 = por %p605, %p606
      %p608 = scmp.ne.s32.totalorder %s599, %s600
      %p609 = scmp.eq.s32.totalorder %s43, 0
      %p610 = por %p608, %p609
      %p611 = scmp.ne.s32.totalorder %s599, %s600
      %p612 = scmp.eq.s32.totalorder %s44, 1
      %p613 = por %p611, %p612
      %p615 = scmp.ne.s32.totalorder %s600, %s614
      %p616 = scmp.eq.s32.totalorder %s44, 0
      %p617 = por %p615, %p616
      %s619 = sadd.s32 %s618, 1
      %p622 = scmp.eq.s32.totalorder %s38, 1
      %p623 = scmp.ne.s32.totalorder %s618, %s620
      %p624 = scmp.eq.s32.totalorder %s38, 0
      %p625 = por %p623, %p624
      %p626 = scmp.ne.s32.totalorder %s618, %s620
      %p627 = scmp.eq.s32.totalorder %s43, 1
      %p628 = por %p626, %p627
      %p629 = scmp.ne.s32.totalorder %s620, %s621
      %p630 = scmp.eq.s32.totalorder %s43, 0
      %p631 = por %p629, %p630
      %p632 = scmp.ne.s32.totalorder %s620, %s621
      %p633 = scmp.eq.s32.totalorder %s44, 1
      %p634 = por %p632, %p633
      %p636 = scmp.ne.s32.totalorder %s621, %s635
      %p637 = scmp.eq.s32.totalorder %s44, 0
      %p638 = por %p636, %p637
      %s639 = ssub.s32 %s38, %s45
      %p640 = scmp.eq.s32.totalorder %s639, 0
      %s642 = sadd.s32 %s641, 1
      %s643 = scalar_select %p640, %s641, %s642
      %p646 = pneg %p640
      %p647 = scmp.eq.s32.totalorder %s38, 1
      %p648 = por %p646, %p647
      %p649 = scmp.ne.s32.totalorder %s641, %s644
      %p650 = scmp.eq.s32.totalorder %s38, 0
      %p651 = por %p649, %p650
      %p652 = scmp.ne.s32.totalorder %s641, %s644
      %p653 = scmp.eq.s32.totalorder %s43, 1
      %p654 = por %p652, %p653
      %p655 = scmp.ne.s32.totalorder %s644, %s645
      %p656 = scmp.eq.s32.totalorder %s43, 0
      %p657 = por %p655, %p656
      %p658 = scmp.ne.s32.totalorder %s644, %s645
      %p659 = scmp.eq.s32.totalorder %s44, 1
      %p660 = por %p658, %p659
      %p662 = scmp.ne.s32.totalorder %s645, %s661
      %p663 = scmp.eq.s32.totalorder %s44, 0
      %p664 = por %p662, %p663
      %p665 = scmp.le.s32.totalorder 1, %s38
      %p666 = scmp.lt.s32.totalorder %s38, 3
      %p667 = pnand %p665, %p666
      %p668 = pneg %p667
      // Predicated region
      $region9: #{custom_clip_forward.1} parent=5 // pred_check
        _
      $region10: #{custom_clip_forward.1} parent=5 // pred_check_branch
        %670 = sbr.rel (%p667) target = $region12
      $region11: #{custom_clip_forward.1} parent=5 // pred_region
        %s671 = ssub.s32 %s38, 1
        // Predicated region
        $region13: #{custom_clip_forward.1} parent=11 // pred_check
          %p672 = pneg %p85
        $region14: #{custom_clip_forward.1} parent=11 // pred_check_branch
          %674 = sbr.rel (%p672) target = $region16
        $region15: #{custom_clip_forward.1} parent=11 // pred_region
          _
        $region16: #{custom_clip_forward.1} parent=11 // pred_fallthru
          _
        // Predicated region
        $region17: #{custom_clip_forward.1} parent=11 // pred_check
          %p675 = pneg %p106
        $region18: #{custom_clip_forward.1} parent=11 // pred_check_branch
          %677 = sbr.rel (%p675) target = $region20
        $region19: #{custom_clip_forward.1} parent=11 // pred_region
          _
        $region20: #{custom_clip_forward.1} parent=11 // pred_fallthru
          _
        // Predicated region
        $region21: #{custom_clip_forward.1} parent=11 // pred_check
          %p678 = pneg %p127
        $region22: #{custom_clip_forward.1} parent=11 // pred_check_branch
          %680 = sbr.rel (%p678) target = $region24
        $region23: #{custom_clip_forward.1} parent=11 // pred_region
          _
        $region24: #{custom_clip_forward.1} parent=11 // pred_fallthru
          _
        // Predicated region
        $region25: #{custom_clip_forward.1} parent=11 // pred_check
          %p681 = pneg %p148
        $region26: #{custom_clip_forward.1} parent=11 // pred_check_branch
          %683 = sbr.rel (%p681) target = $region28
        $region27: #{custom_clip_forward.1} parent=11 // pred_region
          _
        $region28: #{custom_clip_forward.1} parent=11 // pred_fallthru
          _
        // Predicated region
        $region29: #{custom_clip_forward.1} parent=11 // pred_check
          %p684 = pneg %p169
        $region30: #{custom_clip_forward.1} parent=11 // pred_check_branch
          %686 = sbr.rel (%p684) target = $region32
        $region31: #{custom_clip_forward.1} parent=11 // pred_region
          _
        $region32: #{custom_clip_forward.1} parent=11 // pred_fallthru
          _
        // Predicated region
        $region33: #{custom_clip_forward.1} parent=11 // pred_check
          %p687 = pneg %p190
        $region34: #{custom_clip_forward.1} parent=11 // pred_check_branch
          %689 = sbr.rel (%p687) target = $region36
        $region35: #{custom_clip_forward.1} parent=11 // pred_region
          _
        $region36: #{custom_clip_forward.1} parent=11 // pred_fallthru
          _
        // Predicated region
        $region37: #{custom_clip_forward.1} parent=11 // pred_check
          %p690 = pneg %p211
        $region38: #{custom_clip_forward.1} parent=11 // pred_check_branch
          %692 = sbr.rel (%p690) target = $region40
        $region39: #{custom_clip_forward.1} parent=11 // pred_region
          _
        $region40: #{custom_clip_forward.1} parent=11 // pred_fallthru
          _
        // Predicated region
        $region41: #{custom_clip_forward.1} parent=11 // pred_check
          %p693 = pneg %p232
        $region42: #{custom_clip_forward.1} parent=11 // pred_check_branch
          %695 = sbr.rel (%p693) target = $region44
        $region43: #{custom_clip_forward.1} parent=11 // pred_region
          _
        $region44: #{custom_clip_forward.1} parent=11 // pred_fallthru
          _
        // Predicated region
        $region45: #{custom_clip_forward.1} parent=11 // pred_check
          %p696 = pneg %p253
        $region46: #{custom_clip_forward.1} parent=11 // pred_check_branch
          %698 = sbr.rel (%p696) target = $region48
        $region47: #{custom_clip_forward.1} parent=11 // pred_region
          _
        $region48: #{custom_clip_forward.1} parent=11 // pred_fallthru
          _
        // Predicated region
        $region49: #{custom_clip_forward.1} parent=11 // pred_check
          %p699 = pneg %p274
        $region50: #{custom_clip_forward.1} parent=11 // pred_check_branch
          %701 = sbr.rel (%p699) target = $region52
        $region51: #{custom_clip_forward.1} parent=11 // pred_region
          _
        $region52: #{custom_clip_forward.1} parent=11 // pred_fallthru
          _
        // Predicated region
        $region53: #{custom_clip_forward.1} parent=11 // pred_check
          %p702 = pneg %p295
        $region54: #{custom_clip_forward.1} parent=11 // pred_check_branch
          %704 = sbr.rel (%p702) target = $region56
        $region55: #{custom_clip_forward.1} parent=11 // pred_region
          _
        $region56: #{custom_clip_forward.1} parent=11 // pred_fallthru
          _
        // Predicated region
        $region57: #{custom_clip_forward.1} parent=11 // pred_check
          %p705 = pneg %p316
        $region58: #{custom_clip_forward.1} parent=11 // pred_check_branch
          %707 = sbr.rel (%p705) target = $region60
        $region59: #{custom_clip_forward.1} parent=11 // pred_region
          _
        $region60: #{custom_clip_forward.1} parent=11 // pred_fallthru
          _
        // Predicated region
        $region61: #{custom_clip_forward.1} parent=11 // pred_check
          %p708 = pneg %p337
        $region62: #{custom_clip_forward.1} parent=11 // pred_check_branch
          %710 = sbr.rel (%p708) target = $region64
        $region63: #{custom_clip_forward.1} parent=11 // pred_region
          _
        $region64: #{custom_clip_forward.1} parent=11 // pred_fallthru
          _
        // Predicated region
        $region65: #{custom_clip_forward.1} parent=11 // pred_check
          %p711 = pneg %p358
        $region66: #{custom_clip_forward.1} parent=11 // pred_check_branch
          %713 = sbr.rel (%p711) target = $region68
        $region67: #{custom_clip_forward.1} parent=11 // pred_region
          _
        $region68: #{custom_clip_forward.1} parent=11 // pred_fallthru
          _
        // Predicated region
        $region69: #{custom_clip_forward.1} parent=11 // pred_check
          %p714 = pneg %p379
        $region70: #{custom_clip_forward.1} parent=11 // pred_check_branch
          %716 = sbr.rel (%p714) target = $region72
        $region71: #{custom_clip_forward.1} parent=11 // pred_region
          _
        $region72: #{custom_clip_forward.1} parent=11 // pred_fallthru
          _
        // Predicated region
        $region73: #{custom_clip_forward.1} parent=11 // pred_check
          %p717 = pneg %p400
        $region74: #{custom_clip_forward.1} parent=11 // pred_check_branch
          %719 = sbr.rel (%p717) target = $region76
        $region75: #{custom_clip_forward.1} parent=11 // pred_region
          _
        $region76: #{custom_clip_forward.1} parent=11 // pred_fallthru
          _
        // Predicated region
        $region77: #{custom_clip_forward.1} parent=11 // pred_check
          %p720 = pneg %p421
        $region78: #{custom_clip_forward.1} parent=11 // pred_check_branch
          %722 = sbr.rel (%p720) target = $region80
        $region79: #{custom_clip_forward.1} parent=11 // pred_region
          _
        $region80: #{custom_clip_forward.1} parent=11 // pred_fallthru
          _
        // Predicated region
        $region81: #{custom_clip_forward.1} parent=11 // pred_check
          %p723 = pneg %p442
        $region82: #{custom_clip_forward.1} parent=11 // pred_check_branch
          %725 = sbr.rel (%p723) target = $region84
        $region83: #{custom_clip_forward.1} parent=11 // pred_region
          _
        $region84: #{custom_clip_forward.1} parent=11 // pred_fallthru
          _
        // Predicated region
        $region85: #{custom_clip_forward.1} parent=11 // pred_check
          %p726 = pneg %p463
        $region86: #{custom_clip_forward.1} parent=11 // pred_check_branch
          %728 = sbr.rel (%p726) target = $region88
        $region87: #{custom_clip_forward.1} parent=11 // pred_region
          _
        $region88: #{custom_clip_forward.1} parent=11 // pred_fallthru
          _
        // Predicated region
        $region89: #{custom_clip_forward.1} parent=11 // pred_check
          %p729 = pneg %p484
        $region90: #{custom_clip_forward.1} parent=11 // pred_check_branch
          %731 = sbr.rel (%p729) target = $region92
        $region91: #{custom_clip_forward.1} parent=11 // pred_region
          _
        $region92: #{custom_clip_forward.1} parent=11 // pred_fallthru
          _
        // Predicated region
        $region93: #{custom_clip_forward.1} parent=11 // pred_check
          %p732 = pneg %p505
        $region94: #{custom_clip_forward.1} parent=11 // pred_check_branch
          %734 = sbr.rel (%p732) target = $region96
        $region95: #{custom_clip_forward.1} parent=11 // pred_region
          _
        $region96: #{custom_clip_forward.1} parent=11 // pred_fallthru
          _
        // Predicated region
        $region97: #{custom_clip_forward.1} parent=11 // pred_check
          %p735 = pneg %p526
        $region98: #{custom_clip_forward.1} parent=11 // pred_check_branch
          %737 = sbr.rel (%p735) target = $region100
        $region99: #{custom_clip_forward.1} parent=11 // pred_region
          _
        $region100: #{custom_clip_forward.1} parent=11 // pred_fallthru
          _
        // Predicated region
        $region101: #{custom_clip_forward.1} parent=11 // pred_check
          %p738 = pneg %p547
        $region102: #{custom_clip_forward.1} parent=11 // pred_check_branch
          %740 = sbr.rel (%p738) target = $region104
        $region103: #{custom_clip_forward.1} parent=11 // pred_region
          _
        $region104: #{custom_clip_forward.1} parent=11 // pred_fallthru
          _
        // Predicated region
        $region105: #{custom_clip_forward.1} parent=11 // pred_check
          %p741 = pneg %p568
        $region106: #{custom_clip_forward.1} parent=11 // pred_check_branch
          %743 = sbr.rel (%p741) target = $region108
        $region107: #{custom_clip_forward.1} parent=11 // pred_region
          _
        $region108: #{custom_clip_forward.1} parent=11 // pred_fallthru
          _
        // Predicated region
        $region109: #{custom_clip_forward.1} parent=11 // pred_check
          %p744 = pneg %p589
        $region110: #{custom_clip_forward.1} parent=11 // pred_check_branch
          %746 = sbr.rel (%p744) target = $region112
        $region111: #{custom_clip_forward.1} parent=11 // pred_region
          _
        $region112: #{custom_clip_forward.1} parent=11 // pred_fallthru
          _
        // Predicated region
        $region113: #{custom_clip_forward.1} parent=11 // pred_check
          %p747 = pneg %p610
        $region114: #{custom_clip_forward.1} parent=11 // pred_check_branch
          %749 = sbr.rel (%p747) target = $region116
        $region115: #{custom_clip_forward.1} parent=11 // pred_region
          _
        $region116: #{custom_clip_forward.1} parent=11 // pred_fallthru
          _
        // Predicated region
        $region117: #{custom_clip_forward.1} parent=11 // pred_check
          %p750 = pneg %p631
        $region118: #{custom_clip_forward.1} parent=11 // pred_check_branch
          %752 = sbr.rel (%p750) target = $region120
        $region119: #{custom_clip_forward.1} parent=11 // pred_region
          _
        $region120: #{custom_clip_forward.1} parent=11 // pred_fallthru
          _
      $region12: #{custom_clip_forward.1} parent=5 // pred_fallthru
        _
      %p753 = scmp.lt.s32.totalorder %s38, 2
      // Predicated region
      $region121: #{custom_clip_forward.1} parent=5 // pred_check
        %p754 = pneg %p753
      $region122: #{custom_clip_forward.1} parent=5 // pred_check_branch
        %756 = sbr.rel (%p754) target = $region124
      $region123: #{custom_clip_forward.1} parent=5 // pred_region
        // Predicated region
        $region125: #{custom_clip_forward.1} parent=123 // pred_check
          %p757 = pneg %p58
        $region126: #{custom_clip_forward.1} parent=123 // pred_check_branch
          %759 = sbr.rel (%p757) target = $region128
        $region127: #{custom_clip_forward.1} parent=123 // pred_region
          %p760 = scmp.lt.s32.totalorder %s38, 1
          %s761 = scalar_select %p760, %s38, 1
          %s762 = smul.addr %s761, 8
          %s763 = scalar_lea.vmem %s0, %s762
        $region128: #{custom_clip_forward.1} parent=123 // pred_fallthru
          _
      $region124: #{custom_clip_forward.1} parent=5 // pred_fallthru
        _
      %p764 = scmp.le.s32.totalorder 1, %s38
      %p765 = scmp.lt.s32.totalorder %s38, 3
      %p766 = pnand %p764, %p765
      %p767 = pneg %p766
      // Predicated region
      $region129: #{custom_clip_forward.1} parent=5 // pred_check
        _
      $region130: #{custom_clip_forward.1} parent=5 // pred_check_branch
        %769 = sbr.rel (%p766) target = $region132
      $region131: #{custom_clip_forward.1} parent=5 // pred_region
        %s770 = ssub.s32 %s38, 1
        %p771 = scmp.lt.s32.totalorder %s43, 1
        %s772 = scalar_select %p771, %s43, 1
        %s773 = smul.addr %s772, 8
        %s774 = scalar_lea.vmem %s0, %s773
        %p775 = pneg %p64
        %p776 = pneg %p61
        %p777 = pneg %p85
        %p778 = pneg %p82
        %p779 = pneg %p106
        %p780 = pneg %p103
        %p781 = pneg %p127
        %p782 = pneg %p124
        %p783 = pneg %p148
        %p784 = pneg %p145
        %p785 = pneg %p169
        %p786 = pneg %p166
        %p787 = pneg %p190
        %p788 = pneg %p187
        %p789 = pneg %p211
        %p790 = pneg %p208
        %p791 = pneg %p232
        %p792 = pneg %p229
        %p793 = pneg %p253
        %p794 = pneg %p250
        %p795 = pneg %p274
        %p796 = pneg %p271
        %p797 = pneg %p295
        %p798 = pneg %p292
        %p799 = pneg %p316
        %p800 = pneg %p313
        %p801 = pneg %p337
        %p802 = pneg %p334
        %p803 = pneg %p358
        %p804 = pneg %p355
        %p805 = pneg %p379
        %p806 = pneg %p376
        %p807 = pneg %p400
        %p808 = pneg %p397
        %p809 = pneg %p421
        %p810 = pneg %p418
        %p811 = pneg %p442
        %p812 = pneg %p439
        %p813 = pneg %p463
        %p814 = pneg %p460
        %p815 = pneg %p484
        %p816 = pneg %p481
        %p817 = pneg %p505
        %p818 = pneg %p502
        %p819 = pneg %p526
        %p820 = pneg %p523
        %p821 = pneg %p547
        %p822 = pneg %p544
        %p823 = pneg %p568
        %p824 = pneg %p565
        %p825 = pneg %p589
        %p826 = pneg %p586
        %p827 = pneg %p610
        %p828 = pneg %p607
        %p829 = pneg %p631
        %p830 = pneg %p628
        %p831 = pneg %p657
        %p832 = pneg %p654
        %s833 = sand.u32 %s644, 1
        %s834 = scalar_lea.sflag [#allocation4], %s833
        %s835 = sand.u32 %s644, 1
        %s836 = scalar_lea.vmem [#allocation3], %s835
        %p837 = scmp.lt.s32.totalorder %s43, 1
        %s838 = scalar_select %p837, %s43, 1
        %s839 = smul.addr %s838, 8
        %s840 = scalar_lea.vmem %s0, %s839
        %v842 = vld [vmem:[%s840] sm:$0xff]
        %v844 = vperm.slane %v842, 0
        %v845 = vperm.slane %v842, 1
        %v846 = vperm.slane %v842, 2
        %v847 = vperm.slane %v842, 3
        %v848 = vperm.slane %v842, 4
        %v849 = vperm.slane %v842, 5
        %v850 = vperm.slane %v842, 6
        %v851 = vperm.slane %v842, 7
        %v860 = vpack.c.bf16 %v844, %v844
        %v861 = vpack.c.bf16 %v845, %v845
        %v862 = vpack.c.bf16 %v846, %v846
        %v863 = vpack.c.bf16 %v847, %v847
        %v864 = vpack.c.bf16 %v848, %v848
        %v865 = vpack.c.bf16 %v849, %v849
        %v866 = vpack.c.bf16 %v850, %v850
        %v867 = vpack.c.bf16 %v851, %v851
        %v868 = vld [vmem:[%s2] sm:$0xf]
        %v869 = vld [vmem:[%s2 + $0x4] sm:$0xf]
        %v870 = vld [vmem:[%s2 + $0x8] sm:$0xf]
        %v871 = vld [vmem:[%s2 + $0xc] sm:$0xf]
        %v872 = vld [vmem:[%s2 + $0x10] sm:$0xf]
        %v873 = vld [vmem:[%s2 + $0x14] sm:$0xf]
        %v874 = vld [vmem:[%s2 + $0x18] sm:$0xf]
        %v875 = vld [vmem:[%s2 + $0x1c] sm:$0xf]
        %v876 = vld [vmem:[%s2 + $0x20] sm:$0xf]
        %v877 = vld [vmem:[%s2 + $0x24] sm:$0xf]
        %v878 = vld [vmem:[%s2 + $0x28] sm:$0xf]
        %v879 = vld [vmem:[%s2 + $0x2c] sm:$0xf]
        %v880 = vld [vmem:[%s2 + $0x30] sm:$0xf]
        %v881 = vld [vmem:[%s2 + $0x34] sm:$0xf]
        %v882 = vld [vmem:[%s2 + $0x38] sm:$0xf]
        %v883 = vld [vmem:[%s2 + $0x3c] sm:$0xf]
        %v884 = vld [vmem:[%s2 + $0x40] sm:$0xf]
        %v885 = vld [vmem:[%s2 + $0x44] sm:$0xf]
        %v886 = vld [vmem:[%s2 + $0x48] sm:$0xf]
        %v887 = vld [vmem:[%s2 + $0x4c] sm:$0xf]
        %v888 = vld [vmem:[%s2 + $0x50] sm:$0xf]
        %v889 = vld [vmem:[%s2 + $0x54] sm:$0xf]
        %v890 = vld [vmem:[%s2 + $0x58] sm:$0xf]
        %v891 = vld [vmem:[%s2 + $0x5c] sm:$0xf]
        %v892 = vld [vmem:[%s2 + $0x60] sm:$0xf]
        %v893 = vld [vmem:[%s2 + $0x64] sm:$0xf]
        %v894 = vld [vmem:[%s2 + $0x68] sm:$0xf]
        %v895 = vld [vmem:[%s2 + $0x6c] sm:$0xf]
        %v896 = vld [vmem:[%s2 + $0x70] sm:$0xf]
        %v897 = vld [vmem:[%s2 + $0x74] sm:$0xf]
        %v898 = vld [vmem:[%s2 + $0x78] sm:$0xf]
        %v899 = vld [vmem:[%s2 + $0x7c] sm:$0xf]
        %v900 = vld [vmem:[%s2 + $0x80] sm:$0xf]
        %v901 = vld [vmem:[%s2 + $0x84] sm:$0xf]
        %v902 = vld [vmem:[%s2 + $0x88] sm:$0xf]
        %v903 = vld [vmem:[%s2 + $0x8c] sm:$0xf]
        %v904 = vld [vmem:[%s2 + $0x90] sm:$0xf]
        %v905 = vld [vmem:[%s2 + $0x94] sm:$0xf]
        %v906 = vld [vmem:[%s2 + $0x98] sm:$0xf]
        %v907 = vld [vmem:[%s2 + $0x9c] sm:$0xf]
        %v908 = vld [vmem:[%s2 + $0xa0] sm:$0xf]
        %v909 = vld [vmem:[%s2 + $0xa4] sm:$0xf]
        %v910 = vld [vmem:[%s2 + $0xa8] sm:$0xf]
        %v911 = vld [vmem:[%s2 + $0xac] sm:$0xf]
        %v912 = vld [vmem:[%s2 + $0xb0] sm:$0xf]
        %v913 = vld [vmem:[%s2 + $0xb4] sm:$0xf]
        %v914 = vld [vmem:[%s2 + $0xb8] sm:$0xf]
        %v915 = vld [vmem:[%s2 + $0xbc] sm:$0xf]
        %v916 = vld [vmem:[%s2 + $0xc0] sm:$0xf]
        %v917 = vld [vmem:[%s2 + $0xc4] sm:$0xf]
        %v918 = vld [vmem:[%s2 + $0xc8] sm:$0xf]
        %v919 = vld [vmem:[%s2 + $0xcc] sm:$0xf]
        %v920 = vld [vmem:[%s2 + $0xd0] sm:$0xf]
        %v921 = vld [vmem:[%s2 + $0xd4] sm:$0xf]
        %v922 = vld [vmem:[%s2 + $0xd8] sm:$0xf]
        %v923 = vld [vmem:[%s2 + $0xdc] sm:$0xf]
        %v924 = vld [vmem:[%s2 + $0xe0] sm:$0xf]
        %v925 = vld [vmem:[%s2 + $0xe4] sm:$0xf]
        %v926 = vld [vmem:[%s2 + $0xe8] sm:$0xf]
        %v927 = vld [vmem:[%s2 + $0xec] sm:$0xf]
        %v928 = vld [vmem:[%s2 + $0xf0] sm:$0xf]
        %v929 = vld [vmem:[%s2 + $0xf4] sm:$0xf]
        %v930 = vld [vmem:[%s2 + $0xf8] sm:$0xf]
        %v931 = vld [vmem:[%s2 + $0xfc] sm:$0xf]
        %v932 = vld [vmem:[%s2 + $0x100] sm:$0xf]
        %v933 = vld [vmem:[%s2 + $0x104] sm:$0xf]
        %v934 = vld [vmem:[%s2 + $0x108] sm:$0xf]
        %v935 = vld [vmem:[%s2 + $0x10c] sm:$0xf]
        %v936 = vld [vmem:[%s2 + $0x110] sm:$0xf]
        %v937 = vld [vmem:[%s2 + $0x114] sm:$0xf]
        %v938 = vld [vmem:[%s2 + $0x118] sm:$0xf]
        %v939 = vld [vmem:[%s2 + $0x11c] sm:$0xf]
        %v940 = vld [vmem:[%s2 + $0x120] sm:$0xf]
        %v941 = vld [vmem:[%s2 + $0x124] sm:$0xf]
        %v942 = vld [vmem:[%s2 + $0x128] sm:$0xf]
        %v943 = vld [vmem:[%s2 + $0x12c] sm:$0xf]
        %v944 = vld [vmem:[%s2 + $0x130] sm:$0xf]
        %v945 = vld [vmem:[%s2 + $0x134] sm:$0xf]
        %v946 = vld [vmem:[%s2 + $0x138] sm:$0xf]
        %v947 = vld [vmem:[%s2 + $0x13c] sm:$0xf]
        %v948 = vld [vmem:[%s2 + $0x140] sm:$0xf]
        %v949 = vld [vmem:[%s2 + $0x144] sm:$0xf]
        %v950 = vld [vmem:[%s2 + $0x148] sm:$0xf]
        %v951 = vld [vmem:[%s2 + $0x14c] sm:$0xf]
        %v952 = vld [vmem:[%s2 + $0x150] sm:$0xf]
        %v953 = vld [vmem:[%s2 + $0x154] sm:$0xf]
        %v954 = vld [vmem:[%s2 + $0x158] sm:$0xf]
        %v955 = vld [vmem:[%s2 + $0x15c] sm:$0xf]
        %v956 = vld [vmem:[%s2 + $0x160] sm:$0xf]
        %v957 = vld [vmem:[%s2 + $0x164] sm:$0xf]
        %v958 = vld [vmem:[%s2 + $0x168] sm:$0xf]
        %v959 = vld [vmem:[%s2 + $0x16c] sm:$0xf]
        %v960 = vld [vmem:[%s2 + $0x170] sm:$0xf]
        %v961 = vld [vmem:[%s2 + $0x174] sm:$0xf]
        %v962 = vld [vmem:[%s2 + $0x178] sm:$0xf]
        %v963 = vld [vmem:[%s2 + $0x17c] sm:$0xf]
        %v964 = vld [vmem:[%s2 + $0x180] sm:$0xf]
        %v965 = vld [vmem:[%s2 + $0x184] sm:$0xf]
        %v966 = vld [vmem:[%s2 + $0x188] sm:$0xf]
        %v967 = vld [vmem:[%s2 + $0x18c] sm:$0xf]
        %v968 = vld [vmem:[%s2 + $0x190] sm:$0xf]
        %v969 = vld [vmem:[%s2 + $0x194] sm:$0xf]
        %v970 = vld [vmem:[%s2 + $0x198] sm:$0xf]
        %v971 = vld [vmem:[%s2 + $0x19c] sm:$0xf]
        %v972 = vld [vmem:[%s2 + $0x1a0] sm:$0xf]
        %v973 = vld [vmem:[%s2 + $0x1a4] sm:$0xf]
        %v974 = vld [vmem:[%s2 + $0x1a8] sm:$0xf]
        %v975 = vld [vmem:[%s2 + $0x1ac] sm:$0xf]
        %v976 = vld [vmem:[%s2 + $0x1b0] sm:$0xf]
        %v977 = vld [vmem:[%s2 + $0x1b4] sm:$0xf]
        %v978 = vld [vmem:[%s2 + $0x1b8] sm:$0xf]
        %v979 = vld [vmem:[%s2 + $0x1bc] sm:$0xf]
        %v980 = vld [vmem:[%s2 + $0x1c0] sm:$0xf]
        %v981 = vld [vmem:[%s2 + $0x1c4] sm:$0xf]
        %v982 = vld [vmem:[%s2 + $0x1c8] sm:$0xf]
        %v983 = vld [vmem:[%s2 + $0x1cc] sm:$0xf]
        %v984 = vld [vmem:[%s2 + $0x1d0] sm:$0xf]
        %v985 = vld [vmem:[%s2 + $0x1d4] sm:$0xf]
        %v986 = vld [vmem:[%s2 + $0x1d8] sm:$0xf]
        %v987 = vld [vmem:[%s2 + $0x1dc] sm:$0xf]
        %v988 = vld [vmem:[%s2 + $0x1e0] sm:$0xf]
        %v989 = vld [vmem:[%s2 + $0x1e4] sm:$0xf]
        %v990 = vld [vmem:[%s2 + $0x1e8] sm:$0xf]
        %v991 = vld [vmem:[%s2 + $0x1ec] sm:$0xf]
        %v992 = vld [vmem:[%s2 + $0x1f0] sm:$0xf]
        %v993 = vld [vmem:[%s2 + $0x1f4] sm:$0xf]
        %v994 = vld [vmem:[%s2 + $0x1f8] sm:$0xf]
        %v995 = vld [vmem:[%s2 + $0x1fc] sm:$0xf]
        %v996 = vld [vmem:[%s3] sm:$0x1]
        %v1125 = vunpack.c.l.b16 %v868
        %v1126 = vunpack.c.l.b16 %v869
        %v1127 = vunpack.c.l.b16 %v870
        %v1128 = vunpack.c.l.b16 %v871
        %v1129 = vunpack.c.l.b16 %v872
        %v1130 = vunpack.c.l.b16 %v873
        %v1131 = vunpack.c.l.b16 %v874
        %v1132 = vunpack.c.l.b16 %v875
        %v1133 = vunpack.c.l.b16 %v876
        %v1134 = vunpack.c.l.b16 %v877
        %v1135 = vunpack.c.l.b16 %v878
        %v1136 = vunpack.c.l.b16 %v879
        %v1137 = vunpack.c.l.b16 %v880
        %v1138 = vunpack.c.l.b16 %v881
        %v1139 = vunpack.c.l.b16 %v882
        %v1140 = vunpack.c.l.b16 %v883
        %v1141 = vunpack.c.l.b16 %v884
        %v1142 = vunpack.c.l.b16 %v885
        %v1143 = vunpack.c.l.b16 %v886
        %v1144 = vunpack.c.l.b16 %v887
        %v1145 = vunpack.c.l.b16 %v888
        %v1146 = vunpack.c.l.b16 %v889
        %v1147 = vunpack.c.l.b16 %v890
        %v1148 = vunpack.c.l.b16 %v891
        %v1149 = vunpack.c.l.b16 %v892
        %v1150 = vunpack.c.l.b16 %v893
        %v1151 = vunpack.c.l.b16 %v894
        %v1152 = vunpack.c.l.b16 %v895
        %v1153 = vunpack.c.l.b16 %v896
        %v1154 = vunpack.c.l.b16 %v897
        %v1155 = vunpack.c.l.b16 %v898
        %v1156 = vunpack.c.l.b16 %v899
        %v1157 = vunpack.c.l.b16 %v900
        %v1158 = vunpack.c.l.b16 %v901
        %v1159 = vunpack.c.l.b16 %v902
        %v1160 = vunpack.c.l.b16 %v903
        %v1161 = vunpack.c.l.b16 %v904
        %v1162 = vunpack.c.l.b16 %v905
        %v1163 = vunpack.c.l.b16 %v906
        %v1164 = vunpack.c.l.b16 %v907
        %v1165 = vunpack.c.l.b16 %v908
        %v1166 = vunpack.c.l.b16 %v909
        %v1167 = vunpack.c.l.b16 %v910
        %v1168 = vunpack.c.l.b16 %v911
        %v1169 = vunpack.c.l.b16 %v912
        %v1170 = vunpack.c.l.b16 %v913
        %v1171 = vunpack.c.l.b16 %v914
        %v1172 = vunpack.c.l.b16 %v915
        %v1173 = vunpack.c.l.b16 %v916
        %v1174 = vunpack.c.l.b16 %v917
        %v1175 = vunpack.c.l.b16 %v918
        %v1176 = vunpack.c.l.b16 %v919
        %v1177 = vunpack.c.l.b16 %v920
        %v1178 = vunpack.c.l.b16 %v921
        %v1179 = vunpack.c.l.b16 %v922
        %v1180 = vunpack.c.l.b16 %v923
        %v1181 = vunpack.c.l.b16 %v924
        %v1182 = vunpack.c.l.b16 %v925
        %v1183 = vunpack.c.l.b16 %v926
        %v1184 = vunpack.c.l.b16 %v927
        %v1185 = vunpack.c.l.b16 %v928
        %v1186 = vunpack.c.l.b16 %v929
        %v1187 = vunpack.c.l.b16 %v930
        %v1188 = vunpack.c.l.b16 %v931
        %v1189 = vunpack.c.l.b16 %v932
        %v1190 = vunpack.c.l.b16 %v933
        %v1191 = vunpack.c.l.b16 %v934
        %v1192 = vunpack.c.l.b16 %v935
        %v1193 = vunpack.c.l.b16 %v936
        %v1194 = vunpack.c.l.b16 %v937
        %v1195 = vunpack.c.l.b16 %v938
        %v1196 = vunpack.c.l.b16 %v939
        %v1197 = vunpack.c.l.b16 %v940
        %v1198 = vunpack.c.l.b16 %v941
        %v1199 = vunpack.c.l.b16 %v942
        %v1200 = vunpack.c.l.b16 %v943
        %v1201 = vunpack.c.l.b16 %v944
        %v1202 = vunpack.c.l.b16 %v945
        %v1203 = vunpack.c.l.b16 %v946
        %v1204 = vunpack.c.l.b16 %v947
        %v1205 = vunpack.c.l.b16 %v948
        %v1206 = vunpack.c.l.b16 %v949
        %v1207 = vunpack.c.l.b16 %v950
        %v1208 = vunpack.c.l.b16 %v951
        %v1209 = vunpack.c.l.b16 %v952
        %v1210 = vunpack.c.l.b16 %v953
        %v1211 = vunpack.c.l.b16 %v954
        %v1212 = vunpack.c.l.b16 %v955
        %v1213 = vunpack.c.l.b16 %v956
        %v1214 = vunpack.c.l.b16 %v957
        %v1215 = vunpack.c.l.b16 %v958
        %v1216 = vunpack.c.l.b16 %v959
        %v1217 = vunpack.c.l.b16 %v960
        %v1218 = vunpack.c.l.b16 %v961
        %v1219 = vunpack.c.l.b16 %v962
        %v1220 = vunpack.c.l.b16 %v963
        %v1221 = vunpack.c.l.b16 %v964
        %v1222 = vunpack.c.l.b16 %v965
        %v1223 = vunpack.c.l.b16 %v966
        %v1224 = vunpack.c.l.b16 %v967
        %v1225 = vunpack.c.l.b16 %v968
        %v1226 = vunpack.c.l.b16 %v969
        %v1227 = vunpack.c.l.b16 %v970
        %v1228 = vunpack.c.l.b16 %v971
        %v1229 = vunpack.c.l.b16 %v972
        %v1230 = vunpack.c.l.b16 %v973
        %v1231 = vunpack.c.l.b16 %v974
        %v1232 = vunpack.c.l.b16 %v975
        %v1233 = vunpack.c.l.b16 %v976
        %v1234 = vunpack.c.l.b16 %v977
        %v1235 = vunpack.c.l.b16 %v978
        %v1236 = vunpack.c.l.b16 %v979
        %v1237 = vunpack.c.l.b16 %v980
        %v1238 = vunpack.c.l.b16 %v981
        %v1239 = vunpack.c.l.b16 %v982
        %v1240 = vunpack.c.l.b16 %v983
        %v1241 = vunpack.c.l.b16 %v984
        %v1242 = vunpack.c.l.b16 %v985
        %v1243 = vunpack.c.l.b16 %v986
        %v1244 = vunpack.c.l.b16 %v987
        %v1245 = vunpack.c.l.b16 %v988
        %v1246 = vunpack.c.l.b16 %v989
        %v1247 = vunpack.c.l.b16 %v990
        %v1248 = vunpack.c.l.b16 %v991
        %v1249 = vunpack.c.l.b16 %v992
        %v1250 = vunpack.c.l.b16 %v993
        %v1251 = vunpack.c.l.b16 %v994
        %v1252 = vunpack.c.l.b16 %v995
        %v1253 = vpack.c.b16 %v1126, %v1125
        %v1254 = vpack.c.b16 %v1128, %v1127
        %v1255 = vpack.c.b16 %v1130, %v1129
        %v1256 = vpack.c.b16 %v1132, %v1131
        %v1257 = vpack.c.b16 %v1134, %v1133
        %v1258 = vpack.c.b16 %v1136, %v1135
        %v1259 = vpack.c.b16 %v1138, %v1137
        %v1260 = vpack.c.b16 %v1140, %v1139
        %v1261 = vpack.c.b16 %v1142, %v1141
        %v1262 = vpack.c.b16 %v1144, %v1143
        %v1263 = vpack.c.b16 %v1146, %v1145
        %v1264 = vpack.c.b16 %v1148, %v1147
        %v1265 = vpack.c.b16 %v1150, %v1149
        %v1266 = vpack.c.b16 %v1152, %v1151
        %v1267 = vpack.c.b16 %v1154, %v1153
        %v1268 = vpack.c.b16 %v1156, %v1155
        %v1269 = vpack.c.b16 %v1158, %v1157
        %v1270 = vpack.c.b16 %v1160, %v1159
        %v1271 = vpack.c.b16 %v1162, %v1161
        %v1272 = vpack.c.b16 %v1164, %v1163
        %v1273 = vpack.c.b16 %v1166, %v1165
        %v1274 = vpack.c.b16 %v1168, %v1167
        %v1275 = vpack.c.b16 %v1170, %v1169
        %v1276 = vpack.c.b16 %v1172, %v1171
        %v1277 = vpack.c.b16 %v1174, %v1173
        %v1278 = vpack.c.b16 %v1176, %v1175
        %v1279 = vpack.c.b16 %v1178, %v1177
        %v1280 = vpack.c.b16 %v1180, %v1179
        %v1281 = vpack.c.b16 %v1182, %v1181
        %v1282 = vpack.c.b16 %v1184, %v1183
        %v1283 = vpack.c.b16 %v1186, %v1185
        %v1284 = vpack.c.b16 %v1188, %v1187
        %v1285 = vpack.c.b16 %v1190, %v1189
        %v1286 = vpack.c.b16 %v1192, %v1191
        %v1287 = vpack.c.b16 %v1194, %v1193
        %v1288 = vpack.c.b16 %v1196, %v1195
        %v1289 = vpack.c.b16 %v1198, %v1197
        %v1290 = vpack.c.b16 %v1200, %v1199
        %v1291 = vpack.c.b16 %v1202, %v1201
        %v1292 = vpack.c.b16 %v1204, %v1203
        %v1293 = vpack.c.b16 %v1206, %v1205
        %v1294 = vpack.c.b16 %v1208, %v1207
        %v1295 = vpack.c.b16 %v1210, %v1209
        %v1296 = vpack.c.b16 %v1212, %v1211
        %v1297 = vpack.c.b16 %v1214, %v1213
        %v1298 = vpack.c.b16 %v1216, %v1215
        %v1299 = vpack.c.b16 %v1218, %v1217
        %v1300 = vpack.c.b16 %v1220, %v1219
        %v1301 = vpack.c.b16 %v1222, %v1221
        %v1302 = vpack.c.b16 %v1224, %v1223
        %v1303 = vpack.c.b16 %v1226, %v1225
        %v1304 = vpack.c.b16 %v1228, %v1227
        %v1305 = vpack.c.b16 %v1230, %v1229
        %v1306 = vpack.c.b16 %v1232, %v1231
        %v1307 = vpack.c.b16 %v1234, %v1233
        %v1308 = vpack.c.b16 %v1236, %v1235
        %v1309 = vpack.c.b16 %v1238, %v1237
        %v1310 = vpack.c.b16 %v1240, %v1239
        %v1311 = vpack.c.b16 %v1242, %v1241
        %v1312 = vpack.c.b16 %v1244, %v1243
        %v1313 = vpack.c.b16 %v1246, %v1245
        %v1314 = vpack.c.b16 %v1248, %v1247
        %v1315 = vpack.c.b16 %v1250, %v1249
        %v1316 = vpack.c.b16 %v1252, %v1251
        %1381 = vmatpush.bf16.msra.mxu0 %v1260
        %1382 = vmatpush.bf16.msra.mxu0 %v1259
        %1383 = vmatpush.bf16.msra.mxu0 %v1258
        %1384 = vmatpush.bf16.msra.mxu0 %v1257
        %1385 = vmatpush.bf16.msra.mxu0 %v1256
        %1386 = vmatpush.bf16.msra.mxu0 %v1255
        %1387 = vmatpush.bf16.msra.mxu0 %v1254
        %1388 = vmatpush.bf16.msra.mxu0 %v1253
        %1389 = vmatmul.bf16.gmra.mxu0 %v860
        %v1390 = vpop.f32.mrf.mxu0
        %v1391 = vadd.f32 %v996, %v1390
        %v1392 = vpop.f32.mrf.mxu0
        %1393 = vdwg.mxu0
        %1394 = vmatpush.bf16.msra.mxu0 %v1268
        %1395 = vmatpush.bf16.msra.mxu0 %v1267
        %1396 = vmatpush.bf16.msra.mxu0 %v1266
        %1397 = vmatpush.bf16.msra.mxu0 %v1265
        %1398 = vmatpush.bf16.msra.mxu0 %v1264
        %1399 = vmatpush.bf16.msra.mxu0 %v1263
        %1400 = vmatpush.bf16.msra.mxu0 %v1262
        %1401 = vmatpush.bf16.msra.mxu0 %v1261
        %1402 = vmatmul.bf16.gmra.mxu0 %v861
        %v1403 = vpop.f32.mrf.mxu0
        %v1404 = vadd.f32 %v1391, %v1403
        %v1405 = vpop.f32.mrf.mxu0
        %1406 = vdwg.mxu0
        %1407 = vmatpush.bf16.msra.mxu0 %v1276
        %1408 = vmatpush.bf16.msra.mxu0 %v1275
        %1409 = vmatpush.bf16.msra.mxu0 %v1274
        %1410 = vmatpush.bf16.msra.mxu0 %v1273
        %1411 = vmatpush.bf16.msra.mxu0 %v1272
        %1412 = vmatpush.bf16.msra.mxu0 %v1271
        %1413 = vmatpush.bf16.msra.mxu0 %v1270
        %1414 = vmatpush.bf16.msra.mxu0 %v1269
        %1415 = vmatmul.bf16.gmra.mxu0 %v862
        %v1416 = vpop.f32.mrf.mxu0
        %v1417 = vadd.f32 %v1404, %v1416
        %v1418 = vpop.f32.mrf.mxu0
        %1419 = vdwg.mxu0
        %1420 = vmatpush.bf16.msra.mxu0 %v1284
        %1421 = vmatpush.bf16.msra.mxu0 %v1283
        %1422 = vmatpush.bf16.msra.mxu0 %v1282
        %1423 = vmatpush.bf16.msra.mxu0 %v1281
        %1424 = vmatpush.bf16.msra.mxu0 %v1280
        %1425 = vmatpush.bf16.msra.mxu0 %v1279
        %1426 = vmatpush.bf16.msra.mxu0 %v1278
        %1427 = vmatpush.bf16.msra.mxu0 %v1277
        %1428 = vmatmul.bf16.gmra.mxu0 %v863
        %v1429 = vpop.f32.mrf.mxu0
        %v1430 = vadd.f32 %v1417, %v1429
        %v1431 = vpop.f32.mrf.mxu0
        %1432 = vdwg.mxu0
        %1433 = vmatpush.bf16.msra.mxu0 %v1292
        %1434 = vmatpush.bf16.msra.mxu0 %v1291
        %1435 = vmatpush.bf16.msra.mxu0 %v1290
        %1436 = vmatpush.bf16.msra.mxu0 %v1289
        %1437 = vmatpush.bf16.msra.mxu0 %v1288
        %1438 = vmatpush.bf16.msra.mxu0 %v1287
        %1439 = vmatpush.bf16.msra.mxu0 %v1286
        %1440 = vmatpush.bf16.msra.mxu0 %v1285
        %1441 = vmatmul.bf16.gmra.mxu0 %v864
        %v1442 = vpop.f32.mrf.mxu0
        %v1443 = vadd.f32 %v1430, %v1442
        %v1444 = vpop.f32.mrf.mxu0
        %1445 = vdwg.mxu0
        %1446 = vmatpush.bf16.msra.mxu0 %v1300
        %1447 = vmatpush.bf16.msra.mxu0 %v1299
        %1448 = vmatpush.bf16.msra.mxu0 %v1298
        %1449 = vmatpush.bf16.msra.mxu0 %v1297
        %1450 = vmatpush.bf16.msra.mxu0 %v1296
        %1451 = vmatpush.bf16.msra.mxu0 %v1295
        %1452 = vmatpush.bf16.msra.mxu0 %v1294
        %1453 = vmatpush.bf16.msra.mxu0 %v1293
        %1454 = vmatmul.bf16.gmra.mxu0 %v865
        %v1455 = vpop.f32.mrf.mxu0
        %v1456 = vadd.f32 %v1443, %v1455
        %v1457 = vpop.f32.mrf.mxu0
        %1458 = vdwg.mxu0
        %1459 = vmatpush.bf16.msra.mxu0 %v1308
        %1460 = vmatpush.bf16.msra.mxu0 %v1307
        %1461 = vmatpush.bf16.msra.mxu0 %v1306
        %1462 = vmatpush.bf16.msra.mxu0 %v1305
        %1463 = vmatpush.bf16.msra.mxu0 %v1304
        %1464 = vmatpush.bf16.msra.mxu0 %v1303
        %1465 = vmatpush.bf16.msra.mxu0 %v1302
        %1466 = vmatpush.bf16.msra.mxu0 %v1301
        %1467 = vmatmul.bf16.gmra.mxu0 %v866
        %v1468 = vpop.f32.mrf.mxu0
        %v1469 = vadd.f32 %v1456, %v1468
        %v1470 = vpop.f32.mrf.mxu0
        %1471 = vdwg.mxu0
        %1472 = vmatpush.bf16.msra.mxu0 %v1316
        %1473 = vmatpush.bf16.msra.mxu0 %v1315
        %1474 = vmatpush.bf16.msra.mxu0 %v1314
        %1475 = vmatpush.bf16.msra.mxu0 %v1313
        %1476 = vmatpush.bf16.msra.mxu0 %v1312
        %1477 = vmatpush.bf16.msra.mxu0 %v1311
        %1478 = vmatpush.bf16.msra.mxu0 %v1310
        %1479 = vmatpush.bf16.msra.mxu0 %v1309
        %1480 = vmatmul.bf16.gmra.mxu0 %v867
        %v1481 = vpop.f32.mrf.mxu0
        %v1482 = vadd.f32 %v1469, %v1481
        %v1483 = vpop.f32.mrf.mxu0
        %1484 = vdwg.mxu0
        %v1485 = vmul.f32 %v1482, %v1482
        %vm1486 = vcmask 253952
        %v1487 = vsel %vm1486, %v1485, 0.0
        %1488 = vadd.xlane.f32.xlu0 %v1487
        %v1489 = vpop.xlane.xlu0 %1488
        %v1490 = vadd.f32 %v1489, 1e-12
        %v1491 = vrsqrt.pop %v1490
        %v1492 = vmul.f32 %v1491, %v1490
        %v1493 = vmul.f32 %v1492, %v1491
        %v1494 = vmul.f32 0.5, %v1493
        %v1495 = vsub.f32 1.5, %v1494
        %v1496 = vmul.f32 %v1491, %v1495
        %vm1497 = vweird.f32 %v1490
        %vm1498 = vweird.f32 %v1491
        %vm1499 = vmor %vm1497, %vm1498
        %v1500 = vsel %vm1499, %v1491, %v1496
        %v1501 = vmul.f32 %v1482, %v1500
        %v1502 = vld [vmem:[%s4] sm:$0xff]
        %v1503 = vld [vmem:[%s4 + $0x8] sm:$0xff]
        %v1504 = vld [vmem:[%s4 + $0x10] sm:$0xff]
        %v1505 = vld [vmem:[%s4 + $0x18] sm:$0xff]
        %v1506 = vld [vmem:[%s5] sm:$0x1]
        %vm1507 = vcmask 261120
        %v1509 = vsel %vm1507, %v1501, 0
        %1511 = vmatpush.msra.mxu0 0.0
        %1512 = vmatpush.msra.mxu0 0.0
        %1513 = vmatpush.msra.mxu0 0.0
        %1514 = vmatpush.msra.mxu0 0.0
        %1515 = vmatpush.msra.mxu0 0.0
        %1516 = vmatpush.msra.mxu0 0.0
        %1517 = vmatpush.msra.mxu0 0.0
        %1518 = vmatpush.msra.mxu0 0.0
        %1519 = vmatpush.msra.mxu0 0.0
        %1520 = vmatpush.msra.mxu0 0.0
        %1521 = vmatpush.msra.mxu0 0.0
        %1522 = vmatpush.msra.mxu0 0.0
        %1523 = vmatpush.msra.mxu0 %v1505
        %1524 = vmatpush.msra.mxu0 %v1504
        %1525 = vmatpush.msra.mxu0 %v1503
        %1526 = vmatpush.msra.mxu0 %v1502
        %1527 = vmatmul.f32.gmra.mxu0 %v1509
        %v1528 = vpop.f32.mrf.mxu0
        %v1529 = vadd.f32 %v1506, %v1528
        %1530 = vdwg.mxu0
        %v1531 = vmax.f32 %v1529, 0.0
        %v1532 = vld [vmem:[%s6] sm:$0x3]
        %v1533 = vld [vmem:[%s7] sm:$0x1]
        %vm1534 = vcmask 15360
        %v1536 = vsel %vm1534, %v1531, 0
        %vm1538 = vcmask 1041408
        %v1540 = vsel %vm1538, %v1532, 0
        %1542 = vmatpush.msra.mxu0 0.0
        %1543 = vmatpush.msra.mxu0 0.0
        %1544 = vmatpush.msra.mxu0 0.0
        %1545 = vmatpush.msra.mxu0 0.0
        %1546 = vmatpush.msra.mxu0 0.0
        %1547 = vmatpush.msra.mxu0 0.0
        %1548 = vmatpush.msra.mxu0 0.0
        %1549 = vmatpush.msra.mxu0 0.0
        %1550 = vmatpush.msra.mxu0 0.0
        %1551 = vmatpush.msra.mxu0 0.0
        %1552 = vmatpush.msra.mxu0 0.0
        %1553 = vmatpush.msra.mxu0 0.0
        %1554 = vmatpush.msra.mxu0 0.0
        %1555 = vmatpush.msra.mxu0 0.0
        %1556 = vmatpush.msra.mxu0 0.0
        %1557 = vmatpush.msra.mxu0 %v1540
        %1558 = vmatmul.f32.gmra.mxu0 %v1536
        %v1559 = vpop.f32.mrf.mxu0
        %v1560 = vadd.f32 %v1533, %v1559
        %1561 = vdwg.mxu0
        %v1562 = vlaneseq
        %v1563 = vshrl.u32 %v1562, 7
        %v1564 = vadd.s32 %v1563, 8
        %vm1565 = vcmp.ge.s32.totalorder %v1563, 7
        %vm1566 = vcmp.ge.s32.totalorder %v1564, 7
        %vm1567 = vcmp.lt.s32.totalorder %v1563, 11
        %vm1568 = vcmp.lt.s32.totalorder %v1564, 11
        %vm1569 = vmand %vm1565, %vm1567
        %vm1570 = vmand %vm1566, %vm1568
        %v1571 = vsel %vm1569, 1, 0
        %v1572 = vsel %vm1570, 1, 0
        %v1573 = vcvt.s32.f32 %v1571
        %v1574 = vcvt.s32.f32 %v1572
        %v1575 = vld [vmem:[%s1] sm:$0xff]
        %v1576 = vld [vmem:[%s1 + $0x8] sm:$0xff]
        %v1577 = vld [vmem:[%s1 + $0x10] sm:$0xff]
        %v1578 = vld [vmem:[%s1 + $0x18] sm:$0xff]
        %v1579 = vld [vmem:[%s1 + $0x20] sm:$0xff]
        %v1580 = vld [vmem:[%s1 + $0x28] sm:$0xff]
        %v1581 = vperm.slane %v1560, 0
        %v1582 = vmul.f32 %v1573, %v1581
        %v1583 = vmul.f32 %v1574, %v1581
        %v1584 = vadd.f32 %v1575, %v1582
        %v1585 = vadd.f32 %v1576, %v1583
        %v1586 = vadd.f32 %v1577, %v1582
        %v1587 = vadd.f32 %v1578, %v1583
        %v1588 = vadd.f32 %v1579, %v1582
        %v1589 = vadd.f32 %v1580, %v1583
        %v1590 = vsel %vm1507, %v1584, 0.0
        %1591 = vadd.xlane.f32.xlu0 %v1590
        %v1592 = vpop.xlane.xlu0 %1591
        %v1593 = vsel %vm1507, %v1585, 0.0
        %1594 = vadd.xlane.f32.xlu0 %v1593
        %v1595 = vpop.xlane.xlu0 %1594
        %v1596 = vsel %vm1507, %v1586, 0.0
        %1597 = vadd.xlane.f32.xlu0 %v1596
        %v1598 = vpop.xlane.xlu0 %1597
        %v1599 = vsel %vm1507, %v1587, 0.0
        %1600 = vadd.xlane.f32.xlu0 %v1599
        %v1601 = vpop.xlane.xlu0 %1600
        %v1602 = vsel %vm1507, %v1588, 0.0
        %1603 = vadd.xlane.f32.xlu0 %v1602
        %v1604 = vpop.xlane.xlu0 %1603
        %v1605 = vsel %vm1507, %v1589, 0.0
        %1606 = vadd.xlane.f32.xlu0 %v1605
        %v1607 = vpop.xlane.xlu0 %1606
        %v1608 = vrcp.pop 32.0
        %v1609 = vmul.f32 32.0, %v1608
        %v1610 = vsub.f32 1.0, %v1609
        %v1611 = vmul.f32 %v1608, %v1610
        %v1612 = vadd.f32 %v1608, %v1611
        %vm1613 = vweird.f32 %v1608
        %v1614 = vsel %vm1613, %v1608, %v1612
        %v1615 = vmul.f32 %v1592, %v1614
        %v1616 = vmul.f32 %v1595, %v1614
        %v1617 = vmul.f32 %v1598, %v1614
        %v1618 = vmul.f32 %v1601, %v1614
        %v1619 = vmul.f32 %v1604, %v1614
        %v1620 = vmul.f32 %v1607, %v1614
        %v1621 = vsub.f32 %v1584, %v1615
        %v1622 = vsub.f32 %v1585, %v1616
        %v1623 = vsub.f32 %v1586, %v1617
        %v1624 = vsub.f32 %v1587, %v1618
        %v1625 = vsub.f32 %v1588, %v1619
        %v1626 = vsub.f32 %v1589, %v1620
        %v1627 = vmul.f32 %v1621, %v1621
        %v1628 = vmul.f32 %v1622, %v1622
        %v1629 = vmul.f32 %v1623, %v1623
        %v1630 = vmul.f32 %v1624, %v1624
        %v1631 = vmul.f32 %v1625, %v1625
        %v1632 = vmul.f32 %v1626, %v1626
        %v1633 = vsel %vm1507, %v1627, 0.0
        %1634 = vadd.xlane.f32.xlu0 %v1633
        %v1635 = vpop.xlane.xlu0 %1634
        %v1636 = vsel %vm1507, %v1628, 0.0
        %1637 = vadd.xlane.f32.xlu0 %v1636
        %v1638 = vpop.xlane.xlu0 %1637
        %v1639 = vsel %vm1507, %v1629, 0.0
        %1640 = vadd.xlane.f32.xlu0 %v1639
        %v1641 = vpop.xlane.xlu0 %1640
        %v1642 = vsel %vm1507, %v1630, 0.0
        %1643 = vadd.xlane.f32.xlu0 %v1642
        %v1644 = vpop.xlane.xlu0 %1643
        %v1645 = vsel %vm1507, %v1631, 0.0
        %1646 = vadd.xlane.f32.xlu0 %v1645
        %v1647 = vpop.xlane.xlu0 %1646
        %v1648 = vsel %vm1507, %v1632, 0.0
        %1649 = vadd.xlane.f32.xlu0 %v1648
        %v1650 = vpop.xlane.xlu0 %1649
        %v1651 = vmul.f32 %v1635, %v1614
        %v1652 = vmul.f32 %v1638, %v1614
        %v1653 = vmul.f32 %v1641, %v1614
        %v1654 = vmul.f32 %v1644, %v1614
        %v1655 = vmul.f32 %v1647, %v1614
        %v1656 = vmul.f32 %v1650, %v1614
        %v1657 = vadd.f32 %v1651, 1e-05
        %v1658 = vadd.f32 %v1652, 1e-05
        %v1659 = vadd.f32 %v1653, 1e-05
        %v1660 = vadd.f32 %v1654, 1e-05
        %v1661 = vadd.f32 %v1655, 1e-05
        %v1662 = vadd.f32 %v1656, 1e-05
        %v1663 = vrsqrt.pop %v1657
        %v1664 = vmul.f32 %v1663, %v1657
        %v1665 = vmul.f32 %v1664, %v1663
        %v1666 = vmul.f32 0.5, %v1665
        %v1667 = vsub.f32 1.5, %v1666
        %v1668 = vmul.f32 %v1663, %v1667
        %vm1669 = vweird.f32 %v1657
        %vm1670 = vweird.f32 %v1663
        %vm1671 = vmor %vm1669, %vm1670
        %v1672 = vsel %vm1671, %v1663, %v1668
        %v1673 = vrsqrt.pop %v1658
        %v1674 = vmul.f32 %v1673, %v1658
        %v1675 = vmul.f32 %v1674, %v1673
        %v1676 = vmul.f32 0.5, %v1675
        %v1677 = vsub.f32 1.5, %v1676
        %v1678 = vmul.f32 %v1673, %v1677
        %vm1679 = vweird.f32 %v1658
        %vm1680 = vweird.f32 %v1673
        %vm1681 = vmor %vm1679, %vm1680
        %v1682 = vsel %vm1681, %v1673, %v1678
        %v1683 = vrsqrt.pop %v1659
        %v1684 = vmul.f32 %v1683, %v1659
        %v1685 = vmul.f32 %v1684, %v1683
        %v1686 = vmul.f32 0.5, %v1685
        %v1687 = vsub.f32 1.5, %v1686
        %v1688 = vmul.f32 %v1683, %v1687
        %vm1689 = vweird.f32 %v1659
        %vm1690 = vweird.f32 %v1683
        %vm1691 = vmor %vm1689, %vm1690
        %v1692 = vsel %vm1691, %v1683, %v1688
        %v1693 = vrsqrt.pop %v1660
        %v1694 = vmul.f32 %v1693, %v1660
        %v1695 = vmul.f32 %v1694, %v1693
        %v1696 = vmul.f32 0.5, %v1695
        %v1697 = vsub.f32 1.5, %v1696
        %v1698 = vmul.f32 %v1693, %v1697
        %vm1699 = vweird.f32 %v1660
        %vm1700 = vweird.f32 %v1693
        %vm1701 = vmor %vm1699, %vm1700
        %v1702 = vsel %vm1701, %v1693, %v1698
        %v1703 = vrsqrt.pop %v1661
        %v1704 = vmul.f32 %v1703, %v1661
        %v1705 = vmul.f32 %v1704, %v1703
        %v1706 = vmul.f32 0.5, %v1705
        %v1707 = vsub.f32 1.5, %v1706
        %v1708 = vmul.f32 %v1703, %v1707
        %vm1709 = vweird.f32 %v1661
        %vm1710 = vweird.f32 %v1703
        %vm1711 = vmor %vm1709, %vm1710
        %v1712 = vsel %vm1711, %v1703, %v1708
        %v1713 = vrsqrt.pop %v1662
        %v1714 = vmul.f32 %v1713, %v1662
        %v1715 = vmul.f32 %v1714, %v1713
        %v1716 = vmul.f32 0.5, %v1715
        %v1717 = vsub.f32 1.5, %v1716
        %v1718 = vmul.f32 %v1713, %v1717
        %vm1719 = vweird.f32 %v1662
        %vm1720 = vweird.f32 %v1713
        %vm1721 = vmor %vm1719, %vm1720
        %v1722 = vsel %vm1721, %v1713, %v1718
        %v1723 = vmul.f32 %v1621, %v1672
        %v1724 = vmul.f32 %v1622, %v1682
        %v1725 = vmul.f32 %v1623, %v1692
        %v1726 = vmul.f32 %v1624, %v1702
        %v1727 = vmul.f32 %v1625, %v1712
        %v1728 = vmul.f32 %v1626, %v1722
        %v1729 = vld [vmem:[%s8] sm:$0x1]
        %v1731 = vperm.slane %v1729, 0
        %v1733 = vmul.f32 %v1723, %v1731
        %v1734 = vmul.f32 %v1724, %v1731
        %v1735 = vmul.f32 %v1725, %v1731
        %v1736 = vmul.f32 %v1726, %v1731
        %v1737 = vmul.f32 %v1727, %v1731
        %v1738 = vmul.f32 %v1728, %v1731
        %v1739 = vld [vmem:[%s9] sm:$0x1]
        %v1741 = vperm.slane %v1739, 0
        %v1743 = vadd.f32 %v1733, %v1741
        %v1744 = vadd.f32 %v1734, %v1741
        %v1745 = vadd.f32 %v1735, %v1741
        %v1746 = vadd.f32 %v1736, %v1741
        %v1747 = vadd.f32 %v1737, %v1741
        %v1748 = vadd.f32 %v1738, %v1741
        %v1749 = vpack.c.bf16 %v1744, %v1743
        %v1750 = vpack.c.bf16 %v1746, %v1745
        %v1751 = vpack.c.bf16 %v1748, %v1747
        %v1752 = vlaneseq
        %v1753 = vand.u32 %v1752, 127
        %vm1754 = vcmp.gt.s32.totalorder %v1753, %v1563
        %vm1755 = vcmp.gt.s32.totalorder %v1753, %v1564
        %v1756 = vsel %vm1754, -1e+09, 0.0
        %v1757 = vsel %vm1755, -1e+09, 0.0
        %v1758 = vld [vmem:[%s10] sm:$0xf]
        %v1759 = vld [vmem:[%s10 + $0x4] sm:$0xf]
        %v1760 = vld [vmem:[%s10 + $0x8] sm:$0xf]
        %v1761 = vld [vmem:[%s10 + $0xc] sm:$0xf]
        %v1762 = vld [vmem:[%s11] sm:$0x1]
        %v1764 = vperm.slane %v1762, 0
        %v1770 = vunpack.c.l.b16 %v1758
        %v1771 = vunpack.c.l.b16 %v1759
        %v1772 = vunpack.c.l.b16 %v1760
        %v1773 = vunpack.c.l.b16 %v1761
        %v1774 = vpack.c.b16 %v1771, %v1770
        %v1775 = vpack.c.b16 %v1773, %v1772
        %v1779 = vsel %vm1507, %v1749, 0
        %v1782 = vsel %vm1507, %v1750, 0
        %v1785 = vsel %vm1507, %v1751, 0
        %1787 = vmatpush.bf16.msra.mxu0 0
        %1788 = vmatpush.bf16.msra.mxu0 0
        %1789 = vmatpush.bf16.msra.mxu0 0
        %1790 = vmatpush.bf16.msra.mxu0 0
        %1791 = vmatpush.bf16.msra.mxu0 0
        %1792 = vmatpush.bf16.msra.mxu0 0
        %1793 = vmatpush.bf16.msra.mxu0 %v1775
        %1794 = vmatpush.bf16.msra.mxu0 %v1774
        %1795 = vmatmul.bf16.gmra.mxu0 %v1779
        %v1796 = vpop.f32.mrf.mxu0
        %v1797 = vadd.f32 %v1764, %v1796
        %v1798 = vpop.f32.mrf.mxu0
        %v1799 = vadd.f32 %v1764, %v1798
        %1800 = vmatmul.bf16.gmra.mxu0 %v1782
        %v1801 = vpop.f32.mrf.mxu0
        %v1802 = vadd.f32 %v1764, %v1801
        %v1803 = vpop.f32.mrf.mxu0
        %v1804 = vadd.f32 %v1764, %v1803
        %1805 = vmatmul.bf16.gmra.mxu0 %v1785
        %v1806 = vpop.f32.mrf.mxu0
        %v1807 = vadd.f32 %v1764, %v1806
        %v1808 = vpop.f32.mrf.mxu0
        %v1809 = vadd.f32 %v1764, %v1808
        %1810 = vdwg.mxu0
        %v1811 = vld [vmem:[%s12] sm:$0xf]
        %v1812 = vld [vmem:[%s12 + $0x4] sm:$0xf]
        %v1813 = vld [vmem:[%s12 + $0x8] sm:$0xf]
        %v1814 = vld [vmem:[%s12 + $0xc] sm:$0xf]
        %v1815 = vld [vmem:[%s13] sm:$0x1]
        %v1817 = vperm.slane %v1815, 0
        %v1823 = vunpack.c.l.b16 %v1811
        %v1824 = vunpack.c.l.b16 %v1812
        %v1825 = vunpack.c.l.b16 %v1813
        %v1826 = vunpack.c.l.b16 %v1814
        %v1827 = vpack.c.b16 %v1824, %v1823
        %v1828 = vpack.c.b16 %v1826, %v1825
        %1831 = vmatpush.bf16.msra.mxu0 0
        %1832 = vmatpush.bf16.msra.mxu0 0
        %1833 = vmatpush.bf16.msra.mxu0 0
        %1834 = vmatpush.bf16.msra.mxu0 0
        %1835 = vmatpush.bf16.msra.mxu0 0
        %1836 = vmatpush.bf16.msra.mxu0 0
        %1837 = vmatpush.bf16.msra.mxu0 %v1828
        %1838 = vmatpush.bf16.msra.mxu0 %v1827
        %1839 = vmatmul.bf16.gmra.mxu0 %v1779
        %v1840 = vpop.f32.mrf.mxu0
        %v1841 = vadd.f32 %v1817, %v1840
        %v1842 = vpop.f32.mrf.mxu0
        %v1843 = vadd.f32 %v1817, %v1842
        %1844 = vmatmul.bf16.gmra.mxu0 %v1782
        %v1845 = vpop.f32.mrf.mxu0
        %v1846 = vadd.f32 %v1817, %v1845
        %v1847 = vpop.f32.mrf.mxu0
        %v1848 = vadd.f32 %v1817, %v1847
        %1849 = vmatmul.bf16.gmra.mxu0 %v1785
        %v1850 = vpop.f32.mrf.mxu0
        %v1851 = vadd.f32 %v1817, %v1850
        %v1852 = vpop.f32.mrf.mxu0
        %v1853 = vadd.f32 %v1817, %v1852
        %1854 = vdwg.mxu0
        %v1855 = vld [vmem:[%s14] sm:$0xf]
        %v1856 = vld [vmem:[%s14 + $0x4] sm:$0xf]
        %v1857 = vld [vmem:[%s14 + $0x8] sm:$0xf]
        %v1858 = vld [vmem:[%s14 + $0xc] sm:$0xf]
        %v1859 = vld [vmem:[%s15] sm:$0x1]
        %v1861 = vperm.slane %v1859, 0
        %v1867 = vunpack.c.l.b16 %v1855
        %v1868 = vunpack.c.l.b16 %v1856
        %v1869 = vunpack.c.l.b16 %v1857
        %v1870 = vunpack.c.l.b16 %v1858
        %v1871 = vpack.c.b16 %v1868, %v1867
        %v1872 = vpack.c.b16 %v1870, %v1869
        %1875 = vmatpush.bf16.msra.mxu0 0
        %1876 = vmatpush.bf16.msra.mxu0 0
        %1877 = vmatpush.bf16.msra.mxu0 0
        %1878 = vmatpush.bf16.msra.mxu0 0
        %1879 = vmatpush.bf16.msra.mxu0 0
        %1880 = vmatpush.bf16.msra.mxu0 0
        %1881 = vmatpush.bf16.msra.mxu0 %v1872
        %1882 = vmatpush.bf16.msra.mxu0 %v1871
        %1883 = vmatmul.bf16.gmra.mxu0 %v1779
        %v1884 = vpop.f32.mrf.mxu0
        %v1885 = vadd.f32 %v1861, %v1884
        %v1886 = vpop.f32.mrf.mxu0
        %v1887 = vadd.f32 %v1861, %v1886
        %1888 = vmatmul.bf16.gmra.mxu0 %v1782
        %v1889 = vpop.f32.mrf.mxu0
        %v1890 = vadd.f32 %v1861, %v1889
        %v1891 = vpop.f32.mrf.mxu0
        %v1892 = vadd.f32 %v1861, %v1891
        %1893 = vmatmul.bf16.gmra.mxu0 %v1785
        %v1894 = vpop.f32.mrf.mxu0
        %v1895 = vadd.f32 %v1861, %v1894
        %v1896 = vpop.f32.mrf.mxu0
        %v1897 = vadd.f32 %v1861, %v1896
        %1898 = vdwg.mxu0
        %v1899 = vpack.c.bf16 %v1797, %v1797
        %v1900 = vpack.c.bf16 %v1799, %v1799
        %v1901 = vpack.c.bf16 %v1802, %v1802
        %v1902 = vpack.c.bf16 %v1804, %v1804
        %v1903 = vpack.c.bf16 %v1807, %v1807
        %v1904 = vpack.c.bf16 %v1809, %v1809
        %v1905 = vpack.c.bf16 %v1841, %v1841
        %v1906 = vpack.c.bf16 %v1843, %v1843
        %v1907 = vpack.c.bf16 %v1846, %v1846
        %v1908 = vpack.c.bf16 %v1848, %v1848
        %v1909 = vpack.c.bf16 %v1851, %v1851
        %v1910 = vpack.c.bf16 %v1853, %v1853
        %v1911 = vpack.c.bf16 %v1885, %v1885
        %v1912 = vpack.c.bf16 %v1887, %v1887
        %v1913 = vpack.c.bf16 %v1890, %v1890
        %v1914 = vpack.c.bf16 %v1892, %v1892
        %v1915 = vpack.c.bf16 %v1895, %v1895
        %v1916 = vpack.c.bf16 %v1897, %v1897
        %v1919 = vunpack.c.l.b16 %v1899
        %v1920 = vunpack.c.l.b16 %v1900
        %v1921 = vpack.c.b16 %v1920, %v1919
        %v1924 = vunpack.c.l.b16 %v1905
        %v1925 = vunpack.c.l.b16 %v1906
        %v1926 = vpack.c.b16 %v1925, %v1924
        %vm1927 = vcmask 64512
        %v1929 = vsel %vm1927, %v1921, 0
        %v1932 = vsel %vm1927, %v1926, 0
        %1934 = vmatpush.bf16.xpose.msra.mxu0 0
        %1935 = vmatpush.bf16.xpose.msra.mxu0 0
        %1936 = vmatpush.bf16.xpose.msra.mxu0 0
        %1937 = vmatpush.bf16.xpose.msra.mxu0 0
        %1938 = vmatpush.bf16.xpose.msra.mxu0 0
        %1939 = vmatpush.bf16.xpose.msra.mxu0 0
        %1940 = vmatpush.bf16.xpose.msra.mxu0 0
        %1941 = vmatpush.bf16.xpose.msra.mxu0 %v1932
        %1942 = vmatmul.bf16.gmra.mxu0 %v1929
        %v1943 = vpop.f32.mrf.mxu0
        %v1944 = vadd.f32 0.0, %v1943
        %v1945 = vpop.f32.mrf.mxu0
        %v1946 = vadd.f32 0.0, %v1945
        %1947 = vdwg.mxu0
        %v1950 = vunpack.c.l.b16 %v1901
        %v1951 = vunpack.c.l.b16 %v1902
        %v1952 = vpack.c.b16 %v1951, %v1950
        %v1955 = vunpack.c.l.b16 %v1907
        %v1956 = vunpack.c.l.b16 %v1908
        %v1957 = vpack.c.b16 %v1956, %v1955
        %v1959 = vsel %vm1927, %v1952, 0
        %v1962 = vsel %vm1927, %v1957, 0
        %1964 = vmatpush.bf16.xpose.msra.mxu0 0
        %1965 = vmatpush.bf16.xpose.msra.mxu0 0
        %1966 = vmatpush.bf16.xpose.msra.mxu0 0
        %1967 = vmatpush.bf16.xpose.msra.mxu0 0
        %1968 = vmatpush.bf16.xpose.msra.mxu0 0
        %1969 = vmatpush.bf16.xpose.msra.mxu0 0
        %1970 = vmatpush.bf16.xpose.msra.mxu0 0
        %1971 = vmatpush.bf16.xpose.msra.mxu0 %v1962
        %1972 = vmatmul.bf16.gmra.mxu0 %v1959
        %v1973 = vpop.f32.mrf.mxu0
        %v1974 = vadd.f32 0.0, %v1973
        %v1975 = vpop.f32.mrf.mxu0
        %v1976 = vadd.f32 0.0, %v1975
        %1977 = vdwg.mxu0
        %v1980 = vunpack.c.l.b16 %v1903
        %v1981 = vunpack.c.l.b16 %v1904
        %v1982 = vpack.c.b16 %v1981, %v1980
        %v1985 = vunpack.c.l.b16 %v1909
        %v1986 = vunpack.c.l.b16 %v1910
        %v1987 = vpack.c.b16 %v1986, %v1985
        %v1989 = vsel %vm1927, %v1982, 0
        %v1992 = vsel %vm1927, %v1987, 0
        %1994 = vmatpush.bf16.xpose.msra.mxu0 0
        %1995 = vmatpush.bf16.xpose.msra.mxu0 0
        %1996 = vmatpush.bf16.xpose.msra.mxu0 0
        %1997 = vmatpush.bf16.xpose.msra.mxu0 0
        %1998 = vmatpush.bf16.xpose.msra.mxu0 0
        %1999 = vmatpush.bf16.xpose.msra.mxu0 0
        %2000 = vmatpush.bf16.xpose.msra.mxu0 0
        %2001 = vmatpush.bf16.xpose.msra.mxu0 %v1992
        %2002 = vmatmul.bf16.gmra.mxu0 %v1989
        %v2003 = vpop.f32.mrf.mxu0
        %v2004 = vadd.f32 0.0, %v2003
        %v2005 = vpop.f32.mrf.mxu0
        %v2006 = vadd.f32 0.0, %v2005
        %2007 = vdwg.mxu0
        %v2008 = vmul.f32 %v1944, 0.35355338
        %v2009 = vmul.f32 %v1946, 0.35355338
        %v2010 = vmul.f32 %v1974, 0.35355338
        %v2011 = vmul.f32 %v1976, 0.35355338
        %v2012 = vmul.f32 %v2004, 0.35355338
        %v2013 = vmul.f32 %v2006, 0.35355338
        %v2014 = vadd.f32 %v2008, %v1756
        %v2015 = vadd.f32 %v2009, %v1757
        %v2016 = vadd.f32 %v2010, %v1756
        %v2017 = vadd.f32 %v2011, %v1757
        %v2018 = vadd.f32 %v2012, %v1756
        %v2019 = vadd.f32 %v2013, %v1757
        %vm2020 = vcmask 130048
        %v2021 = vsel %vm2020, %v2014, -inf
        %2022 = vmax.xlane.f32.xlu0 %v2021
        %v2023 = vpop.xlane.xlu0 %2022
        %v2024 = vsel %vm2020, %v2015, -inf
        %2025 = vmax.xlane.f32.xlu0 %v2024
        %v2026 = vpop.xlane.xlu0 %2025
        %v2027 = vsel %vm2020, %v2016, -inf
        %2028 = vmax.xlane.f32.xlu0 %v2027
        %v2029 = vpop.xlane.xlu0 %2028
        %v2030 = vsel %vm2020, %v2017, -inf
        %2031 = vmax.xlane.f32.xlu0 %v2030
        %v2032 = vpop.xlane.xlu0 %2031
        %v2033 = vsel %vm2020, %v2018, -inf
        %2034 = vmax.xlane.f32.xlu0 %v2033
        %v2035 = vpop.xlane.xlu0 %2034
        %v2036 = vsel %vm2020, %v2019, -inf
        %2037 = vmax.xlane.f32.xlu0 %v2036
        %v2038 = vpop.xlane.xlu0 %2037
        %v2039 = vsub.f32 %v2014, %v2023
        %v2040 = vsub.f32 %v2015, %v2026
        %v2041 = vsub.f32 %v2016, %v2029
        %v2042 = vsub.f32 %v2017, %v2032
        %v2043 = vsub.f32 %v2018, %v2035
        %v2044 = vsub.f32 %v2019, %v2038
        %v2045 = vmul.f32 %v2039, 1.442695
        %v2046 = vpow.pop %v2045
        %v2047 = vmul.f32 %v2040, 1.442695
        %v2048 = vpow.pop %v2047
        %v2049 = vmul.f32 %v2041, 1.442695
        %v2050 = vpow.pop %v2049
        %v2051 = vmul.f32 %v2042, 1.442695
        %v2052 = vpow.pop %v2051
        %v2053 = vmul.f32 %v2043, 1.442695
        %v2054 = vpow.pop %v2053
        %v2055 = vmul.f32 %v2044, 1.442695
        %v2056 = vpow.pop %v2055
        %v2057 = vsel %vm2020, %v2046, 0.0
        %2058 = vadd.xlane.f32.xlu0 %v2057
        %v2059 = vpop.xlane.xlu0 %2058
        %v2060 = vsel %vm2020, %v2048, 0.0
        %2061 = vadd.xlane.f32.xlu0 %v2060
        %v2062 = vpop.xlane.xlu0 %2061
        %v2063 = vsel %vm2020, %v2050, 0.0
        %2064 = vadd.xlane.f32.xlu0 %v2063
        %v2065 = vpop.xlane.xlu0 %2064
        %v2066 = vsel %vm2020, %v2052, 0.0
        %2067 = vadd.xlane.f32.xlu0 %v2066
        %v2068 = vpop.xlane.xlu0 %2067
        %v2069 = vsel %vm2020, %v2054, 0.0
        %2070 = vadd.xlane.f32.xlu0 %v2069
        %v2071 = vpop.xlane.xlu0 %2070
        %v2072 = vsel %vm2020, %v2056, 0.0
        %2073 = vadd.xlane.f32.xlu0 %v2072
        %v2074 = vpop.xlane.xlu0 %2073
        %v2075 = vrcp.pop %v2059
        %v2076 = vrcp.pop %v2062
        %v2077 = vrcp.pop %v2065
        %v2078 = vrcp.pop %v2068
        %v2079 = vrcp.pop %v2071
        %v2080 = vrcp.pop %v2074
        %v2081 = vmul.f32 %v2046, %v2075
        %v2082 = vmul.f32 %v2048, %v2076
        %v2083 = vmul.f32 %v2050, %v2077
        %v2084 = vmul.f32 %v2052, %v2078
        %v2085 = vmul.f32 %v2054, %v2079
        %v2086 = vmul.f32 %v2056, %v2080
        %v2087 = vpack.c.bf16 %v2081, %v2081
        %v2088 = vpack.c.bf16 %v2082, %v2082
        %v2089 = vpack.c.bf16 %v2083, %v2083
        %v2090 = vpack.c.bf16 %v2084, %v2084
        %v2091 = vpack.c.bf16 %v2085, %v2085
        %v2092 = vpack.c.bf16 %v2086, %v2086
        %v2095 = vunpack.c.l.b16 %v2087
        %v2096 = vunpack.c.l.b16 %v2088
        %v2097 = vpack.c.b16 %v2096, %v2095
        %v2100 = vunpack.c.l.b16 %v1911
        %v2101 = vunpack.c.l.b16 %v1912
        %v2102 = vpack.c.b16 %v2101, %v2100
        %v2105 = vsel %vm2020, %v2097, 0
        %2107 = vmatpush.bf16.msra.mxu0 0
        %2108 = vmatpush.bf16.msra.mxu0 0
        %2109 = vmatpush.bf16.msra.mxu0 0
        %2110 = vmatpush.bf16.msra.mxu0 0
        %2111 = vmatpush.bf16.msra.mxu0 0
        %2112 = vmatpush.bf16.msra.mxu0 0
        %2113 = vmatpush.bf16.msra.mxu0 0
        %2114 = vmatpush.bf16.msra.mxu0 %v2102
        %2115 = vmatmul.bf16.gmra.mxu0 %v2105
        %v2116 = vpop.f32.mrf.mxu0
        %v2117 = vadd.f32 0.0, %v2116
        %v2118 = vpop.f32.mrf.mxu0
        %v2119 = vadd.f32 0.0, %v2118
        %2120 = vdwg.mxu0
        %v2123 = vunpack.c.l.b16 %v2089
        %v2124 = vunpack.c.l.b16 %v2090
        %v2125 = vpack.c.b16 %v2124, %v2123
        %v2128 = vunpack.c.l.b16 %v1913
        %v2129 = vunpack.c.l.b16 %v1914
        %v2130 = vpack.c.b16 %v2129, %v2128
        %v2133 = vsel %vm2020, %v2125, 0
        %2135 = vmatpush.bf16.msra.mxu0 0
        %2136 = vmatpush.bf16.msra.mxu0 0
        %2137 = vmatpush.bf16.msra.mxu0 0
        %2138 = vmatpush.bf16.msra.mxu0 0
        %2139 = vmatpush.bf16.msra.mxu0 0
        %2140 = vmatpush.bf16.msra.mxu0 0
        %2141 = vmatpush.bf16.msra.mxu0 0
        %2142 = vmatpush.bf16.msra.mxu0 %v2130
        %2143 = vmatmul.bf16.gmra.mxu0 %v2133
        %v2144 = vpop.f32.mrf.mxu0
        %v2145 = vadd.f32 0.0, %v2144
        %v2146 = vpop.f32.mrf.mxu0
        %v2147 = vadd.f32 0.0, %v2146
        %2148 = vdwg.mxu0
        %v2151 = vunpack.c.l.b16 %v2091
        %v2152 = vunpack.c.l.b16 %v2092
        %v2153 = vpack.c.b16 %v2152, %v2151
        %v2156 = vunpack.c.l.b16 %v1915
        %v2157 = vunpack.c.l.b16 %v1916
        %v2158 = vpack.c.b16 %v2157, %v2156
        %v2161 = vsel %vm2020, %v2153, 0
        %2163 = vmatpush.bf16.msra.mxu0 0
        %2164 = vmatpush.bf16.msra.mxu0 0
        %2165 = vmatpush.bf16.msra.mxu0 0
        %2166 = vmatpush.bf16.msra.mxu0 0
        %2167 = vmatpush.bf16.msra.mxu0 0
        %2168 = vmatpush.bf16.msra.mxu0 0
        %2169 = vmatpush.bf16.msra.mxu0 0
        %2170 = vmatpush.bf16.msra.mxu0 %v2158
        %2171 = vmatmul.bf16.gmra.mxu0 %v2161
        %v2172 = vpop.f32.mrf.mxu0
        %v2173 = vadd.f32 0.0, %v2172
        %v2174 = vpop.f32.mrf.mxu0
        %v2175 = vadd.f32 0.0, %v2174
        %2176 = vdwg.mxu0
        %v2177 = vpack.c.bf16 %v2119, %v2117
        %v2178 = vpack.c.bf16 %v2147, %v2145
        %v2179 = vpack.c.bf16 %v2175, %v2173
        %v2180 = vld [vmem:[%s16] sm:$0xf]
        %s2181 = scalar_lea.vmem %s10, 16
        %v2182 = vld [vmem:[%s2181] sm:$0xf]
        %v2183 = vld [vmem:[%s2181 + $0x4] sm:$0xf]
        %v2184 = vld [vmem:[%s2181 + $0x8] sm:$0xf]
        %v2185 = vld [vmem:[%s2181 + $0xc] sm:$0xf]
        %s2186 = scalar_lea.vmem %s11, 1
        %v2187 = vld [vmem:[%s2186] sm:$0x1]
        %v2189 = vperm.slane %v2187, 0
        %v2195 = vunpack.c.l.b16 %v2182
        %v2196 = vunpack.c.l.b16 %v2183
        %v2197 = vunpack.c.l.b16 %v2184
        %v2198 = vunpack.c.l.b16 %v2185
        %v2199 = vpack.c.b16 %v2196, %v2195
        %v2200 = vpack.c.b16 %v2198, %v2197
        %2203 = vmatpush.bf16.msra.mxu0 0
        %2204 = vmatpush.bf16.msra.mxu0 0
        %2205 = vmatpush.bf16.msra.mxu0 0
        %2206 = vmatpush.bf16.msra.mxu0 0
        %2207 = vmatpush.bf16.msra.mxu0 0
        %2208 = vmatpush.bf16.msra.mxu0 0
        %2209 = vmatpush.bf16.msra.mxu0 %v2200
        %2210 = vmatpush.bf16.msra.mxu0 %v2199
        %2211 = vmatmul.bf16.gmra.mxu0 %v1779
        %v2212 = vpop.f32.mrf.mxu0
        %v2213 = vadd.f32 %v2189, %v2212
        %v2214 = vpop.f32.mrf.mxu0
        %v2215 = vadd.f32 %v2189, %v2214
        %2216 = vmatmul.bf16.gmra.mxu0 %v1782
        %v2217 = vpop.f32.mrf.mxu0
        %v2218 = vadd.f32 %v2189, %v2217
        %v2219 = vpop.f32.mrf.mxu0
        %v2220 = vadd.f32 %v2189, %v2219
        %2221 = vmatmul.bf16.gmra.mxu0 %v1785
        %v2222 = vpop.f32.mrf.mxu0
        %v2223 = vadd.f32 %v2189, %v2222
        %v2224 = vpop.f32.mrf.mxu0
        %v2225 = vadd.f32 %v2189, %v2224
        %2226 = vdwg.mxu0
        %s2227 = scalar_lea.vmem %s12, 16
        %v2228 = vld [vmem:[%s2227] sm:$0xf]
        %v2229 = vld [vmem:[%s2227 + $0x4] sm:$0xf]
        %v2230 = vld [vmem:[%s2227 + $0x8] sm:$0xf]
        %v2231 = vld [vmem:[%s2227 + $0xc] sm:$0xf]
        %s2232 = scalar_lea.vmem %s13, 1
        %v2233 = vld [vmem:[%s2232] sm:$0x1]
        %v2235 = vperm.slane %v2233, 0
        %v2241 = vunpack.c.l.b16 %v2228
        %v2242 = vunpack.c.l.b16 %v2229
        %v2243 = vunpack.c.l.b16 %v2230
        %v2244 = vunpack.c.l.b16 %v2231
        %v2245 = vpack.c.b16 %v2242, %v2241
        %v2246 = vpack.c.b16 %v2244, %v2243
        %2249 = vmatpush.bf16.msra.mxu0 0
        %2250 = vmatpush.bf16.msra.mxu0 0
        %2251 = vmatpush.bf16.msra.mxu0 0
        %2252 = vmatpush.bf16.msra.mxu0 0
        %2253 = vmatpush.bf16.msra.mxu0 0
        %2254 = vmatpush.bf16.msra.mxu0 0
        %2255 = vmatpush.bf16.msra.mxu0 %v2246
        %2256 = vmatpush.bf16.msra.mxu0 %v2245
        %2257 = vmatmul.bf16.gmra.mxu0 %v1779
        %v2258 = vpop.f32.mrf.mxu0
        %v2259 = vadd.f32 %v2235, %v2258
        %v2260 = vpop.f32.mrf.mxu0
        %v2261 = vadd.f32 %v2235, %v2260
        %2262 = vmatmul.bf16.gmra.mxu0 %v1782
        %v2263 = vpop.f32.mrf.mxu0
        %v2264 = vadd.f32 %v2235, %v2263
        %v2265 = vpop.f32.mrf.mxu0
        %v2266 = vadd.f32 %v2235, %v2265
        %2267 = vmatmul.bf16.gmra.mxu0 %v1785
        %v2268 = vpop.f32.mrf.mxu0
        %v2269 = vadd.f32 %v2235, %v2268
        %v2270 = vpop.f32.mrf.mxu0
        %v2271 = vadd.f32 %v2235, %v2270
        %2272 = vdwg.mxu0
        %s2273 = scalar_lea.vmem %s14, 16
        %v2274 = vld [vmem:[%s2273] sm:$0xf]
        %v2275 = vld [vmem:[%s2273 + $0x4] sm:$0xf]
        %v2276 = vld [vmem:[%s2273 + $0x8] sm:$0xf]
        %v2277 = vld [vmem:[%s2273 + $0xc] sm:$0xf]
        %s2278 = scalar_lea.vmem %s15, 1
        %v2279 = vld [vmem:[%s2278] sm:$0x1]
        %v2281 = vperm.slane %v2279, 0
        %v2287 = vunpack.c.l.b16 %v2274
        %v2288 = vunpack.c.l.b16 %v2275
        %v2289 = vunpack.c.l.b16 %v2276
        %v2290 = vunpack.c.l.b16 %v2277
        %v2291 = vpack.c.b16 %v2288, %v2287
        %v2292 = vpack.c.b16 %v2290, %v2289
        %2295 = vmatpush.bf16.msra.mxu0 0
        %2296 = vmatpush.bf16.msra.mxu0 0
        %2297 = vmatpush.bf16.msra.mxu0 0
        %2298 = vmatpush.bf16.msra.mxu0 0
        %2299 = vmatpush.bf16.msra.mxu0 0
        %2300 = vmatpush.bf16.msra.mxu0 0
        %2301 = vmatpush.bf16.msra.mxu0 %v2292
        %2302 = vmatpush.bf16.msra.mxu0 %v2291
        %2303 = vmatmul.bf16.gmra.mxu0 %v1779
        %v2304 = vpop.f32.mrf.mxu0
        %v2305 = vadd.f32 %v2281, %v2304
        %v2306 = vpop.f32.mrf.mxu0
        %v2307 = vadd.f32 %v2281, %v2306
        %2308 = vmatmul.bf16.gmra.mxu0 %v1782
        %v2309 = vpop.f32.mrf.mxu0
        %v2310 = vadd.f32 %v2281, %v2309
        %v2311 = vpop.f32.mrf.mxu0
        %v2312 = vadd.f32 %v2281, %v2311
        %2313 = vmatmul.bf16.gmra.mxu0 %v1785
        %v2314 = vpop.f32.mrf.mxu0
        %v2315 = vadd.f32 %v2281, %v2314
        %v2316 = vpop.f32.mrf.mxu0
        %v2317 = vadd.f32 %v2281, %v2316
        %2318 = vdwg.mxu0
        %v2319 = vpack.c.bf16 %v2213, %v2213
        %v2320 = vpack.c.bf16 %v2215, %v2215
        %v2321 = vpack.c.bf16 %v2218, %v2218
        %v2322 = vpack.c.bf16 %v2220, %v2220
        %v2323 = vpack.c.bf16 %v2223, %v2223
        %v2324 = vpack.c.bf16 %v2225, %v2225
        %v2325 = vpack.c.bf16 %v2259, %v2259
        %v2326 = vpack.c.bf16 %v2261, %v2261
        %v2327 = vpack.c.bf16 %v2264, %v2264
        %v2328 = vpack.c.bf16 %v2266, %v2266
        %v2329 = vpack.c.bf16 %v2269, %v2269
        %v2330 = vpack.c.bf16 %v2271, %v2271
        %v2331 = vpack.c.bf16 %v2305, %v2305
        %v2332 = vpack.c.bf16 %v2307, %v2307
        %v2333 = vpack.c.bf16 %v2310, %v2310
        %v2334 = vpack.c.bf16 %v2312, %v2312
        %v2335 = vpack.c.bf16 %v2315, %v2315
        %v2336 = vpack.c.bf16 %v2317, %v2317
        %v2339 = vunpack.c.l.b16 %v2319
        %v2340 = vunpack.c.l.b16 %v2320
        %v2341 = vpack.c.b16 %v2340, %v2339
        %v2344 = vunpack.c.l.b16 %v2325
        %v2345 = vunpack.c.l.b16 %v2326
        %v2346 = vpack.c.b16 %v2345, %v2344
        %v2348 = vsel %vm1927, %v2341, 0
        %v2351 = vsel %vm1927, %v2346, 0
        %2353 = vmatpush.bf16.xpose.msra.mxu0 0
        %2354 = vmatpush.bf16.xpose.msra.mxu0 0
        %2355 = vmatpush.bf16.xpose.msra.mxu0 0
        %2356 = vmatpush.bf16.xpose.msra.mxu0 0
        %2357 = vmatpush.bf16.xpose.msra.mxu0 0
        %2358 = vmatpush.bf16.xpose.msra.mxu0 0
        %2359 = vmatpush.bf16.xpose.msra.mxu0 0
        %2360 = vmatpush.bf16.xpose.msra.mxu0 %v2351
        %2361 = vmatmul.bf16.gmra.mxu0 %v2348
        %v2362 = vpop.f32.mrf.mxu0
        %v2363 = vadd.f32 0.0, %v2362
        %v2364 = vpop.f32.mrf.mxu0
        %v2365 = vadd.f32 0.0, %v2364
        %2366 = vdwg.mxu0
        %v2369 = vunpack.c.l.b16 %v2321
        %v2370 = vunpack.c.l.b16 %v2322
        %v2371 = vpack.c.b16 %v2370, %v2369
        %v2374 = vunpack.c.l.b16 %v2327
        %v2375 = vunpack.c.l.b16 %v2328
        %v2376 = vpack.c.b16 %v2375, %v2374
        %v2378 = vsel %vm1927, %v2371, 0
        %v2381 = vsel %vm1927, %v2376, 0
        %2383 = vmatpush.bf16.xpose.msra.mxu0 0
        %2384 = vmatpush.bf16.xpose.msra.mxu0 0
        %2385 = vmatpush.bf16.xpose.msra.mxu0 0
        %2386 = vmatpush.bf16.xpose.msra.mxu0 0
        %2387 = vmatpush.bf16.xpose.msra.mxu0 0
        %2388 = vmatpush.bf16.xpose.msra.mxu0 0
        %2389 = vmatpush.bf16.xpose.msra.mxu0 0
        %2390 = vmatpush.bf16.xpose.msra.mxu0 %v2381
        %2391 = vmatmul.bf16.gmra.mxu0 %v2378
        %v2392 = vpop.f32.mrf.mxu0
        %v2393 = vadd.f32 0.0, %v2392
        %v2394 = vpop.f32.mrf.mxu0
        %v2395 = vadd.f32 0.0, %v2394
        %2396 = vdwg.mxu0
        %v2399 = vunpack.c.l.b16 %v2323
        %v2400 = vunpack.c.l.b16 %v2324
        %v2401 = vpack.c.b16 %v2400, %v2399
        %v2404 = vunpack.c.l.b16 %v2329
        %v2405 = vunpack.c.l.b16 %v2330
        %v2406 = vpack.c.b16 %v2405, %v2404
        %v2408 = vsel %vm1927, %v2401, 0
        %v2411 = vsel %vm1927, %v2406, 0
        %2413 = vmatpush.bf16.xpose.msra.mxu0 0
        %2414 = vmatpush.bf16.xpose.msra.mxu0 0
        %2415 = vmatpush.bf16.xpose.msra.mxu0 0
        %2416 = vmatpush.bf16.xpose.msra.mxu0 0
        %2417 = vmatpush.bf16.xpose.msra.mxu0 0
        %2418 = vmatpush.bf16.xpose.msra.mxu0 0
        %2419 = vmatpush.bf16.xpose.msra.mxu0 0
        %2420 = vmatpush.bf16.xpose.msra.mxu0 %v2411
        %2421 = vmatmul.bf16.gmra.mxu0 %v2408
        %v2422 = vpop.f32.mrf.mxu0
        %v2423 = vadd.f32 0.0, %v2422
        %v2424 = vpop.f32.mrf.mxu0
        %v2425 = vadd.f32 0.0, %v2424
        %2426 = vdwg.mxu0
        %v2427 = vmul.f32 %v2363, 0.35355338
        %v2428 = vmul.f32 %v2365, 0.35355338
        %v2429 = vmul.f32 %v2393, 0.35355338
        %v2430 = vmul.f32 %v2395, 0.35355338
        %v2431 = vmul.f32 %v2423, 0.35355338
        %v2432 = vmul.f32 %v2425, 0.35355338
        %v2433 = vadd.f32 %v2427, %v1756
        %v2434 = vadd.f32 %v2428, %v1757
        %v2435 = vadd.f32 %v2429, %v1756
        %v2436 = vadd.f32 %v2430, %v1757
        %v2437 = vadd.f32 %v2431, %v1756
        %v2438 = vadd.f32 %v2432, %v1757
        %v2439 = vsel %vm2020, %v2433, -inf
        %2440 = vmax.xlane.f32.xlu0 %v2439
        %v2441 = vpop.xlane.xlu0 %2440
        %v2442 = vsel %vm2020, %v2434, -inf
        %2443 = vmax.xlane.f32.xlu0 %v2442
        %v2444 = vpop.xlane.xlu0 %2443
        %v2445 = vsel %vm2020, %v2435, -inf
        %2446 = vmax.xlane.f32.xlu0 %v2445
        %v2447 = vpop.xlane.xlu0 %2446
        %v2448 = vsel %vm2020, %v2436, -inf
        %2449 = vmax.xlane.f32.xlu0 %v2448
        %v2450 = vpop.xlane.xlu0 %2449
        %v2451 = vsel %vm2020, %v2437, -inf
        %2452 = vmax.xlane.f32.xlu0 %v2451
        %v2453 = vpop.xlane.xlu0 %2452
        %v2454 = vsel %vm2020, %v2438, -inf
        %2455 = vmax.xlane.f32.xlu0 %v2454
        %v2456 = vpop.xlane.xlu0 %2455
        %v2457 = vsub.f32 %v2433, %v2441
        %v2458 = vsub.f32 %v2434, %v2444
        %v2459 = vsub.f32 %v2435, %v2447
        %v2460 = vsub.f32 %v2436, %v2450
        %v2461 = vsub.f32 %v2437, %v2453
        %v2462 = vsub.f32 %v2438, %v2456
        %v2463 = vmul.f32 %v2457, 1.442695
        %v2464 = vpow.pop %v2463
        %v2465 = vmul.f32 %v2458, 1.442695
        %v2466 = vpow.pop %v2465
        %v2467 = vmul.f32 %v2459, 1.442695
        %v2468 = vpow.pop %v2467
        %v2469 = vmul.f32 %v2460, 1.442695
        %v2470 = vpow.pop %v2469
        %v2471 = vmul.f32 %v2461, 1.442695
        %v2472 = vpow.pop %v2471
        %v2473 = vmul.f32 %v2462, 1.442695
        %v2474 = vpow.pop %v2473
        %v2475 = vsel %vm2020, %v2464, 0.0
        %2476 = vadd.xlane.f32.xlu0 %v2475
        %v2477 = vpop.xlane.xlu0 %2476
        %v2478 = vsel %vm2020, %v2466, 0.0
        %2479 = vadd.xlane.f32.xlu0 %v2478
        %v2480 = vpop.xlane.xlu0 %2479
        %v2481 = vsel %vm2020, %v2468, 0.0
        %2482 = vadd.xlane.f32.xlu0 %v2481
        %v2483 = vpop.xlane.xlu0 %2482
        %v2484 = vsel %vm2020, %v2470, 0.0
        %2485 = vadd.xlane.f32.xlu0 %v2484
        %v2486 = vpop.xlane.xlu0 %2485
        %v2487 = vsel %vm2020, %v2472, 0.0
        %2488 = vadd.xlane.f32.xlu0 %v2487
        %v2489 = vpop.xlane.xlu0 %2488
        %v2490 = vsel %vm2020, %v2474, 0.0
        %2491 = vadd.xlane.f32.xlu0 %v2490
        %v2492 = vpop.xlane.xlu0 %2491
        %v2493 = vrcp.pop %v2477
        %v2494 = vrcp.pop %v2480
        %v2495 = vrcp.pop %v2483
        %v2496 = vrcp.pop %v2486
        %v2497 = vrcp.pop %v2489
        %v2498 = vrcp.pop %v2492
        %v2499 = vmul.f32 %v2464, %v2493
        %v2500 = vmul.f32 %v2466, %v2494
        %v2501 = vmul.f32 %v2468, %v2495
        %v2502 = vmul.f32 %v2470, %v2496
        %v2503 = vmul.f32 %v2472, %v2497
        %v2504 = vmul.f32 %v2474, %v2498
        %v2505 = vpack.c.bf16 %v2499, %v2499
        %v2506 = vpack.c.bf16 %v2500, %v2500
        %v2507 = vpack.c.bf16 %v2501, %v2501
        %v2508 = vpack.c.bf16 %v2502, %v2502
        %v2509 = vpack.c.bf16 %v2503, %v2503
        %v2510 = vpack.c.bf16 %v2504, %v2504
        %v2513 = vunpack.c.l.b16 %v2505
        %v2514 = vunpack.c.l.b16 %v2506
        %v2515 = vpack.c.b16 %v2514, %v2513
        %v2518 = vunpack.c.l.b16 %v2331
        %v2519 = vunpack.c.l.b16 %v2332
        %v2520 = vpack.c.b16 %v2519, %v2518
        %v2523 = vsel %vm2020, %v2515, 0
        %2525 = vmatpush.bf16.msra.mxu0 0
        %2526 = vmatpush.bf16.msra.mxu0 0
        %2527 = vmatpush.bf16.msra.mxu0 0
        %2528 = vmatpush.bf16.msra.mxu0 0
        %2529 = vmatpush.bf16.msra.mxu0 0
        %2530 = vmatpush.bf16.msra.mxu0 0
        %2531 = vmatpush.bf16.msra.mxu0 0
        %2532 = vmatpush.bf16.msra.mxu0 %v2520
        %2533 = vmatmul.bf16.gmra.mxu0 %v2523
        %v2534 = vpop.f32.mrf.mxu0
        %v2535 = vadd.f32 0.0, %v2534
        %v2536 = vpop.f32.mrf.mxu0
        %v2537 = vadd.f32 0.0, %v2536
        %2538 = vdwg.mxu0
        %v2541 = vunpack.c.l.b16 %v2507
        %v2542 = vunpack.c.l.b16 %v2508
        %v2543 = vpack.c.b16 %v2542, %v2541
        %v2546 = vunpack.c.l.b16 %v2333
        %v2547 = vunpack.c.l.b16 %v2334
        %v2548 = vpack.c.b16 %v2547, %v2546
        %v2551 = vsel %vm2020, %v2543, 0
        %2553 = vmatpush.bf16.msra.mxu0 0
        %2554 = vmatpush.bf16.msra.mxu0 0
        %2555 = vmatpush.bf16.msra.mxu0 0
        %2556 = vmatpush.bf16.msra.mxu0 0
        %2557 = vmatpush.bf16.msra.mxu0 0
        %2558 = vmatpush.bf16.msra.mxu0 0
        %2559 = vmatpush.bf16.msra.mxu0 0
        %2560 = vmatpush.bf16.msra.mxu0 %v2548
        %2561 = vmatmul.bf16.gmra.mxu0 %v2551
        %v2562 = vpop.f32.mrf.mxu0
        %v2563 = vadd.f32 0.0, %v2562
        %v2564 = vpop.f32.mrf.mxu0
        %v2565 = vadd.f32 0.0, %v2564
        %2566 = vdwg.mxu0
        %v2569 = vunpack.c.l.b16 %v2509
        %v2570 = vunpack.c.l.b16 %v2510
        %v2571 = vpack.c.b16 %v2570, %v2569
        %v2574 = vunpack.c.l.b16 %v2335
        %v2575 = vunpack.c.l.b16 %v2336
        %v2576 = vpack.c.b16 %v2575, %v2574
        %v2579 = vsel %vm2020, %v2571, 0
        %2581 = vmatpush.bf16.msra.mxu0 0
        %2582 = vmatpush.bf16.msra.mxu0 0
        %2583 = vmatpush.bf16.msra.mxu0 0
        %2584 = vmatpush.bf16.msra.mxu0 0
        %2585 = vmatpush.bf16.msra.mxu0 0
        %2586 = vmatpush.bf16.msra.mxu0 0
        %2587 = vmatpush.bf16.msra.mxu0 0
        %2588 = vmatpush.bf16.msra.mxu0 %v2576
        %2589 = vmatmul.bf16.gmra.mxu0 %v2579
        %v2590 = vpop.f32.mrf.mxu0
        %v2591 = vadd.f32 0.0, %v2590
        %v2592 = vpop.f32.mrf.mxu0
        %v2593 = vadd.f32 0.0, %v2592
        %2594 = vdwg.mxu0
        %v2595 = vpack.c.bf16 %v2537, %v2535
        %v2596 = vpack.c.bf16 %v2565, %v2563
        %v2597 = vpack.c.bf16 %v2593, %v2591
        %s2598 = scalar_lea.vmem %s16, 4
        %v2599 = vld [vmem:[%s2598] sm:$0xf]
        %v2601 = vsel %vm1927, %v2595, 0
        %v2604 = vsel %vm1927, %v2596, 0
        %v2607 = vsel %vm1927, %v2597, 0
        %vm2609 = vcmask 1043456
        %v2611 = vsel %vm2609, %v2599, 0
        %2613 = vmatpush.bf16.msra.mxu0 0
        %2614 = vmatpush.bf16.msra.mxu0 0
        %2615 = vmatpush.bf16.msra.mxu0 0
        %2616 = vmatpush.bf16.msra.mxu0 0
        %2617 = vmatpush.bf16.msra.mxu0 0
        %2618 = vmatpush.bf16.msra.mxu0 0
        %2619 = vmatpush.bf16.msra.mxu0 0
        %2620 = vmatpush.bf16.msra.mxu0 %v2611
        %2621 = vmatmul.bf16.gmra.mxu0 %v2601
        %v2622 = vpop.f32.mrf.mxu0
        %v2623 = vadd.f32 0.0, %v2622
        %v2624 = vpop.f32.mrf.mxu0
        %v2625 = vadd.f32 0.0, %v2624
        %2626 = vmatmul.bf16.gmra.mxu0 %v2604
        %v2627 = vpop.f32.mrf.mxu0
        %v2628 = vadd.f32 0.0, %v2627
        %v2629 = vpop.f32.mrf.mxu0
        %v2630 = vadd.f32 0.0, %v2629
        %2631 = vmatmul.bf16.gmra.mxu0 %v2607
        %v2632 = vpop.f32.mrf.mxu0
        %v2633 = vadd.f32 0.0, %v2632
        %v2634 = vpop.f32.mrf.mxu0
        %v2635 = vadd.f32 0.0, %v2634
        %2636 = vdwg.mxu0
        %v2638 = vsel %vm1927, %v2177, 0
        %v2641 = vsel %vm1927, %v2178, 0
        %v2644 = vsel %vm1927, %v2179, 0
        %v2647 = vsel %vm2609, %v2180, 0
        %2649 = vmatpush.bf16.msra.mxu0 0
        %2650 = vmatpush.bf16.msra.mxu0 0
        %2651 = vmatpush.bf16.msra.mxu0 0
        %2652 = vmatpush.bf16.msra.mxu0 0
        %2653 = vmatpush.bf16.msra.mxu0 0
        %2654 = vmatpush.bf16.msra.mxu0 0
        %2655 = vmatpush.bf16.msra.mxu0 0
        %2656 = vmatpush.bf16.msra.mxu0 %v2647
        %2657 = vmatmul.bf16.gmra.mxu0 %v2638
        %v2658 = vpop.f32.mrf.mxu0
        %v2659 = vadd.f32 %v2623, %v2658
        %v2660 = vpop.f32.mrf.mxu0
        %v2661 = vadd.f32 %v2625, %v2660
        %2662 = vmatmul.bf16.gmra.mxu0 %v2641
        %v2663 = vpop.f32.mrf.mxu0
        %v2664 = vadd.f32 %v2628, %v2663
        %v2665 = vpop.f32.mrf.mxu0
        %v2666 = vadd.f32 %v2630, %v2665
        %2667 = vmatmul.bf16.gmra.mxu0 %v2644
        %v2668 = vpop.f32.mrf.mxu0
        %v2669 = vadd.f32 %v2633, %v2668
        %v2670 = vpop.f32.mrf.mxu0
        %v2671 = vadd.f32 %v2635, %v2670
        %2672 = vdwg.mxu0
        %s2673 = scalar_lea.vmem %s10, 32
        %v2674 = vld [vmem:[%s2673] sm:$0xf]
        %v2675 = vld [vmem:[%s2673 + $0x4] sm:$0xf]
        %v2676 = vld [vmem:[%s2673 + $0x8] sm:$0xf]
        %v2677 = vld [vmem:[%s2673 + $0xc] sm:$0xf]
        %s2678 = scalar_lea.vmem %s11, 2
        %v2679 = vld [vmem:[%s2678] sm:$0x1]
        %v2681 = vperm.slane %v2679, 0
        %v2687 = vunpack.c.l.b16 %v2674
        %v2688 = vunpack.c.l.b16 %v2675
        %v2689 = vunpack.c.l.b16 %v2676
        %v2690 = vunpack.c.l.b16 %v2677
        %v2691 = vpack.c.b16 %v2688, %v2687
        %v2692 = vpack.c.b16 %v2690, %v2689
        %2695 = vmatpush.bf16.msra.mxu0 0
        %2696 = vmatpush.bf16.msra.mxu0 0
        %2697 = vmatpush.bf16.msra.mxu0 0
        %2698 = vmatpush.bf16.msra.mxu0 0
        %2699 = vmatpush.bf16.msra.mxu0 0
        %2700 = vmatpush.bf16.msra.mxu0 0
        %2701 = vmatpush.bf16.msra.mxu0 %v2692
        %2702 = vmatpush.bf16.msra.mxu0 %v2691
        %2703 = vmatmul.bf16.gmra.mxu0 %v1779
        %v2704 = vpop.f32.mrf.mxu0
        %v2705 = vadd.f32 %v2681, %v2704
        %v2706 = vpop.f32.mrf.mxu0
        %v2707 = vadd.f32 %v2681, %v2706
        %2708 = vmatmul.bf16.gmra.mxu0 %v1782
        %v2709 = vpop.f32.mrf.mxu0
        %v2710 = vadd.f32 %v2681, %v2709
        %v2711 = vpop.f32.mrf.mxu0
        %v2712 = vadd.f32 %v2681, %v2711
        %2713 = vmatmul.bf16.gmra.mxu0 %v1785
        %v2714 = vpop.f32.mrf.mxu0
        %v2715 = vadd.f32 %v2681, %v2714
        %v2716 = vpop.f32.mrf.mxu0
        %v2717 = vadd.f32 %v2681, %v2716
        %2718 = vdwg.mxu0
        %s2719 = scalar_lea.vmem %s12, 32
        %v2720 = vld [vmem:[%s2719] sm:$0xf]
        %v2721 = vld [vmem:[%s2719 + $0x4] sm:$0xf]
        %v2722 = vld [vmem:[%s2719 + $0x8] sm:$0xf]
        %v2723 = vld [vmem:[%s2719 + $0xc] sm:$0xf]
        %s2724 = scalar_lea.vmem %s13, 2
        %v2725 = vld [vmem:[%s2724] sm:$0x1]
        %v2727 = vperm.slane %v2725, 0
        %v2733 = vunpack.c.l.b16 %v2720
        %v2734 = vunpack.c.l.b16 %v2721
        %v2735 = vunpack.c.l.b16 %v2722
        %v2736 = vunpack.c.l.b16 %v2723
        %v2737 = vpack.c.b16 %v2734, %v2733
        %v2738 = vpack.c.b16 %v2736, %v2735
        %2741 = vmatpush.bf16.msra.mxu0 0
        %2742 = vmatpush.bf16.msra.mxu0 0
        %2743 = vmatpush.bf16.msra.mxu0 0
        %2744 = vmatpush.bf16.msra.mxu0 0
        %2745 = vmatpush.bf16.msra.mxu0 0
        %2746 = vmatpush.bf16.msra.mxu0 0
        %2747 = vmatpush.bf16.msra.mxu0 %v2738
        %2748 = vmatpush.bf16.msra.mxu0 %v2737
        %2749 = vmatmul.bf16.gmra.mxu0 %v1779
        %v2750 = vpop.f32.mrf.mxu0
        %v2751 = vadd.f32 %v2727, %v2750
        %v2752 = vpop.f32.mrf.mxu0
        %v2753 = vadd.f32 %v2727, %v2752
        %2754 = vmatmul.bf16.gmra.mxu0 %v1782
        %v2755 = vpop.f32.mrf.mxu0
        %v2756 = vadd.f32 %v2727, %v2755
        %v2757 = vpop.f32.mrf.mxu0
        %v2758 = vadd.f32 %v2727, %v2757
        %2759 = vmatmul.bf16.gmra.mxu0 %v1785
        %v2760 = vpop.f32.mrf.mxu0
        %v2761 = vadd.f32 %v2727, %v2760
        %v2762 = vpop.f32.mrf.mxu0
        %v2763 = vadd.f32 %v2727, %v2762
        %2764 = vdwg.mxu0
        %s2765 = scalar_lea.vmem %s14, 32
        %v2766 = vld [vmem:[%s2765] sm:$0xf]
        %v2767 = vld [vmem:[%s2765 + $0x4] sm:$0xf]
        %v2768 = vld [vmem:[%s2765 + $0x8] sm:$0xf]
        %v2769 = vld [vmem:[%s2765 + $0xc] sm:$0xf]
        %s2770 = scalar_lea.vmem %s15, 2
        %v2771 = vld [vmem:[%s2770] sm:$0x1]
        %v2773 = vperm.slane %v2771, 0
        %v2779 = vunpack.c.l.b16 %v2766
        %v2780 = vunpack.c.l.b16 %v2767
        %v2781 = vunpack.c.l.b16 %v2768
        %v2782 = vunpack.c.l.b16 %v2769
        %v2783 = vpack.c.b16 %v2780, %v2779
        %v2784 = vpack.c.b16 %v2782, %v2781
        %2787 = vmatpush.bf16.msra.mxu0 0
        %2788 = vmatpush.bf16.msra.mxu0 0
        %2789 = vmatpush.bf16.msra.mxu0 0
        %2790 = vmatpush.bf16.msra.mxu0 0
        %2791 = vmatpush.bf16.msra.mxu0 0
        %2792 = vmatpush.bf16.msra.mxu0 0
        %2793 = vmatpush.bf16.msra.mxu0 %v2784
        %2794 = vmatpush.bf16.msra.mxu0 %v2783
        %2795 = vmatmul.bf16.gmra.mxu0 %v1779
        %v2796 = vpop.f32.mrf.mxu0
        %v2797 = vadd.f32 %v2773, %v2796
        %v2798 = vpop.f32.mrf.mxu0
        %v2799 = vadd.f32 %v2773, %v2798
        %2800 = vmatmul.bf16.gmra.mxu0 %v1782
        %v2801 = vpop.f32.mrf.mxu0
        %v2802 = vadd.f32 %v2773, %v2801
        %v2803 = vpop.f32.mrf.mxu0
        %v2804 = vadd.f32 %v2773, %v2803
        %2805 = vmatmul.bf16.gmra.mxu0 %v1785
        %v2806 = vpop.f32.mrf.mxu0
        %v2807 = vadd.f32 %v2773, %v2806
        %v2808 = vpop.f32.mrf.mxu0
        %v2809 = vadd.f32 %v2773, %v2808
        %2810 = vdwg.mxu0
        %v2811 = vpack.c.bf16 %v2705, %v2705
        %v2812 = vpack.c.bf16 %v2707, %v2707
        %v2813 = vpack.c.bf16 %v2710, %v2710
        %v2814 = vpack.c.bf16 %v2712, %v2712
        %v2815 = vpack.c.bf16 %v2715, %v2715
        %v2816 = vpack.c.bf16 %v2717, %v2717
        %v2817 = vpack.c.bf16 %v2751, %v2751
        %v2818 = vpack.c.bf16 %v2753, %v2753
        %v2819 = vpack.c.bf16 %v2756, %v2756
        %v2820 = vpack.c.bf16 %v2758, %v2758
        %v2821 = vpack.c.bf16 %v2761, %v2761
        %v2822 = vpack.c.bf16 %v2763, %v2763
        %v2823 = vpack.c.bf16 %v2797, %v2797
        %v2824 = vpack.c.bf16 %v2799, %v2799
        %v2825 = vpack.c.bf16 %v2802, %v2802
        %v2826 = vpack.c.bf16 %v2804, %v2804
        %v2827 = vpack.c.bf16 %v2807, %v2807
        %v2828 = vpack.c.bf16 %v2809, %v2809
        %v2831 = vunpack.c.l.b16 %v2811
        %v2832 = vunpack.c.l.b16 %v2812
        %v2833 = vpack.c.b16 %v2832, %v2831
        %v2836 = vunpack.c.l.b16 %v2817
        %v2837 = vunpack.c.l.b16 %v2818
        %v2838 = vpack.c.b16 %v2837, %v2836
        %v2840 = vsel %vm1927, %v2833, 0
        %v2843 = vsel %vm1927, %v2838, 0
        %2845 = vmatpush.bf16.xpose.msra.mxu0 0
        %2846 = vmatpush.bf16.xpose.msra.mxu0 0
        %2847 = vmatpush.bf16.xpose.msra.mxu0 0
        %2848 = vmatpush.bf16.xpose.msra.mxu0 0
        %2849 = vmatpush.bf16.xpose.msra.mxu0 0
        %2850 = vmatpush.bf16.xpose.msra.mxu0 0
        %2851 = vmatpush.bf16.xpose.msra.mxu0 0
        %2852 = vmatpush.bf16.xpose.msra.mxu0 %v2843
        %2853 = vmatmul.bf16.gmra.mxu0 %v2840
        %v2854 = vpop.f32.mrf.mxu0
        %v2855 = vadd.f32 0.0, %v2854
        %v2856 = vpop.f32.mrf.mxu0
        %v2857 = vadd.f32 0.0, %v2856
        %2858 = vdwg.mxu0
        %v2861 = vunpack.c.l.b16 %v2813
        %v2862 = vunpack.c.l.b16 %v2814
        %v2863 = vpack.c.b16 %v2862, %v2861
        %v2866 = vunpack.c.l.b16 %v2819
        %v2867 = vunpack.c.l.b16 %v2820
        %v2868 = vpack.c.b16 %v2867, %v2866
        %v2870 = vsel %vm1927, %v2863, 0
        %v2873 = vsel %vm1927, %v2868, 0
        %2875 = vmatpush.bf16.xpose.msra.mxu0 0
        %2876 = vmatpush.bf16.xpose.msra.mxu0 0
        %2877 = vmatpush.bf16.xpose.msra.mxu0 0
        %2878 = vmatpush.bf16.xpose.msra.mxu0 0
        %2879 = vmatpush.bf16.xpose.msra.mxu0 0
        %2880 = vmatpush.bf16.xpose.msra.mxu0 0
        %2881 = vmatpush.bf16.xpose.msra.mxu0 0
        %2882 = vmatpush.bf16.xpose.msra.mxu0 %v2873
        %2883 = vmatmul.bf16.gmra.mxu0 %v2870
        %v2884 = vpop.f32.mrf.mxu0
        %v2885 = vadd.f32 0.0, %v2884
        %v2886 = vpop.f32.mrf.mxu0
        %v2887 = vadd.f32 0.0, %v2886
        %2888 = vdwg.mxu0
        %v2891 = vunpack.c.l.b16 %v2815
        %v2892 = vunpack.c.l.b16 %v2816
        %v2893 = vpack.c.b16 %v2892, %v2891
        %v2896 = vunpack.c.l.b16 %v2821
        %v2897 = vunpack.c.l.b16 %v2822
        %v2898 = vpack.c.b16 %v2897, %v2896
        %v2900 = vsel %vm1927, %v2893, 0
        %v2903 = vsel %vm1927, %v2898, 0
        %2905 = vmatpush.bf16.xpose.msra.mxu0 0
        %2906 = vmatpush.bf16.xpose.msra.mxu0 0
        %2907 = vmatpush.bf16.xpose.msra.mxu0 0
        %2908 = vmatpush.bf16.xpose.msra.mxu0 0
        %2909 = vmatpush.bf16.xpose.msra.mxu0 0
        %2910 = vmatpush.bf16.xpose.msra.mxu0 0
        %2911 = vmatpush.bf16.xpose.msra.mxu0 0
        %2912 = vmatpush.bf16.xpose.msra.mxu0 %v2903
        %2913 = vmatmul.bf16.gmra.mxu0 %v2900
        %v2914 = vpop.f32.mrf.mxu0
        %v2915 = vadd.f32 0.0, %v2914
        %v2916 = vpop.f32.mrf.mxu0
        %v2917 = vadd.f32 0.0, %v2916
        %2918 = vdwg.mxu0
        %v2919 = vmul.f32 %v2855, 0.35355338
        %v2920 = vmul.f32 %v2857, 0.35355338
        %v2921 = vmul.f32 %v2885, 0.35355338
        %v2922 = vmul.f32 %v2887, 0.35355338
        %v2923 = vmul.f32 %v2915, 0.35355338
        %v2924 = vmul.f32 %v2917, 0.35355338
        %v2925 = vadd.f32 %v2919, %v1756
        %v2926 = vadd.f32 %v2920, %v1757
        %v2927 = vadd.f32 %v2921, %v1756
        %v2928 = vadd.f32 %v2922, %v1757
        %v2929 = vadd.f32 %v2923, %v1756
        %v2930 = vadd.f32 %v2924, %v1757
        %v2931 = vsel %vm2020, %v2925, -inf
        %2932 = vmax.xlane.f32.xlu0 %v2931
        %v2933 = vpop.xlane.xlu0 %2932
        %v2934 = vsel %vm2020, %v2926, -inf
        %2935 = vmax.xlane.f32.xlu0 %v2934
        %v2936 = vpop.xlane.xlu0 %2935
        %v2937 = vsel %vm2020, %v2927, -inf
        %2938 = vmax.xlane.f32.xlu0 %v2937
        %v2939 = vpop.xlane.xlu0 %2938
        %v2940 = vsel %vm2020, %v2928, -inf
        %2941 = vmax.xlane.f32.xlu0 %v2940
        %v2942 = vpop.xlane.xlu0 %2941
        %v2943 = vsel %vm2020, %v2929, -inf
        %2944 = vmax.xlane.f32.xlu0 %v2943
        %v2945 = vpop.xlane.xlu0 %2944
        %v2946 = vsel %vm2020, %v2930, -inf
        %2947 = vmax.xlane.f32.xlu0 %v2946
        %v2948 = vpop.xlane.xlu0 %2947
        %v2949 = vsub.f32 %v2925, %v2933
        %v2950 = vsub.f32 %v2926, %v2936
        %v2951 = vsub.f32 %v2927, %v2939
        %v2952 = vsub.f32 %v2928, %v2942
        %v2953 = vsub.f32 %v2929, %v2945
        %v2954 = vsub.f32 %v2930, %v2948
        %v2955 = vmul.f32 %v2949, 1.442695
        %v2956 = vpow.pop %v2955
        %v2957 = vmul.f32 %v2950, 1.442695
        %v2958 = vpow.pop %v2957
        %v2959 = vmul.f32 %v2951, 1.442695
        %v2960 = vpow.pop %v2959
        %v2961 = vmul.f32 %v2952, 1.442695
        %v2962 = vpow.pop %v2961
        %v2963 = vmul.f32 %v2953, 1.442695
        %v2964 = vpow.pop %v2963
        %v2965 = vmul.f32 %v2954, 1.442695
        %v2966 = vpow.pop %v2965
        %v2967 = vsel %vm2020, %v2956, 0.0
        %2968 = vadd.xlane.f32.xlu0 %v2967
        %v2969 = vpop.xlane.xlu0 %2968
        %v2970 = vsel %vm2020, %v2958, 0.0
        %2971 = vadd.xlane.f32.xlu0 %v2970
        %v2972 = vpop.xlane.xlu0 %2971
        %v2973 = vsel %vm2020, %v2960, 0.0
        %2974 = vadd.xlane.f32.xlu0 %v2973
        %v2975 = vpop.xlane.xlu0 %2974
        %v2976 = vsel %vm2020, %v2962, 0.0
        %2977 = vadd.xlane.f32.xlu0 %v2976
        %v2978 = vpop.xlane.xlu0 %2977
        %v2979 = vsel %vm2020, %v2964, 0.0
        %2980 = vadd.xlane.f32.xlu0 %v2979
        %v2981 = vpop.xlane.xlu0 %2980
        %v2982 = vsel %vm2020, %v2966, 0.0
        %2983 = vadd.xlane.f32.xlu0 %v2982
        %v2984 = vpop.xlane.xlu0 %2983
        %v2985 = vrcp.pop %v2969
        %v2986 = vrcp.pop %v2972
        %v2987 = vrcp.pop %v2975
        %v2988 = vrcp.pop %v2978
        %v2989 = vrcp.pop %v2981
        %v2990 = vrcp.pop %v2984
        %v2991 = vmul.f32 %v2956, %v2985
        %v2992 = vmul.f32 %v2958, %v2986
        %v2993 = vmul.f32 %v2960, %v2987
        %v2994 = vmul.f32 %v2962, %v2988
        %v2995 = vmul.f32 %v2964, %v2989
        %v2996 = vmul.f32 %v2966, %v2990
        %v2997 = vpack.c.bf16 %v2991, %v2991
        %v2998 = vpack.c.bf16 %v2992, %v2992
        %v2999 = vpack.c.bf16 %v2993, %v2993
        %v3000 = vpack.c.bf16 %v2994, %v2994
        %v3001 = vpack.c.bf16 %v2995, %v2995
        %v3002 = vpack.c.bf16 %v2996, %v2996
        %v3005 = vunpack.c.l.b16 %v2997
        %v3006 = vunpack.c.l.b16 %v2998
        %v3007 = vpack.c.b16 %v3006, %v3005
        %v3010 = vunpack.c.l.b16 %v2823
        %v3011 = vunpack.c.l.b16 %v2824
        %v3012 = vpack.c.b16 %v3011, %v3010
        %v3015 = vsel %vm2020, %v3007, 0
        %3017 = vmatpush.bf16.msra.mxu0 0
        %3018 = vmatpush.bf16.msra.mxu0 0
        %3019 = vmatpush.bf16.msra.mxu0 0
        %3020 = vmatpush.bf16.msra.mxu0 0
        %3021 = vmatpush.bf16.msra.mxu0 0
        %3022 = vmatpush.bf16.msra.mxu0 0
        %3023 = vmatpush.bf16.msra.mxu0 0
        %3024 = vmatpush.bf16.msra.mxu0 %v3012
        %3025 = vmatmul.bf16.gmra.mxu0 %v3015
        %v3026 = vpop.f32.mrf.mxu0
        %v3027 = vadd.f32 0.0, %v3026
        %v3028 = vpop.f32.mrf.mxu0
        %v3029 = vadd.f32 0.0, %v3028
        %3030 = vdwg.mxu0
        %v3033 = vunpack.c.l.b16 %v2999
        %v3034 = vunpack.c.l.b16 %v3000
        %v3035 = vpack.c.b16 %v3034, %v3033
        %v3038 = vunpack.c.l.b16 %v2825
        %v3039 = vunpack.c.l.b16 %v2826
        %v3040 = vpack.c.b16 %v3039, %v3038
        %v3043 = vsel %vm2020, %v3035, 0
        %3045 = vmatpush.bf16.msra.mxu0 0
        %3046 = vmatpush.bf16.msra.mxu0 0
        %3047 = vmatpush.bf16.msra.mxu0 0
        %3048 = vmatpush.bf16.msra.mxu0 0
        %3049 = vmatpush.bf16.msra.mxu0 0
        %3050 = vmatpush.bf16.msra.mxu0 0
        %3051 = vmatpush.bf16.msra.mxu0 0
        %3052 = vmatpush.bf16.msra.mxu0 %v3040
        %3053 = vmatmul.bf16.gmra.mxu0 %v3043
        %v3054 = vpop.f32.mrf.mxu0
        %v3055 = vadd.f32 0.0, %v3054
        %v3056 = vpop.f32.mrf.mxu0
        %v3057 = vadd.f32 0.0, %v3056
        %3058 = vdwg.mxu0
        %v3061 = vunpack.c.l.b16 %v3001
        %v3062 = vunpack.c.l.b16 %v3002
        %v3063 = vpack.c.b16 %v3062, %v3061
        %v3066 = vunpack.c.l.b16 %v2827
        %v3067 = vunpack.c.l.b16 %v2828
        %v3068 = vpack.c.b16 %v3067, %v3066
        %v3071 = vsel %vm2020, %v3063, 0
        %3073 = vmatpush.bf16.msra.mxu0 0
        %3074 = vmatpush.bf16.msra.mxu0 0
        %3075 = vmatpush.bf16.msra.mxu0 0
        %3076 = vmatpush.bf16.msra.mxu0 0
        %3077 = vmatpush.bf16.msra.mxu0 0
        %3078 = vmatpush.bf16.msra.mxu0 0
        %3079 = vmatpush.bf16.msra.mxu0 0
        %3080 = vmatpush.bf16.msra.mxu0 %v3068
        %3081 = vmatmul.bf16.gmra.mxu0 %v3071
        %v3082 = vpop.f32.mrf.mxu0
        %v3083 = vadd.f32 0.0, %v3082
        %v3084 = vpop.f32.mrf.mxu0
        %v3085 = vadd.f32 0.0, %v3084
        %3086 = vdwg.mxu0
        %v3087 = vpack.c.bf16 %v3029, %v3027
        %v3088 = vpack.c.bf16 %v3057, %v3055
        %v3089 = vpack.c.bf16 %v3085, %v3083
        %s3090 = scalar_lea.vmem %s16, 8
        %v3091 = vld [vmem:[%s3090] sm:$0xf]
        %v3093 = vsel %vm1927, %v3087, 0
        %v3096 = vsel %vm1927, %v3088, 0
        %v3099 = vsel %vm1927, %v3089, 0
        %v3102 = vsel %vm2609, %v3091, 0
        %3104 = vmatpush.bf16.msra.mxu0 0
        %3105 = vmatpush.bf16.msra.mxu0 0
        %3106 = vmatpush.bf16.msra.mxu0 0
        %3107 = vmatpush.bf16.msra.mxu0 0
        %3108 = vmatpush.bf16.msra.mxu0 0
        %3109 = vmatpush.bf16.msra.mxu0 0
        %3110 = vmatpush.bf16.msra.mxu0 0
        %3111 = vmatpush.bf16.msra.mxu0 %v3102
        %3112 = vmatmul.bf16.gmra.mxu0 %v3093
        %v3113 = vpop.f32.mrf.mxu0
        %v3114 = vadd.f32 0.0, %v3113
        %v3115 = vpop.f32.mrf.mxu0
        %v3116 = vadd.f32 0.0, %v3115
        %3117 = vmatmul.bf16.gmra.mxu0 %v3096
        %v3118 = vpop.f32.mrf.mxu0
        %v3119 = vadd.f32 0.0, %v3118
        %v3120 = vpop.f32.mrf.mxu0
        %v3121 = vadd.f32 0.0, %v3120
        %3122 = vmatmul.bf16.gmra.mxu0 %v3099
        %v3123 = vpop.f32.mrf.mxu0
        %v3124 = vadd.f32 0.0, %v3123
        %v3125 = vpop.f32.mrf.mxu0
        %v3126 = vadd.f32 0.0, %v3125
        %3127 = vdwg.mxu0
        %v3128 = vadd.f32 %v2659, %v3114
        %v3129 = vadd.f32 %v2661, %v3116
        %v3130 = vadd.f32 %v2664, %v3119
        %v3131 = vadd.f32 %v2666, %v3121
        %v3132 = vadd.f32 %v2669, %v3124
        %v3133 = vadd.f32 %v2671, %v3126
        %s3134 = scalar_lea.vmem %s10, 48
        %v3135 = vld [vmem:[%s3134] sm:$0xf]
        %v3136 = vld [vmem:[%s3134 + $0x4] sm:$0xf]
        %v3137 = vld [vmem:[%s3134 + $0x8] sm:$0xf]
        %v3138 = vld [vmem:[%s3134 + $0xc] sm:$0xf]
        %s3139 = scalar_lea.vmem %s11, 3
        %v3140 = vld [vmem:[%s3139] sm:$0x1]
        %v3142 = vperm.slane %v3140, 0
        %v3148 = vunpack.c.l.b16 %v3135
        %v3149 = vunpack.c.l.b16 %v3136
        %v3150 = vunpack.c.l.b16 %v3137
        %v3151 = vunpack.c.l.b16 %v3138
        %v3152 = vpack.c.b16 %v3149, %v3148
        %v3153 = vpack.c.b16 %v3151, %v3150
        %3156 = vmatpush.bf16.msra.mxu0 0
        %3157 = vmatpush.bf16.msra.mxu0 0
        %3158 = vmatpush.bf16.msra.mxu0 0
        %3159 = vmatpush.bf16.msra.mxu0 0
        %3160 = vmatpush.bf16.msra.mxu0 0
        %3161 = vmatpush.bf16.msra.mxu0 0
        %3162 = vmatpush.bf16.msra.mxu0 %v3153
        %3163 = vmatpush.bf16.msra.mxu0 %v3152
        %3164 = vmatmul.bf16.gmra.mxu0 %v1779
        %v3165 = vpop.f32.mrf.mxu0
        %v3166 = vadd.f32 %v3142, %v3165
        %v3167 = vpop.f32.mrf.mxu0
        %v3168 = vadd.f32 %v3142, %v3167
        %3169 = vmatmul.bf16.gmra.mxu0 %v1782
        %v3170 = vpop.f32.mrf.mxu0
        %v3171 = vadd.f32 %v3142, %v3170
        %v3172 = vpop.f32.mrf.mxu0
        %v3173 = vadd.f32 %v3142, %v3172
        %3174 = vmatmul.bf16.gmra.mxu0 %v1785
        %v3175 = vpop.f32.mrf.mxu0
        %v3176 = vadd.f32 %v3142, %v3175
        %v3177 = vpop.f32.mrf.mxu0
        %v3178 = vadd.f32 %v3142, %v3177
        %3179 = vdwg.mxu0
        %s3180 = scalar_lea.vmem %s12, 48
        %v3181 = vld [vmem:[%s3180] sm:$0xf]
        %v3182 = vld [vmem:[%s3180 + $0x4] sm:$0xf]
        %v3183 = vld [vmem:[%s3180 + $0x8] sm:$0xf]
        %v3184 = vld [vmem:[%s3180 + $0xc] sm:$0xf]
        %s3185 = scalar_lea.vmem %s13, 3
        %v3186 = vld [vmem:[%s3185] sm:$0x1]
        %v3188 = vperm.slane %v3186, 0
        %v3194 = vunpack.c.l.b16 %v3181
        %v3195 = vunpack.c.l.b16 %v3182
        %v3196 = vunpack.c.l.b16 %v3183
        %v3197 = vunpack.c.l.b16 %v3184
        %v3198 = vpack.c.b16 %v3195, %v3194
        %v3199 = vpack.c.b16 %v3197, %v3196
        %3202 = vmatpush.bf16.msra.mxu0 0
        %3203 = vmatpush.bf16.msra.mxu0 0
        %3204 = vmatpush.bf16.msra.mxu0 0
        %3205 = vmatpush.bf16.msra.mxu0 0
        %3206 = vmatpush.bf16.msra.mxu0 0
        %3207 = vmatpush.bf16.msra.mxu0 0
        %3208 = vmatpush.bf16.msra.mxu0 %v3199
        %3209 = vmatpush.bf16.msra.mxu0 %v3198
        %3210 = vmatmul.bf16.gmra.mxu0 %v1779
        %v3211 = vpop.f32.mrf.mxu0
        %v3212 = vadd.f32 %v3188, %v3211
        %v3213 = vpop.f32.mrf.mxu0
        %v3214 = vadd.f32 %v3188, %v3213
        %3215 = vmatmul.bf16.gmra.mxu0 %v1782
        %v3216 = vpop.f32.mrf.mxu0
        %v3217 = vadd.f32 %v3188, %v3216
        %v3218 = vpop.f32.mrf.mxu0
        %v3219 = vadd.f32 %v3188, %v3218
        %3220 = vmatmul.bf16.gmra.mxu0 %v1785
        %v3221 = vpop.f32.mrf.mxu0
        %v3222 = vadd.f32 %v3188, %v3221
        %v3223 = vpop.f32.mrf.mxu0
        %v3224 = vadd.f32 %v3188, %v3223
        %3225 = vdwg.mxu0
        %s3226 = scalar_lea.vmem %s14, 48
        %v3227 = vld [vmem:[%s3226] sm:$0xf]
        %v3228 = vld [vmem:[%s3226 + $0x4] sm:$0xf]
        %v3229 = vld [vmem:[%s3226 + $0x8] sm:$0xf]
        %v3230 = vld [vmem:[%s3226 + $0xc] sm:$0xf]
        %s3231 = scalar_lea.vmem %s15, 3
        %v3232 = vld [vmem:[%s3231] sm:$0x1]
        %v3234 = vperm.slane %v3232, 0
        %v3240 = vunpack.c.l.b16 %v3227
        %v3241 = vunpack.c.l.b16 %v3228
        %v3242 = vunpack.c.l.b16 %v3229
        %v3243 = vunpack.c.l.b16 %v3230
        %v3244 = vpack.c.b16 %v3241, %v3240
        %v3245 = vpack.c.b16 %v3243, %v3242
        %3248 = vmatpush.bf16.msra.mxu0 0
        %3249 = vmatpush.bf16.msra.mxu0 0
        %3250 = vmatpush.bf16.msra.mxu0 0
        %3251 = vmatpush.bf16.msra.mxu0 0
        %3252 = vmatpush.bf16.msra.mxu0 0
        %3253 = vmatpush.bf16.msra.mxu0 0
        %3254 = vmatpush.bf16.msra.mxu0 %v3245
        %3255 = vmatpush.bf16.msra.mxu0 %v3244
        %3256 = vmatmul.bf16.gmra.mxu0 %v1779
        %v3257 = vpop.f32.mrf.mxu0
        %v3258 = vadd.f32 %v3234, %v3257
        %v3259 = vpop.f32.mrf.mxu0
        %v3260 = vadd.f32 %v3234, %v3259
        %3261 = vmatmul.bf16.gmra.mxu0 %v1782
        %v3262 = vpop.f32.mrf.mxu0
        %v3263 = vadd.f32 %v3234, %v3262
        %v3264 = vpop.f32.mrf.mxu0
        %v3265 = vadd.f32 %v3234, %v3264
        %3266 = vmatmul.bf16.gmra.mxu0 %v1785
        %v3267 = vpop.f32.mrf.mxu0
        %v3268 = vadd.f32 %v3234, %v3267
        %v3269 = vpop.f32.mrf.mxu0
        %v3270 = vadd.f32 %v3234, %v3269
        %3271 = vdwg.mxu0
        %v3272 = vpack.c.bf16 %v3166, %v3166
        %v3273 = vpack.c.bf16 %v3168, %v3168
        %v3274 = vpack.c.bf16 %v3171, %v3171
        %v3275 = vpack.c.bf16 %v3173, %v3173
        %v3276 = vpack.c.bf16 %v3176, %v3176
        %v3277 = vpack.c.bf16 %v3178, %v3178
        %v3278 = vpack.c.bf16 %v3212, %v3212
        %v3279 = vpack.c.bf16 %v3214, %v3214
        %v3280 = vpack.c.bf16 %v3217, %v3217
        %v3281 = vpack.c.bf16 %v3219, %v3219
        %v3282 = vpack.c.bf16 %v3222, %v3222
        %v3283 = vpack.c.bf16 %v3224, %v3224
        %v3284 = vpack.c.bf16 %v3258, %v3258
        %v3285 = vpack.c.bf16 %v3260, %v3260
        %v3286 = vpack.c.bf16 %v3263, %v3263
        %v3287 = vpack.c.bf16 %v3265, %v3265
        %v3288 = vpack.c.bf16 %v3268, %v3268
        %v3289 = vpack.c.bf16 %v3270, %v3270
        %v3292 = vunpack.c.l.b16 %v3272
        %v3293 = vunpack.c.l.b16 %v3273
        %v3294 = vpack.c.b16 %v3293, %v3292
        %v3297 = vunpack.c.l.b16 %v3278
        %v3298 = vunpack.c.l.b16 %v3279
        %v3299 = vpack.c.b16 %v3298, %v3297
        %v3301 = vsel %vm1927, %v3294, 0
        %v3304 = vsel %vm1927, %v3299, 0
        %3306 = vmatpush.bf16.xpose.msra.mxu0 0
        %3307 = vmatpush.bf16.xpose.msra.mxu0 0
        %3308 = vmatpush.bf16.xpose.msra.mxu0 0
        %3309 = vmatpush.bf16.xpose.msra.mxu0 0
        %3310 = vmatpush.bf16.xpose.msra.mxu0 0
        %3311 = vmatpush.bf16.xpose.msra.mxu0 0
        %3312 = vmatpush.bf16.xpose.msra.mxu0 0
        %3313 = vmatpush.bf16.xpose.msra.mxu0 %v3304
        %3314 = vmatmul.bf16.gmra.mxu0 %v3301
        %v3315 = vpop.f32.mrf.mxu0
        %v3316 = vadd.f32 0.0, %v3315
        %v3317 = vpop.f32.mrf.mxu0
        %v3318 = vadd.f32 0.0, %v3317
        %3319 = vdwg.mxu0
        %v3322 = vunpack.c.l.b16 %v3274
        %v3323 = vunpack.c.l.b16 %v3275
        %v3324 = vpack.c.b16 %v3323, %v3322
        %v3327 = vunpack.c.l.b16 %v3280
        %v3328 = vunpack.c.l.b16 %v3281
        %v3329 = vpack.c.b16 %v3328, %v3327
        %v3331 = vsel %vm1927, %v3324, 0
        %v3334 = vsel %vm1927, %v3329, 0
        %3336 = vmatpush.bf16.xpose.msra.mxu0 0
        %3337 = vmatpush.bf16.xpose.msra.mxu0 0
        %3338 = vmatpush.bf16.xpose.msra.mxu0 0
        %3339 = vmatpush.bf16.xpose.msra.mxu0 0
        %3340 = vmatpush.bf16.xpose.msra.mxu0 0
        %3341 = vmatpush.bf16.xpose.msra.mxu0 0
        %3342 = vmatpush.bf16.xpose.msra.mxu0 0
        %3343 = vmatpush.bf16.xpose.msra.mxu0 %v3334
        %3344 = vmatmul.bf16.gmra.mxu0 %v3331
        %v3345 = vpop.f32.mrf.mxu0
        %v3346 = vadd.f32 0.0, %v3345
        %v3347 = vpop.f32.mrf.mxu0
        %v3348 = vadd.f32 0.0, %v3347
        %3349 = vdwg.mxu0
        %v3352 = vunpack.c.l.b16 %v3276
        %v3353 = vunpack.c.l.b16 %v3277
        %v3354 = vpack.c.b16 %v3353, %v3352
        %v3357 = vunpack.c.l.b16 %v3282
        %v3358 = vunpack.c.l.b16 %v3283
        %v3359 = vpack.c.b16 %v3358, %v3357
        %v3361 = vsel %vm1927, %v3354, 0
        %v3364 = vsel %vm1927, %v3359, 0
        %3366 = vmatpush.bf16.xpose.msra.mxu0 0
        %3367 = vmatpush.bf16.xpose.msra.mxu0 0
        %3368 = vmatpush.bf16.xpose.msra.mxu0 0
        %3369 = vmatpush.bf16.xpose.msra.mxu0 0
        %3370 = vmatpush.bf16.xpose.msra.mxu0 0
        %3371 = vmatpush.bf16.xpose.msra.mxu0 0
        %3372 = vmatpush.bf16.xpose.msra.mxu0 0
        %3373 = vmatpush.bf16.xpose.msra.mxu0 %v3364
        %3374 = vmatmul.bf16.gmra.mxu0 %v3361
        %v3375 = vpop.f32.mrf.mxu0
        %v3376 = vadd.f32 0.0, %v3375
        %v3377 = vpop.f32.mrf.mxu0
        %v3378 = vadd.f32 0.0, %v3377
        %3379 = vdwg.mxu0
        %v3380 = vmul.f32 %v3316, 0.35355338
        %v3381 = vmul.f32 %v3318, 0.35355338
        %v3382 = vmul.f32 %v3346, 0.35355338
        %v3383 = vmul.f32 %v3348, 0.35355338
        %v3384 = vmul.f32 %v3376, 0.35355338
        %v3385 = vmul.f32 %v3378, 0.35355338
        %v3386 = vadd.f32 %v3380, %v1756
        %v3387 = vadd.f32 %v3381, %v1757
        %v3388 = vadd.f32 %v3382, %v1756
        %v3389 = vadd.f32 %v3383, %v1757
        %v3390 = vadd.f32 %v3384, %v1756
        %v3391 = vadd.f32 %v3385, %v1757
        %v3392 = vsel %vm2020, %v3386, -inf
        %3393 = vmax.xlane.f32.xlu0 %v3392
        %v3394 = vpop.xlane.xlu0 %3393
        %v3395 = vsel %vm2020, %v3387, -inf
        %3396 = vmax.xlane.f32.xlu0 %v3395
        %v3397 = vpop.xlane.xlu0 %3396
        %v3398 = vsel %vm2020, %v3388, -inf
        %3399 = vmax.xlane.f32.xlu0 %v3398
        %v3400 = vpop.xlane.xlu0 %3399
        %v3401 = vsel %vm2020, %v3389, -inf
        %3402 = vmax.xlane.f32.xlu0 %v3401
        %v3403 = vpop.xlane.xlu0 %3402
        %v3404 = vsel %vm2020, %v3390, -inf
        %3405 = vmax.xlane.f32.xlu0 %v3404
        %v3406 = vpop.xlane.xlu0 %3405
        %v3407 = vsel %vm2020, %v3391, -inf
        %3408 = vmax.xlane.f32.xlu0 %v3407
        %v3409 = vpop.xlane.xlu0 %3408
        %v3410 = vsub.f32 %v3386, %v3394
        %v3411 = vsub.f32 %v3387, %v3397
        %v3412 = vsub.f32 %v3388, %v3400
        %v3413 = vsub.f32 %v3389, %v3403
        %v3414 = vsub.f32 %v3390, %v3406
        %v3415 = vsub.f32 %v3391, %v3409
        %v3416 = vmul.f32 %v3410, 1.442695
        %v3417 = vpow.pop %v3416
        %v3418 = vmul.f32 %v3411, 1.442695
        %v3419 = vpow.pop %v3418
        %v3420 = vmul.f32 %v3412, 1.442695
        %v3421 = vpow.pop %v3420
        %v3422 = vmul.f32 %v3413, 1.442695
        %v3423 = vpow.pop %v3422
        %v3424 = vmul.f32 %v3414, 1.442695
        %v3425 = vpow.pop %v3424
        %v3426 = vmul.f32 %v3415, 1.442695
        %v3427 = vpow.pop %v3426
        %v3428 = vsel %vm2020, %v3417, 0.0
        %3429 = vadd.xlane.f32.xlu0 %v3428
        %v3430 = vpop.xlane.xlu0 %3429
        %v3431 = vsel %vm2020, %v3419, 0.0
        %3432 = vadd.xlane.f32.xlu0 %v3431
        %v3433 = vpop.xlane.xlu0 %3432
        %v3434 = vsel %vm2020, %v3421, 0.0
        %3435 = vadd.xlane.f32.xlu0 %v3434
        %v3436 = vpop.xlane.xlu0 %3435
        %v3437 = vsel %vm2020, %v3423, 0.0
        %3438 = vadd.xlane.f32.xlu0 %v3437
        %v3439 = vpop.xlane.xlu0 %3438
        %v3440 = vsel %vm2020, %v3425, 0.0
        %3441 = vadd.xlane.f32.xlu0 %v3440
        %v3442 = vpop.xlane.xlu0 %3441
        %v3443 = vsel %vm2020, %v3427, 0.0
        %3444 = vadd.xlane.f32.xlu0 %v3443
        %v3445 = vpop.xlane.xlu0 %3444
        %v3446 = vrcp.pop %v3430
        %v3447 = vrcp.pop %v3433
        %v3448 = vrcp.pop %v3436
        %v3449 = vrcp.pop %v3439
        %v3450 = vrcp.pop %v3442
        %v3451 = vrcp.pop %v3445
        %v3452 = vmul.f32 %v3417, %v3446
        %v3453 = vmul.f32 %v3419, %v3447
        %v3454 = vmul.f32 %v3421, %v3448
        %v3455 = vmul.f32 %v3423, %v3449
        %v3456 = vmul.f32 %v3425, %v3450
        %v3457 = vmul.f32 %v3427, %v3451
        %v3458 = vpack.c.bf16 %v3452, %v3452
        %v3459 = vpack.c.bf16 %v3453, %v3453
        %v3460 = vpack.c.bf16 %v3454, %v3454
        %v3461 = vpack.c.bf16 %v3455, %v3455
        %v3462 = vpack.c.bf16 %v3456, %v3456
        %v3463 = vpack.c.bf16 %v3457, %v3457
        %v3466 = vunpack.c.l.b16 %v3458
        %v3467 = vunpack.c.l.b16 %v3459
        %v3468 = vpack.c.b16 %v3467, %v3466
        %v3471 = vunpack.c.l.b16 %v3284
        %v3472 = vunpack.c.l.b16 %v3285
        %v3473 = vpack.c.b16 %v3472, %v3471
        %v3476 = vsel %vm2020, %v3468, 0
        %3478 = vmatpush.bf16.msra.mxu0 0
        %3479 = vmatpush.bf16.msra.mxu0 0
        %3480 = vmatpush.bf16.msra.mxu0 0
        %3481 = vmatpush.bf16.msra.mxu0 0
        %3482 = vmatpush.bf16.msra.mxu0 0
        %3483 = vmatpush.bf16.msra.mxu0 0
        %3484 = vmatpush.bf16.msra.mxu0 0
        %3485 = vmatpush.bf16.msra.mxu0 %v3473
        %3486 = vmatmul.bf16.gmra.mxu0 %v3476
        %v3487 = vpop.f32.mrf.mxu0
        %v3488 = vadd.f32 0.0, %v3487
        %v3489 = vpop.f32.mrf.mxu0
        %v3490 = vadd.f32 0.0, %v3489
        %3491 = vdwg.mxu0
        %v3494 = vunpack.c.l.b16 %v3460
        %v3495 = vunpack.c.l.b16 %v3461
        %v3496 = vpack.c.b16 %v3495, %v3494
        %v3499 = vunpack.c.l.b16 %v3286
        %v3500 = vunpack.c.l.b16 %v3287
        %v3501 = vpack.c.b16 %v3500, %v3499
        %v3504 = vsel %vm2020, %v3496, 0
        %3506 = vmatpush.bf16.msra.mxu0 0
        %3507 = vmatpush.bf16.msra.mxu0 0
        %3508 = vmatpush.bf16.msra.mxu0 0
        %3509 = vmatpush.bf16.msra.mxu0 0
        %3510 = vmatpush.bf16.msra.mxu0 0
        %3511 = vmatpush.bf16.msra.mxu0 0
        %3512 = vmatpush.bf16.msra.mxu0 0
        %3513 = vmatpush.bf16.msra.mxu0 %v3501
        %3514 = vmatmul.bf16.gmra.mxu0 %v3504
        %v3515 = vpop.f32.mrf.mxu0
        %v3516 = vadd.f32 0.0, %v3515
        %v3517 = vpop.f32.mrf.mxu0
        %v3518 = vadd.f32 0.0, %v3517
        %3519 = vdwg.mxu0
        %v3522 = vunpack.c.l.b16 %v3462
        %v3523 = vunpack.c.l.b16 %v3463
        %v3524 = vpack.c.b16 %v3523, %v3522
        %v3527 = vunpack.c.l.b16 %v3288
        %v3528 = vunpack.c.l.b16 %v3289
        %v3529 = vpack.c.b16 %v3528, %v3527
        %v3532 = vsel %vm2020, %v3524, 0
        %3534 = vmatpush.bf16.msra.mxu0 0
        %3535 = vmatpush.bf16.msra.mxu0 0
        %3536 = vmatpush.bf16.msra.mxu0 0
        %3537 = vmatpush.bf16.msra.mxu0 0
        %3538 = vmatpush.bf16.msra.mxu0 0
        %3539 = vmatpush.bf16.msra.mxu0 0
        %3540 = vmatpush.bf16.msra.mxu0 0
        %3541 = vmatpush.bf16.msra.mxu0 %v3529
        %3542 = vmatmul.bf16.gmra.mxu0 %v3532
        %v3543 = vpop.f32.mrf.mxu0
        %v3544 = vadd.f32 0.0, %v3543
        %v3545 = vpop.f32.mrf.mxu0
        %v3546 = vadd.f32 0.0, %v3545
        %3547 = vdwg.mxu0
        %v3548 = vpack.c.bf16 %v3490, %v3488
        %v3549 = vpack.c.bf16 %v3518, %v3516
        %v3550 = vpack.c.bf16 %v3546, %v3544
        %s3551 = scalar_lea.vmem %s16, 12
        %v3552 = vld [vmem:[%s3551] sm:$0xf]
        %v3554 = vsel %vm1927, %v3548, 0
        %v3557 = vsel %vm1927, %v3549, 0
        %v3560 = vsel %vm1927, %v3550, 0
        %v3563 = vsel %vm2609, %v3552, 0
        %3565 = vmatpush.bf16.msra.mxu0 0
        %3566 = vmatpush.bf16.msra.mxu0 0
        %3567 = vmatpush.bf16.msra.mxu0 0
        %3568 = vmatpush.bf16.msra.mxu0 0
        %3569 = vmatpush.bf16.msra.mxu0 0
        %3570 = vmatpush.bf16.msra.mxu0 0
        %3571 = vmatpush.bf16.msra.mxu0 0
        %3572 = vmatpush.bf16.msra.mxu0 %v3563
        %3573 = vmatmul.bf16.gmra.mxu0 %v3554
        %v3574 = vpop.f32.mrf.mxu0
        %v3575 = vadd.f32 0.0, %v3574
        %v3576 = vpop.f32.mrf.mxu0
        %v3577 = vadd.f32 0.0, %v3576
        %3578 = vmatmul.bf16.gmra.mxu0 %v3557
        %v3579 = vpop.f32.mrf.mxu0
        %v3580 = vadd.f32 0.0, %v3579
        %v3581 = vpop.f32.mrf.mxu0
        %v3582 = vadd.f32 0.0, %v3581
        %3583 = vmatmul.bf16.gmra.mxu0 %v3560
        %v3584 = vpop.f32.mrf.mxu0
        %v3585 = vadd.f32 0.0, %v3584
        %v3586 = vpop.f32.mrf.mxu0
        %v3587 = vadd.f32 0.0, %v3586
        %3588 = vdwg.mxu0
        %v3589 = vadd.f32 %v3128, %v3575
        %v3590 = vadd.f32 %v3129, %v3577
        %v3591 = vadd.f32 %v3130, %v3580
        %v3592 = vadd.f32 %v3131, %v3582
        %v3593 = vadd.f32 %v3132, %v3585
        %v3594 = vadd.f32 %v3133, %v3587
        %v3595 = vadd.f32 %v1584, %v3589
        %v3596 = vadd.f32 %v1585, %v3590
        %v3597 = vadd.f32 %v1586, %v3591
        %v3598 = vadd.f32 %v1587, %v3592
        %v3599 = vadd.f32 %v1588, %v3593
        %v3600 = vadd.f32 %v1589, %v3594
        %v3601 = vld [vmem:[%s17] sm:$0x1]
        %v3603 = vperm.slane %v3601, 0
        %v3605 = vadd.f32 %v3595, %v3603
        %v3606 = vadd.f32 %v3596, %v3603
        %v3607 = vadd.f32 %v3597, %v3603
        %v3608 = vadd.f32 %v3598, %v3603
        %v3609 = vadd.f32 %v3599, %v3603
        %v3610 = vadd.f32 %v3600, %v3603
        %v3611 = vsel %vm1507, %v3605, 0.0
        %3612 = vadd.xlane.f32.xlu0 %v3611
        %v3613 = vpop.xlane.xlu0 %3612
        %v3614 = vsel %vm1507, %v3606, 0.0
        %3615 = vadd.xlane.f32.xlu0 %v3614
        %v3616 = vpop.xlane.xlu0 %3615
        %v3617 = vsel %vm1507, %v3607, 0.0
        %3618 = vadd.xlane.f32.xlu0 %v3617
        %v3619 = vpop.xlane.xlu0 %3618
        %v3620 = vsel %vm1507, %v3608, 0.0
        %3621 = vadd.xlane.f32.xlu0 %v3620
        %v3622 = vpop.xlane.xlu0 %3621
        %v3623 = vsel %vm1507, %v3609, 0.0
        %3624 = vadd.xlane.f32.xlu0 %v3623
        %v3625 = vpop.xlane.xlu0 %3624
        %v3626 = vsel %vm1507, %v3610, 0.0
        %3627 = vadd.xlane.f32.xlu0 %v3626
        %v3628 = vpop.xlane.xlu0 %3627
        %v3629 = vmul.f32 %v3613, %v1614
        %v3630 = vmul.f32 %v3616, %v1614
        %v3631 = vmul.f32 %v3619, %v1614
        %v3632 = vmul.f32 %v3622, %v1614
        %v3633 = vmul.f32 %v3625, %v1614
        %v3634 = vmul.f32 %v3628, %v1614
        %v3635 = vsub.f32 %v3605, %v3629
        %v3636 = vsub.f32 %v3606, %v3630
        %v3637 = vsub.f32 %v3607, %v3631
        %v3638 = vsub.f32 %v3608, %v3632
        %v3639 = vsub.f32 %v3609, %v3633
        %v3640 = vsub.f32 %v3610, %v3634
        %v3641 = vmul.f32 %v3635, %v3635
        %v3642 = vmul.f32 %v3636, %v3636
        %v3643 = vmul.f32 %v3637, %v3637
        %v3644 = vmul.f32 %v3638, %v3638
        %v3645 = vmul.f32 %v3639, %v3639
        %v3646 = vmul.f32 %v3640, %v3640
        %v3647 = vsel %vm1507, %v3641, 0.0
        %3648 = vadd.xlane.f32.xlu0 %v3647
        %v3649 = vpop.xlane.xlu0 %3648
        %v3650 = vsel %vm1507, %v3642, 0.0
        %3651 = vadd.xlane.f32.xlu0 %v3650
        %v3652 = vpop.xlane.xlu0 %3651
        %v3653 = vsel %vm1507, %v3643, 0.0
        %3654 = vadd.xlane.f32.xlu0 %v3653
        %v3655 = vpop.xlane.xlu0 %3654
        %v3656 = vsel %vm1507, %v3644, 0.0
        %3657 = vadd.xlane.f32.xlu0 %v3656
        %v3658 = vpop.xlane.xlu0 %3657
        %v3659 = vsel %vm1507, %v3645, 0.0
        %3660 = vadd.xlane.f32.xlu0 %v3659
        %v3661 = vpop.xlane.xlu0 %3660
        %v3662 = vsel %vm1507, %v3646, 0.0
        %3663 = vadd.xlane.f32.xlu0 %v3662
        %v3664 = vpop.xlane.xlu0 %3663
        %v3665 = vmul.f32 %v3649, %v1614
        %v3666 = vmul.f32 %v3652, %v1614
        %v3667 = vmul.f32 %v3655, %v1614
        %v3668 = vmul.f32 %v3658, %v1614
        %v3669 = vmul.f32 %v3661, %v1614
        %v3670 = vmul.f32 %v3664, %v1614
        %v3671 = vadd.f32 %v3665, 1e-05
        %v3672 = vadd.f32 %v3666, 1e-05
        %v3673 = vadd.f32 %v3667, 1e-05
        %v3674 = vadd.f32 %v3668, 1e-05
        %v3675 = vadd.f32 %v3669, 1e-05
        %v3676 = vadd.f32 %v3670, 1e-05
        %v3677 = vrsqrt.pop %v3671
        %v3678 = vmul.f32 %v3677, %v3671
        %v3679 = vmul.f32 %v3678, %v3677
        %v3680 = vmul.f32 0.5, %v3679
        %v3681 = vsub.f32 1.5, %v3680
        %v3682 = vmul.f32 %v3677, %v3681
        %vm3683 = vweird.f32 %v3671
        %vm3684 = vweird.f32 %v3677
        %vm3685 = vmor %vm3683, %vm3684
        %v3686 = vsel %vm3685, %v3677, %v3682
        %v3687 = vrsqrt.pop %v3672
        %v3688 = vmul.f32 %v3687, %v3672
        %v3689 = vmul.f32 %v3688, %v3687
        %v3690 = vmul.f32 0.5, %v3689
        %v3691 = vsub.f32 1.5, %v3690
        %v3692 = vmul.f32 %v3687, %v3691
        %vm3693 = vweird.f32 %v3672
        %vm3694 = vweird.f32 %v3687
        %vm3695 = vmor %vm3693, %vm3694
        %v3696 = vsel %vm3695, %v3687, %v3692
        %v3697 = vrsqrt.pop %v3673
        %v3698 = vmul.f32 %v3697, %v3673
        %v3699 = vmul.f32 %v3698, %v3697
        %v3700 = vmul.f32 0.5, %v3699
        %v3701 = vsub.f32 1.5, %v3700
        %v3702 = vmul.f32 %v3697, %v3701
        %vm3703 = vweird.f32 %v3673
        %vm3704 = vweird.f32 %v3697
        %vm3705 = vmor %vm3703, %vm3704
        %v3706 = vsel %vm3705, %v3697, %v3702
        %v3707 = vrsqrt.pop %v3674
        %v3708 = vmul.f32 %v3707, %v3674
        %v3709 = vmul.f32 %v3708, %v3707
        %v3710 = vmul.f32 0.5, %v3709
        %v3711 = vsub.f32 1.5, %v3710
        %v3712 = vmul.f32 %v3707, %v3711
        %vm3713 = vweird.f32 %v3674
        %vm3714 = vweird.f32 %v3707
        %vm3715 = vmor %vm3713, %vm3714
        %v3716 = vsel %vm3715, %v3707, %v3712
        %v3717 = vrsqrt.pop %v3675
        %v3718 = vmul.f32 %v3717, %v3675
        %v3719 = vmul.f32 %v3718, %v3717
        %v3720 = vmul.f32 0.5, %v3719
        %v3721 = vsub.f32 1.5, %v3720
        %v3722 = vmul.f32 %v3717, %v3721
        %vm3723 = vweird.f32 %v3675
        %vm3724 = vweird.f32 %v3717
        %vm3725 = vmor %vm3723, %vm3724
        %v3726 = vsel %vm3725, %v3717, %v3722
        %v3727 = vrsqrt.pop %v3676
        %v3728 = vmul.f32 %v3727, %v3676
        %v3729 = vmul.f32 %v3728, %v3727
        %v3730 = vmul.f32 0.5, %v3729
        %v3731 = vsub.f32 1.5, %v3730
        %v3732 = vmul.f32 %v3727, %v3731
        %vm3733 = vweird.f32 %v3676
        %vm3734 = vweird.f32 %v3727
        %vm3735 = vmor %vm3733, %vm3734
        %v3736 = vsel %vm3735, %v3727, %v3732
        %v3737 = vmul.f32 %v3635, %v3686
        %v3738 = vmul.f32 %v3636, %v3696
        %v3739 = vmul.f32 %v3637, %v3706
        %v3740 = vmul.f32 %v3638, %v3716
        %v3741 = vmul.f32 %v3639, %v3726
        %v3742 = vmul.f32 %v3640, %v3736
        %v3743 = vld [vmem:[%s18] sm:$0x1]
        %v3745 = vperm.slane %v3743, 0
        %v3747 = vmul.f32 %v3737, %v3745
        %v3748 = vmul.f32 %v3738, %v3745
        %v3749 = vmul.f32 %v3739, %v3745
        %v3750 = vmul.f32 %v3740, %v3745
        %v3751 = vmul.f32 %v3741, %v3745
        %v3752 = vmul.f32 %v3742, %v3745
        %v3753 = vld [vmem:[%s19] sm:$0x1]
        %v3755 = vperm.slane %v3753, 0
        %v3757 = vadd.f32 %v3747, %v3755
        %v3758 = vadd.f32 %v3748, %v3755
        %v3759 = vadd.f32 %v3749, %v3755
        %v3760 = vadd.f32 %v3750, %v3755
        %v3761 = vadd.f32 %v3751, %v3755
        %v3762 = vadd.f32 %v3752, %v3755
        %v3763 = vpack.c.bf16 %v3758, %v3757
        %v3764 = vpack.c.bf16 %v3760, %v3759
        %v3765 = vpack.c.bf16 %v3762, %v3761
        %v3766 = vld [vmem:[%s20] sm:$0xf]
        %v3767 = vld [vmem:[%s20 + $0x4] sm:$0xf]
        %v3768 = vld [vmem:[%s20 + $0x8] sm:$0xf]
        %v3769 = vld [vmem:[%s20 + $0xc] sm:$0xf]
        %v3770 = vld [vmem:[%s21] sm:$0x1]
        %v3772 = vperm.slane %v3770, 0
        %v3778 = vunpack.c.l.b16 %v3766
        %v3779 = vunpack.c.l.b16 %v3767
        %v3780 = vunpack.c.l.b16 %v3768
        %v3781 = vunpack.c.l.b16 %v3769
        %v3782 = vpack.c.b16 %v3779, %v3778
        %v3783 = vpack.c.b16 %v3781, %v3780
        %v3787 = vsel %vm1507, %v3763, 0
        %v3790 = vsel %vm1507, %v3764, 0
        %v3793 = vsel %vm1507, %v3765, 0
        %3795 = vmatpush.bf16.msra.mxu0 0
        %3796 = vmatpush.bf16.msra.mxu0 0
        %3797 = vmatpush.bf16.msra.mxu0 0
        %3798 = vmatpush.bf16.msra.mxu0 0
        %3799 = vmatpush.bf16.msra.mxu0 0
        %3800 = vmatpush.bf16.msra.mxu0 0
        %3801 = vmatpush.bf16.msra.mxu0 %v3783
        %3802 = vmatpush.bf16.msra.mxu0 %v3782
        %3803 = vmatmul.bf16.gmra.mxu0 %v3787
        %v3804 = vpop.f32.mrf.mxu0
        %v3805 = vadd.f32 %v3772, %v3804
        %v3806 = vpop.f32.mrf.mxu0
        %v3807 = vadd.f32 %v3772, %v3806
        %3808 = vmatmul.bf16.gmra.mxu0 %v3790
        %v3809 = vpop.f32.mrf.mxu0
        %v3810 = vadd.f32 %v3772, %v3809
        %v3811 = vpop.f32.mrf.mxu0
        %v3812 = vadd.f32 %v3772, %v3811
        %3813 = vmatmul.bf16.gmra.mxu0 %v3793
        %v3814 = vpop.f32.mrf.mxu0
        %v3815 = vadd.f32 %v3772, %v3814
        %v3816 = vpop.f32.mrf.mxu0
        %v3817 = vadd.f32 %v3772, %v3816
        %3818 = vdwg.mxu0
        %v3819 = vmul.f32 %v3805, 1.702
        %v3820 = vmul.f32 %v3807, 1.702
        %v3821 = vmul.f32 %v3810, 1.702
        %v3822 = vmul.f32 %v3812, 1.702
        %v3823 = vmul.f32 %v3815, 1.702
        %v3824 = vmul.f32 %v3817, 1.702
        %v3825 = vxor.u32 %v3819, 2147483648
        %v3826 = vxor.u32 %v3820, 2147483648
        %v3827 = vxor.u32 %v3821, 2147483648
        %v3828 = vxor.u32 %v3822, 2147483648
        %v3829 = vxor.u32 %v3823, 2147483648
        %v3830 = vxor.u32 %v3824, 2147483648
        %v3831 = vmul.f32 %v3825, 1.442695
        %v3832 = vpow.pop %v3831
        %v3833 = vmul.f32 %v3826, 1.442695
        %v3834 = vpow.pop %v3833
        %v3835 = vmul.f32 %v3827, 1.442695
        %v3836 = vpow.pop %v3835
        %v3837 = vmul.f32 %v3828, 1.442695
        %v3838 = vpow.pop %v3837
        %v3839 = vmul.f32 %v3829, 1.442695
        %v3840 = vpow.pop %v3839
        %v3841 = vmul.f32 %v3830, 1.442695
        %v3842 = vpow.pop %v3841
        %v3843 = vadd.f32 %v3832, 1.0
        %v3844 = vadd.f32 %v3834, 1.0
        %v3845 = vadd.f32 %v3836, 1.0
        %v3846 = vadd.f32 %v3838, 1.0
        %v3847 = vadd.f32 %v3840, 1.0
        %v3848 = vadd.f32 %v3842, 1.0
        %v3849 = vrcp.pop %v3843
        %v3850 = vmul.f32 %v3843, %v3849
        %v3851 = vsub.f32 1.0, %v3850
        %v3852 = vmul.f32 %v3849, %v3851
        %v3853 = vadd.f32 %v3849, %v3852
        %vm3854 = vweird.f32 %v3843
        %vm3855 = vweird.f32 %v3849
        %vm3856 = vmor %vm3854, %vm3855
        %v3857 = vsel %vm3856, %v3849, %v3853
        %v3858 = vand.u32 2147483647, %v3843
        %vm3859 = vcmp.eq.f32.partialorder %v3858, 8.507059e+37
        %v3860 = vand.u32 %v3843, 2147483648
        %v3861 = vor.u32 1.1754944e-38, %v3860
        %v3862 = vsel %vm3859, %v3861, %v3857
        %v3863 = vmul.f32 1.0, %v3862
        %v3864 = vrcp.pop %v3844
        %v3865 = vmul.f32 %v3844, %v3864
        %v3866 = vsub.f32 1.0, %v3865
        %v3867 = vmul.f32 %v3864, %v3866
        %v3868 = vadd.f32 %v3864, %v3867
        %vm3869 = vweird.f32 %v3844
        %vm3870 = vweird.f32 %v3864
        %vm3871 = vmor %vm3869, %vm3870
        %v3872 = vsel %vm3871, %v3864, %v3868
        %v3873 = vand.u32 2147483647, %v3844
        %vm3874 = vcmp.eq.f32.partialorder %v3873, 8.507059e+37
        %v3875 = vand.u32 %v3844, 2147483648
        %v3876 = vor.u32 1.1754944e-38, %v3875
        %v3877 = vsel %vm3874, %v3876, %v3872
        %v3878 = vmul.f32 1.0, %v3877
        %v3879 = vrcp.pop %v3845
        %v3880 = vmul.f32 %v3845, %v3879
        %v3881 = vsub.f32 1.0, %v3880
        %v3882 = vmul.f32 %v3879, %v3881
        %v3883 = vadd.f32 %v3879, %v3882
        %vm3884 = vweird.f32 %v3845
        %vm3885 = vweird.f32 %v3879
        %vm3886 = vmor %vm3884, %vm3885
        %v3887 = vsel %vm3886, %v3879, %v3883
        %v3888 = vand.u32 2147483647, %v3845
        %vm3889 = vcmp.eq.f32.partialorder %v3888, 8.507059e+37
        %v3890 = vand.u32 %v3845, 2147483648
        %v3891 = vor.u32 1.1754944e-38, %v3890
        %v3892 = vsel %vm3889, %v3891, %v3887
        %v3893 = vmul.f32 1.0, %v3892
        %v3894 = vrcp.pop %v3846
        %v3895 = vmul.f32 %v3846, %v3894
        %v3896 = vsub.f32 1.0, %v3895
        %v3897 = vmul.f32 %v3894, %v3896
        %v3898 = vadd.f32 %v3894, %v3897
        %vm3899 = vweird.f32 %v3846
        %vm3900 = vweird.f32 %v3894
        %vm3901 = vmor %vm3899, %vm3900
        %v3902 = vsel %vm3901, %v3894, %v3898
        %v3903 = vand.u32 2147483647, %v3846
        %vm3904 = vcmp.eq.f32.partialorder %v3903, 8.507059e+37
        %v3905 = vand.u32 %v3846, 2147483648
        %v3906 = vor.u32 1.1754944e-38, %v3905
        %v3907 = vsel %vm3904, %v3906, %v3902
        %v3908 = vmul.f32 1.0, %v3907
        %v3909 = vrcp.pop %v3847
        %v3910 = vmul.f32 %v3847, %v3909
        %v3911 = vsub.f32 1.0, %v3910
        %v3912 = vmul.f32 %v3909, %v3911
        %v3913 = vadd.f32 %v3909, %v3912
        %vm3914 = vweird.f32 %v3847
        %vm3915 = vweird.f32 %v3909
        %vm3916 = vmor %vm3914, %vm3915
        %v3917 = vsel %vm3916, %v3909, %v3913
        %v3918 = vand.u32 2147483647, %v3847
        %vm3919 = vcmp.eq.f32.partialorder %v3918, 8.507059e+37
        %v3920 = vand.u32 %v3847, 2147483648
        %v3921 = vor.u32 1.1754944e-38, %v3920
        %v3922 = vsel %vm3919, %v3921, %v3917
        %v3923 = vmul.f32 1.0, %v3922
        %v3924 = vrcp.pop %v3848
        %v3925 = vmul.f32 %v3848, %v3924
        %v3926 = vsub.f32 1.0, %v3925
        %v3927 = vmul.f32 %v3924, %v3926
        %v3928 = vadd.f32 %v3924, %v3927
        %vm3929 = vweird.f32 %v3848
        %vm3930 = vweird.f32 %v3924
        %vm3931 = vmor %vm3929, %vm3930
        %v3932 = vsel %vm3931, %v3924, %v3928
        %v3933 = vand.u32 2147483647, %v3848
        %vm3934 = vcmp.eq.f32.partialorder %v3933, 8.507059e+37
        %v3935 = vand.u32 %v3848, 2147483648
        %v3936 = vor.u32 1.1754944e-38, %v3935
        %v3937 = vsel %vm3934, %v3936, %v3932
        %v3938 = vmul.f32 1.0, %v3937
        %v3939 = vmul.f32 %v3805, %v3863
        %v3940 = vmul.f32 %v3807, %v3878
        %v3941 = vmul.f32 %v3810, %v3893
        %v3942 = vmul.f32 %v3812, %v3908
        %v3943 = vmul.f32 %v3815, %v3923
        %v3944 = vmul.f32 %v3817, %v3938
        %v3945 = vpack.c.bf16 %v3940, %v3939
        %v3946 = vpack.c.bf16 %v3942, %v3941
        %v3947 = vpack.c.bf16 %v3944, %v3943
        %v3948 = vld [vmem:[%s22] sm:$0xf]
        %v3949 = vld [vmem:[%s22 + $0x4] sm:$0xf]
        %v3950 = vld [vmem:[%s22 + $0x8] sm:$0xf]
        %v3951 = vld [vmem:[%s22 + $0xc] sm:$0xf]
        %v3952 = vld [vmem:[%s22 + $0x10] sm:$0xf]
        %v3953 = vld [vmem:[%s22 + $0x14] sm:$0xf]
        %v3954 = vld [vmem:[%s22 + $0x18] sm:$0xf]
        %v3955 = vld [vmem:[%s22 + $0x1c] sm:$0xf]
        %v3956 = vld [vmem:[%s22 + $0x20] sm:$0xf]
        %v3957 = vld [vmem:[%s22 + $0x24] sm:$0xf]
        %v3958 = vld [vmem:[%s22 + $0x28] sm:$0xf]
        %v3959 = vld [vmem:[%s22 + $0x2c] sm:$0xf]
        %v3960 = vld [vmem:[%s22 + $0x30] sm:$0xf]
        %v3961 = vld [vmem:[%s22 + $0x34] sm:$0xf]
        %v3962 = vld [vmem:[%s22 + $0x38] sm:$0xf]
        %v3963 = vld [vmem:[%s22 + $0x3c] sm:$0xf]
        %v3980 = vunpack.c.l.b16 %v3948
        %v3981 = vunpack.c.l.b16 %v3949
        %v3982 = vunpack.c.l.b16 %v3950
        %v3983 = vunpack.c.l.b16 %v3951
        %v3984 = vunpack.c.l.b16 %v3952
        %v3985 = vunpack.c.l.b16 %v3953
        %v3986 = vunpack.c.l.b16 %v3954
        %v3987 = vunpack.c.l.b16 %v3955
        %v3988 = vunpack.c.l.b16 %v3956
        %v3989 = vunpack.c.l.b16 %v3957
        %v3990 = vunpack.c.l.b16 %v3958
        %v3991 = vunpack.c.l.b16 %v3959
        %v3992 = vunpack.c.l.b16 %v3960
        %v3993 = vunpack.c.l.b16 %v3961
        %v3994 = vunpack.c.l.b16 %v3962
        %v3995 = vunpack.c.l.b16 %v3963
        %v3996 = vpack.c.b16 %v3981, %v3980
        %v3997 = vpack.c.b16 %v3983, %v3982
        %v3998 = vpack.c.b16 %v3985, %v3984
        %v3999 = vpack.c.b16 %v3987, %v3986
        %v4000 = vpack.c.b16 %v3989, %v3988
        %v4001 = vpack.c.b16 %v3991, %v3990
        %v4002 = vpack.c.b16 %v3993, %v3992
        %v4003 = vpack.c.b16 %v3995, %v3994
        %4012 = vmatpush.bf16.msra.mxu0 %v4003
        %4013 = vmatpush.bf16.msra.mxu0 %v4002
        %4014 = vmatpush.bf16.msra.mxu0 %v4001
        %4015 = vmatpush.bf16.msra.mxu0 %v4000
        %4016 = vmatpush.bf16.msra.mxu0 %v3999
        %4017 = vmatpush.bf16.msra.mxu0 %v3998
        %4018 = vmatpush.bf16.msra.mxu0 %v3997
        %4019 = vmatpush.bf16.msra.mxu0 %v3996
        %4020 = vmatmul.bf16.gmra.mxu0 %v3945
        %v4021 = vpop.f32.mrf.mxu0
        %v4022 = vadd.f32 0.0, %v4021
        %v4023 = vpop.f32.mrf.mxu0
        %v4024 = vadd.f32 0.0, %v4023
        %4025 = vmatmul.bf16.gmra.mxu0 %v3946
        %v4026 = vpop.f32.mrf.mxu0
        %v4027 = vadd.f32 0.0, %v4026
        %v4028 = vpop.f32.mrf.mxu0
        %v4029 = vadd.f32 0.0, %v4028
        %4030 = vmatmul.bf16.gmra.mxu0 %v3947
        %v4031 = vpop.f32.mrf.mxu0
        %v4032 = vadd.f32 0.0, %v4031
        %v4033 = vpop.f32.mrf.mxu0
        %v4034 = vadd.f32 0.0, %v4033
        %4035 = vdwg.mxu0
        %v4036 = vadd.f32 %v3605, %v4022
        %v4037 = vadd.f32 %v3606, %v4024
        %v4038 = vadd.f32 %v3607, %v4027
        %v4039 = vadd.f32 %v3608, %v4029
        %v4040 = vadd.f32 %v3609, %v4032
        %v4041 = vadd.f32 %v3610, %v4034
        %v4042 = vld [vmem:[%s23] sm:$0x1]
        %v4044 = vperm.slane %v4042, 0
        %v4046 = vadd.f32 %v4036, %v4044
        %v4047 = vadd.f32 %v4037, %v4044
        %v4048 = vadd.f32 %v4038, %v4044
        %v4049 = vadd.f32 %v4039, %v4044
        %v4050 = vadd.f32 %v4040, %v4044
        %v4051 = vadd.f32 %v4041, %v4044
        %v4052 = vsel %vm1507, %v4046, 0.0
        %4053 = vadd.xlane.f32.xlu0 %v4052
        %v4054 = vpop.xlane.xlu0 %4053
        %v4055 = vsel %vm1507, %v4047, 0.0
        %4056 = vadd.xlane.f32.xlu0 %v4055
        %v4057 = vpop.xlane.xlu0 %4056
        %v4058 = vsel %vm1507, %v4048, 0.0
        %4059 = vadd.xlane.f32.xlu0 %v4058
        %v4060 = vpop.xlane.xlu0 %4059
        %v4061 = vsel %vm1507, %v4049, 0.0
        %4062 = vadd.xlane.f32.xlu0 %v4061
        %v4063 = vpop.xlane.xlu0 %4062
        %v4064 = vsel %vm1507, %v4050, 0.0
        %4065 = vadd.xlane.f32.xlu0 %v4064
        %v4066 = vpop.xlane.xlu0 %4065
        %v4067 = vsel %vm1507, %v4051, 0.0
        %4068 = vadd.xlane.f32.xlu0 %v4067
        %v4069 = vpop.xlane.xlu0 %4068
        %v4070 = vmul.f32 %v4054, %v1614
        %v4071 = vmul.f32 %v4057, %v1614
        %v4072 = vmul.f32 %v4060, %v1614
        %v4073 = vmul.f32 %v4063, %v1614
        %v4074 = vmul.f32 %v4066, %v1614
        %v4075 = vmul.f32 %v4069, %v1614
        %v4076 = vsub.f32 %v4046, %v4070
        %v4077 = vsub.f32 %v4047, %v4071
        %v4078 = vsub.f32 %v4048, %v4072
        %v4079 = vsub.f32 %v4049, %v4073
        %v4080 = vsub.f32 %v4050, %v4074
        %v4081 = vsub.f32 %v4051, %v4075
        %v4082 = vmul.f32 %v4076, %v4076
        %v4083 = vmul.f32 %v4077, %v4077
        %v4084 = vmul.f32 %v4078, %v4078
        %v4085 = vmul.f32 %v4079, %v4079
        %v4086 = vmul.f32 %v4080, %v4080
        %v4087 = vmul.f32 %v4081, %v4081
        %v4088 = vsel %vm1507, %v4082, 0.0
        %4089 = vadd.xlane.f32.xlu0 %v4088
        %v4090 = vpop.xlane.xlu0 %4089
        %v4091 = vsel %vm1507, %v4083, 0.0
        %4092 = vadd.xlane.f32.xlu0 %v4091
        %v4093 = vpop.xlane.xlu0 %4092
        %v4094 = vsel %vm1507, %v4084, 0.0
        %4095 = vadd.xlane.f32.xlu0 %v4094
        %v4096 = vpop.xlane.xlu0 %4095
        %v4097 = vsel %vm1507, %v4085, 0.0
        %4098 = vadd.xlane.f32.xlu0 %v4097
        %v4099 = vpop.xlane.xlu0 %4098
        %v4100 = vsel %vm1507, %v4086, 0.0
        %4101 = vadd.xlane.f32.xlu0 %v4100
        %v4102 = vpop.xlane.xlu0 %4101
        %v4103 = vsel %vm1507, %v4087, 0.0
        %4104 = vadd.xlane.f32.xlu0 %v4103
        %v4105 = vpop.xlane.xlu0 %4104
        %v4106 = vmul.f32 %v4090, %v1614
        %v4107 = vmul.f32 %v4093, %v1614
        %v4108 = vmul.f32 %v4096, %v1614
        %v4109 = vmul.f32 %v4099, %v1614
        %v4110 = vmul.f32 %v4102, %v1614
        %v4111 = vmul.f32 %v4105, %v1614
        %v4112 = vadd.f32 %v4106, 1e-05
        %v4113 = vadd.f32 %v4107, 1e-05
        %v4114 = vadd.f32 %v4108, 1e-05
        %v4115 = vadd.f32 %v4109, 1e-05
        %v4116 = vadd.f32 %v4110, 1e-05
        %v4117 = vadd.f32 %v4111, 1e-05
        %v4118 = vrsqrt.pop %v4112
        %v4119 = vmul.f32 %v4118, %v4112
        %v4120 = vmul.f32 %v4119, %v4118
        %v4121 = vmul.f32 0.5, %v4120
        %v4122 = vsub.f32 1.5, %v4121
        %v4123 = vmul.f32 %v4118, %v4122
        %vm4124 = vweird.f32 %v4112
        %vm4125 = vweird.f32 %v4118
        %vm4126 = vmor %vm4124, %vm4125
        %v4127 = vsel %vm4126, %v4118, %v4123
        %v4128 = vrsqrt.pop %v4113
        %v4129 = vmul.f32 %v4128, %v4113
        %v4130 = vmul.f32 %v4129, %v4128
        %v4131 = vmul.f32 0.5, %v4130
        %v4132 = vsub.f32 1.5, %v4131
        %v4133 = vmul.f32 %v4128, %v4132
        %vm4134 = vweird.f32 %v4113
        %vm4135 = vweird.f32 %v4128
        %vm4136 = vmor %vm4134, %vm4135
        %v4137 = vsel %vm4136, %v4128, %v4133
        %v4138 = vrsqrt.pop %v4114
        %v4139 = vmul.f32 %v4138, %v4114
        %v4140 = vmul.f32 %v4139, %v4138
        %v4141 = vmul.f32 0.5, %v4140
        %v4142 = vsub.f32 1.5, %v4141
        %v4143 = vmul.f32 %v4138, %v4142
        %vm4144 = vweird.f32 %v4114
        %vm4145 = vweird.f32 %v4138
        %vm4146 = vmor %vm4144, %vm4145
        %v4147 = vsel %vm4146, %v4138, %v4143
        %v4148 = vrsqrt.pop %v4115
        %v4149 = vmul.f32 %v4148, %v4115
        %v4150 = vmul.f32 %v4149, %v4148
        %v4151 = vmul.f32 0.5, %v4150
        %v4152 = vsub.f32 1.5, %v4151
        %v4153 = vmul.f32 %v4148, %v4152
        %vm4154 = vweird.f32 %v4115
        %vm4155 = vweird.f32 %v4148
        %vm4156 = vmor %vm4154, %vm4155
        %v4157 = vsel %vm4156, %v4148, %v4153
        %v4158 = vrsqrt.pop %v4116
        %v4159 = vmul.f32 %v4158, %v4116
        %v4160 = vmul.f32 %v4159, %v4158
        %v4161 = vmul.f32 0.5, %v4160
        %v4162 = vsub.f32 1.5, %v4161
        %v4163 = vmul.f32 %v4158, %v4162
        %vm4164 = vweird.f32 %v4116
        %vm4165 = vweird.f32 %v4158
        %vm4166 = vmor %vm4164, %vm4165
        %v4167 = vsel %vm4166, %v4158, %v4163
        %v4168 = vrsqrt.pop %v4117
        %v4169 = vmul.f32 %v4168, %v4117
        %v4170 = vmul.f32 %v4169, %v4168
        %v4171 = vmul.f32 0.5, %v4170
        %v4172 = vsub.f32 1.5, %v4171
        %v4173 = vmul.f32 %v4168, %v4172
        %vm4174 = vweird.f32 %v4117
        %vm4175 = vweird.f32 %v4168
        %vm4176 = vmor %vm4174, %vm4175
        %v4177 = vsel %vm4176, %v4168, %v4173
        %v4178 = vmul.f32 %v4076, %v4127
        %v4179 = vmul.f32 %v4077, %v4137
        %v4180 = vmul.f32 %v4078, %v4147
        %v4181 = vmul.f32 %v4079, %v4157
        %v4182 = vmul.f32 %v4080, %v4167
        %v4183 = vmul.f32 %v4081, %v4177
        %v4184 = vld [vmem:[%s24] sm:$0x1]
        %v4186 = vperm.slane %v4184, 0
        %v4188 = vmul.f32 %v4178, %v4186
        %v4189 = vmul.f32 %v4179, %v4186
        %v4190 = vmul.f32 %v4180, %v4186
        %v4191 = vmul.f32 %v4181, %v4186
        %v4192 = vmul.f32 %v4182, %v4186
        %v4193 = vmul.f32 %v4183, %v4186
        %v4194 = vld [vmem:[%s25] sm:$0x1]
        %v4196 = vperm.slane %v4194, 0
        %v4198 = vadd.f32 %v4188, %v4196
        %v4199 = vadd.f32 %v4189, %v4196
        %v4200 = vadd.f32 %v4190, %v4196
        %v4201 = vadd.f32 %v4191, %v4196
        %v4202 = vadd.f32 %v4192, %v4196
        %v4203 = vadd.f32 %v4193, %v4196
        %v4204 = vadd.s32 %v1563, 16
        %v4205 = vadd.s32 %v1563, 24
        %v4206 = vadd.s32 %v1563, 32
        %v4207 = vadd.s32 %v1563, 40
        %v4208 = vadd.s32 %v1563, 48
        %v4209 = vadd.s32 %v1563, 56
        %v4210 = vadd.s32 %v1563, 64
        %v4211 = vadd.s32 %v1563, 72
        %v4212 = vadd.s32 %v1563, 80
        %v4213 = vadd.s32 %v1563, 88
        %v4214 = vadd.s32 %v1563, 96
        %v4215 = vadd.s32 %v1563, 104
        %v4216 = vadd.s32 %v1563, 112
        %v4217 = vadd.s32 %v1563, 120
        %vm4218 = vcmp.eq.s32.totalorder %v1563, 0
        %vm4219 = vcmp.eq.s32.totalorder %v1564, 0
        %vm4220 = vcmp.eq.s32.totalorder %v4204, 0
        %vm4221 = vcmp.eq.s32.totalorder %v4205, 0
        %vm4222 = vcmp.eq.s32.totalorder %v4206, 0
        %vm4223 = vcmp.eq.s32.totalorder %v4207, 0
        %vm4224 = vcmp.eq.s32.totalorder %v4208, 0
        %vm4225 = vcmp.eq.s32.totalorder %v4209, 0
        %vm4226 = vcmp.eq.s32.totalorder %v4210, 0
        %vm4227 = vcmp.eq.s32.totalorder %v4211, 0
        %vm4228 = vcmp.eq.s32.totalorder %v4212, 0
        %vm4229 = vcmp.eq.s32.totalorder %v4213, 0
        %vm4230 = vcmp.eq.s32.totalorder %v4214, 0
        %vm4231 = vcmp.eq.s32.totalorder %v4215, 0
        %vm4232 = vcmp.eq.s32.totalorder %v4216, 0
        %vm4233 = vcmp.eq.s32.totalorder %v4217, 0
        %vm4234 = vcmp.eq.s32.totalorder %v1753, 13
        %vm4235 = vmand %vm4218, %vm4234
        %vm4236 = vmand %vm4219, %vm4234
        %vm4237 = vmand %vm4220, %vm4234
        %vm4238 = vmand %vm4221, %vm4234
        %vm4239 = vmand %vm4222, %vm4234
        %vm4240 = vmand %vm4223, %vm4234
        %vm4241 = vmand %vm4224, %vm4234
        %vm4242 = vmand %vm4225, %vm4234
        %vm4243 = vmand %vm4226, %vm4234
        %vm4244 = vmand %vm4227, %vm4234
        %vm4245 = vmand %vm4228, %vm4234
        %vm4246 = vmand %vm4229, %vm4234
        %vm4247 = vmand %vm4230, %vm4234
        %vm4248 = vmand %vm4231, %vm4234
        %vm4249 = vmand %vm4232, %vm4234
        %vm4250 = vmand %vm4233, %vm4234
        %v4251 = vsel %vm4235, 1.0, 0.0
        %v4252 = vsel %vm4236, 1.0, 0.0
        %v4253 = vsel %vm4237, 1.0, 0.0
        %v4254 = vsel %vm4238, 1.0, 0.0
        %v4255 = vsel %vm4239, 1.0, 0.0
        %v4256 = vsel %vm4240, 1.0, 0.0
        %v4257 = vsel %vm4241, 1.0, 0.0
        %v4258 = vsel %vm4242, 1.0, 0.0
        %v4259 = vsel %vm4243, 1.0, 0.0
        %v4260 = vsel %vm4244, 1.0, 0.0
        %v4261 = vsel %vm4245, 1.0, 0.0
        %v4262 = vsel %vm4246, 1.0, 0.0
        %v4263 = vsel %vm4247, 1.0, 0.0
        %v4264 = vsel %vm4248, 1.0, 0.0
        %v4265 = vsel %vm4249, 1.0, 0.0
        %v4266 = vsel %vm4250, 1.0, 0.0
        %v4267 = vadd.f32 %v4251, 0.0
        %v4268 = vadd.f32 %v4252, 0.0
        %v4269 = vadd.f32 %v4253, 0.0
        %v4270 = vadd.f32 %v4254, 0.0
        %v4271 = vadd.f32 %v4255, 0.0
        %v4272 = vadd.f32 %v4256, 0.0
        %v4273 = vadd.f32 %v4257, 0.0
        %v4274 = vadd.f32 %v4258, 0.0
        %v4275 = vadd.f32 %v4259, 0.0
        %v4276 = vadd.f32 %v4260, 0.0
        %v4277 = vadd.f32 %v4261, 0.0
        %v4278 = vadd.f32 %v4262, 0.0
        %v4279 = vadd.f32 %v4263, 0.0
        %v4280 = vadd.f32 %v4264, 0.0
        %v4281 = vadd.f32 %v4265, 0.0
        %v4282 = vadd.f32 %v4266, 0.0
        %vm4283 = vcmp.eq.s32.totalorder %v1563, 1
        %vm4284 = vcmp.eq.s32.totalorder %v1564, 1
        %vm4285 = vcmp.eq.s32.totalorder %v4204, 1
        %vm4286 = vcmp.eq.s32.totalorder %v4205, 1
        %vm4287 = vcmp.eq.s32.totalorder %v4206, 1
        %vm4288 = vcmp.eq.s32.totalorder %v4207, 1
        %vm4289 = vcmp.eq.s32.totalorder %v4208, 1
        %vm4290 = vcmp.eq.s32.totalorder %v4209, 1
        %vm4291 = vcmp.eq.s32.totalorder %v4210, 1
        %vm4292 = vcmp.eq.s32.totalorder %v4211, 1
        %vm4293 = vcmp.eq.s32.totalorder %v4212, 1
        %vm4294 = vcmp.eq.s32.totalorder %v4213, 1
        %vm4295 = vcmp.eq.s32.totalorder %v4214, 1
        %vm4296 = vcmp.eq.s32.totalorder %v4215, 1
        %vm4297 = vcmp.eq.s32.totalorder %v4216, 1
        %vm4298 = vcmp.eq.s32.totalorder %v4217, 1
        %vm4299 = vcmp.eq.s32.totalorder %v1753, 28
        %vm4300 = vmand %vm4283, %vm4299
        %vm4301 = vmand %vm4284, %vm4299
        %vm4302 = vmand %vm4285, %vm4299
        %vm4303 = vmand %vm4286, %vm4299
        %vm4304 = vmand %vm4287, %vm4299
        %vm4305 = vmand %vm4288, %vm4299
        %vm4306 = vmand %vm4289, %vm4299
        %vm4307 = vmand %vm4290, %vm4299
        %vm4308 = vmand %vm4291, %vm4299
        %vm4309 = vmand %vm4292, %vm4299
        %vm4310 = vmand %vm4293, %vm4299
        %vm4311 = vmand %vm4294, %vm4299
        %vm4312 = vmand %vm4295, %vm4299
        %vm4313 = vmand %vm4296, %vm4299
        %vm4314 = vmand %vm4297, %vm4299
        %vm4315 = vmand %vm4298, %vm4299
        %v4316 = vsel %vm4300, 1.0, 0.0
        %v4317 = vsel %vm4301, 1.0, 0.0
        %v4318 = vsel %vm4302, 1.0, 0.0
        %v4319 = vsel %vm4303, 1.0, 0.0
        %v4320 = vsel %vm4304, 1.0, 0.0
        %v4321 = vsel %vm4305, 1.0, 0.0
        %v4322 = vsel %vm4306, 1.0, 0.0
        %v4323 = vsel %vm4307, 1.0, 0.0
        %v4324 = vsel %vm4308, 1.0, 0.0
        %v4325 = vsel %vm4309, 1.0, 0.0
        %v4326 = vsel %vm4310, 1.0, 0.0
        %v4327 = vsel %vm4311, 1.0, 0.0
        %v4328 = vsel %vm4312, 1.0, 0.0
        %v4329 = vsel %vm4313, 1.0, 0.0
        %v4330 = vsel %vm4314, 1.0, 0.0
        %v4331 = vsel %vm4315, 1.0, 0.0
        %v4332 = vadd.f32 %v4267, %v4316
        %v4333 = vadd.f32 %v4268, %v4317
        %v4334 = vadd.f32 %v4269, %v4318
        %v4335 = vadd.f32 %v4270, %v4319
        %v4336 = vadd.f32 %v4271, %v4320
        %v4337 = vadd.f32 %v4272, %v4321
        %v4338 = vadd.f32 %v4273, %v4322
        %v4339 = vadd.f32 %v4274, %v4323
        %v4340 = vadd.f32 %v4275, %v4324
        %v4341 = vadd.f32 %v4276, %v4325
        %v4342 = vadd.f32 %v4277, %v4326
        %v4343 = vadd.f32 %v4278, %v4327
        %v4344 = vadd.f32 %v4279, %v4328
        %v4345 = vadd.f32 %v4280, %v4329
        %v4346 = vadd.f32 %v4281, %v4330
        %v4347 = vadd.f32 %v4282, %v4331
        %vm4348 = vcmp.eq.s32.totalorder %v1563, 2
        %vm4349 = vcmp.eq.s32.totalorder %v1564, 2
        %vm4350 = vcmp.eq.s32.totalorder %v4204, 2
        %vm4351 = vcmp.eq.s32.totalorder %v4205, 2
        %vm4352 = vcmp.eq.s32.totalorder %v4206, 2
        %vm4353 = vcmp.eq.s32.totalorder %v4207, 2
        %vm4354 = vcmp.eq.s32.totalorder %v4208, 2
        %vm4355 = vcmp.eq.s32.totalorder %v4209, 2
        %vm4356 = vcmp.eq.s32.totalorder %v4210, 2
        %vm4357 = vcmp.eq.s32.totalorder %v4211, 2
        %vm4358 = vcmp.eq.s32.totalorder %v4212, 2
        %vm4359 = vcmp.eq.s32.totalorder %v4213, 2
        %vm4360 = vcmp.eq.s32.totalorder %v4214, 2
        %vm4361 = vcmp.eq.s32.totalorder %v4215, 2
        %vm4362 = vcmp.eq.s32.totalorder %v4216, 2
        %vm4363 = vcmp.eq.s32.totalorder %v4217, 2
        %vm4364 = vcmp.eq.s32.totalorder %v1753, 46
        %vm4365 = vmand %vm4348, %vm4364
        %vm4366 = vmand %vm4349, %vm4364
        %vm4367 = vmand %vm4350, %vm4364
        %vm4368 = vmand %vm4351, %vm4364
        %vm4369 = vmand %vm4352, %vm4364
        %vm4370 = vmand %vm4353, %vm4364
        %vm4371 = vmand %vm4354, %vm4364
        %vm4372 = vmand %vm4355, %vm4364
        %vm4373 = vmand %vm4356, %vm4364
        %vm4374 = vmand %vm4357, %vm4364
        %vm4375 = vmand %vm4358, %vm4364
        %vm4376 = vmand %vm4359, %vm4364
        %vm4377 = vmand %vm4360, %vm4364
        %vm4378 = vmand %vm4361, %vm4364
        %vm4379 = vmand %vm4362, %vm4364
        %vm4380 = vmand %vm4363, %vm4364
        %v4381 = vsel %vm4365, 1.0, 0.0
        %v4382 = vsel %vm4366, 1.0, 0.0
        %v4383 = vsel %vm4367, 1.0, 0.0
        %v4384 = vsel %vm4368, 1.0, 0.0
        %v4385 = vsel %vm4369, 1.0, 0.0
        %v4386 = vsel %vm4370, 1.0, 0.0
        %v4387 = vsel %vm4371, 1.0, 0.0
        %v4388 = vsel %vm4372, 1.0, 0.0
        %v4389 = vsel %vm4373, 1.0, 0.0
        %v4390 = vsel %vm4374, 1.0, 0.0
        %v4391 = vsel %vm4375, 1.0, 0.0
        %v4392 = vsel %vm4376, 1.0, 0.0
        %v4393 = vsel %vm4377, 1.0, 0.0
        %v4394 = vsel %vm4378, 1.0, 0.0
        %v4395 = vsel %vm4379, 1.0, 0.0
        %v4396 = vsel %vm4380, 1.0, 0.0
        %v4397 = vadd.f32 %v4332, %v4381
        %v4398 = vadd.f32 %v4333, %v4382
        %v4399 = vadd.f32 %v4334, %v4383
        %v4400 = vadd.f32 %v4335, %v4384
        %v4401 = vadd.f32 %v4336, %v4385
        %v4402 = vadd.f32 %v4337, %v4386
        %v4403 = vadd.f32 %v4338, %v4387
        %v4404 = vadd.f32 %v4339, %v4388
        %v4405 = vadd.f32 %v4340, %v4389
        %v4406 = vadd.f32 %v4341, %v4390
        %v4407 = vadd.f32 %v4342, %v4391
        %v4408 = vadd.f32 %v4343, %v4392
        %v4409 = vadd.f32 %v4344, %v4393
        %v4410 = vadd.f32 %v4345, %v4394
        %v4411 = vadd.f32 %v4346, %v4395
        %v4412 = vadd.f32 %v4347, %v4396
        %vm4413 = vcmask 392192
        %v4415 = vsel %vm4413, %v4397, 0
        %v4418 = vsel %vm4413, %v4398, 0
        %v4421 = vsel %vm4413, %v4399, 0
        %v4424 = vsel %vm4413, %v4400, 0
        %v4427 = vsel %vm4413, %v4401, 0
        %v4430 = vsel %vm4413, %v4402, 0
        %v4433 = vsel %vm4413, %v4403, 0
        %v4436 = vsel %vm4413, %v4404, 0
        %v4439 = vsel %vm4413, %v4405, 0
        %v4442 = vsel %vm4413, %v4406, 0
        %v4445 = vsel %vm4413, %v4407, 0
        %v4448 = vsel %vm4413, %v4408, 0
        %v4451 = vsel %vm4413, %v4409, 0
        %v4454 = vsel %vm4413, %v4410, 0
        %v4457 = vsel %vm4413, %v4411, 0
        %v4460 = vsel %vm4413, %v4412, 0
        %4462 = vmatpush.msra.mxu0 0.0
        %4463 = vmatpush.msra.mxu0 0.0
        %4464 = vmatpush.msra.mxu0 0.0
        %4465 = vmatpush.msra.mxu0 0.0
        %4466 = vmatpush.msra.mxu0 0.0
        %4467 = vmatpush.msra.mxu0 0.0
        %4468 = vmatpush.msra.mxu0 0.0
        %4469 = vmatpush.msra.mxu0 0.0
        %4470 = vmatpush.msra.mxu0 0.0
        %4471 = vmatpush.msra.mxu0 0.0
        %4472 = vmatpush.msra.mxu0 %v4203
        %4473 = vmatpush.msra.mxu0 %v4202
        %4474 = vmatpush.msra.mxu0 %v4201
        %4475 = vmatpush.msra.mxu0 %v4200
        %4476 = vmatpush.msra.mxu0 %v4199
        %4477 = vmatpush.msra.mxu0 %v4198
        %4478 = vmatmul.f32.gmra.mxu0 %v4415
        %v4479 = vpop.f32.mrf.mxu0
        %v4480 = vadd.f32 0.0, %v4479
        %4481 = vmatmul.f32.gmra.mxu0 %v4418
        %v4482 = vpop.f32.mrf.mxu0
        %v4483 = vadd.f32 0.0, %v4482
        %4484 = vmatmul.f32.gmra.mxu0 %v4421
        %v4485 = vpop.f32.mrf.mxu0
        %v4486 = vadd.f32 0.0, %v4485
        %4487 = vmatmul.f32.gmra.mxu0 %v4424
        %v4488 = vpop.f32.mrf.mxu0
        %v4489 = vadd.f32 0.0, %v4488
        %4490 = vmatmul.f32.gmra.mxu0 %v4427
        %v4491 = vpop.f32.mrf.mxu0
        %v4492 = vadd.f32 0.0, %v4491
        %4493 = vmatmul.f32.gmra.mxu0 %v4430
        %v4494 = vpop.f32.mrf.mxu0
        %v4495 = vadd.f32 0.0, %v4494
        %4496 = vmatmul.f32.gmra.mxu0 %v4433
        %v4497 = vpop.f32.mrf.mxu0
        %v4498 = vadd.f32 0.0, %v4497
        %4499 = vmatmul.f32.gmra.mxu0 %v4436
        %v4500 = vpop.f32.mrf.mxu0
        %v4501 = vadd.f32 0.0, %v4500
        %4502 = vmatmul.f32.gmra.mxu0 %v4439
        %v4503 = vpop.f32.mrf.mxu0
        %v4504 = vadd.f32 0.0, %v4503
        %4505 = vmatmul.f32.gmra.mxu0 %v4442
        %v4506 = vpop.f32.mrf.mxu0
        %v4507 = vadd.f32 0.0, %v4506
        %4508 = vmatmul.f32.gmra.mxu0 %v4445
        %v4509 = vpop.f32.mrf.mxu0
        %v4510 = vadd.f32 0.0, %v4509
        %4511 = vmatmul.f32.gmra.mxu0 %v4448
        %v4512 = vpop.f32.mrf.mxu0
        %v4513 = vadd.f32 0.0, %v4512
        %4514 = vmatmul.f32.gmra.mxu0 %v4451
        %v4515 = vpop.f32.mrf.mxu0
        %v4516 = vadd.f32 0.0, %v4515
        %4517 = vmatmul.f32.gmra.mxu0 %v4454
        %v4518 = vpop.f32.mrf.mxu0
        %v4519 = vadd.f32 0.0, %v4518
        %4520 = vmatmul.f32.gmra.mxu0 %v4457
        %v4521 = vpop.f32.mrf.mxu0
        %v4522 = vadd.f32 0.0, %v4521
        %4523 = vmatmul.f32.gmra.mxu0 %v4460
        %v4524 = vpop.f32.mrf.mxu0
        %v4525 = vadd.f32 0.0, %v4524
        %4526 = vdwg.mxu0
        %v4527 = vpack.c.bf16 %v4483, %v4480
        %v4528 = vpack.c.bf16 %v4489, %v4486
        %v4529 = vpack.c.bf16 %v4495, %v4492
        %v4530 = vpack.c.bf16 %v4501, %v4498
        %v4531 = vpack.c.bf16 %v4507, %v4504
        %v4532 = vpack.c.bf16 %v4513, %v4510
        %v4533 = vpack.c.bf16 %v4519, %v4516
        %v4534 = vpack.c.bf16 %v4525, %v4522
        %v4535 = vld [vmem:[%s26] sm:$0xf]
        %v4536 = vld [vmem:[%s26 + $0x4] sm:$0xf]
        %v4537 = vld [vmem:[%s26 + $0x8] sm:$0xf]
        %v4538 = vld [vmem:[%s26 + $0xc] sm:$0xf]
        %v4543 = vunpack.c.l.b16 %v4535
        %v4544 = vunpack.c.l.b16 %v4536
        %v4545 = vunpack.c.l.b16 %v4537
        %v4546 = vunpack.c.l.b16 %v4538
        %v4547 = vpack.c.b16 %v4544, %v4543
        %v4548 = vpack.c.b16 %v4546, %v4545
        %v4552 = vsel %vm1507, %v4527, 0
        %v4555 = vsel %vm1507, %v4528, 0
        %v4558 = vsel %vm1507, %v4529, 0
        %v4561 = vsel %vm1507, %v4530, 0
        %v4564 = vsel %vm1507, %v4531, 0
        %v4567 = vsel %vm1507, %v4532, 0
        %v4570 = vsel %vm1507, %v4533, 0
        %v4573 = vsel %vm1507, %v4534, 0
        %4575 = vmatpush.bf16.msra.mxu0 0
        %4576 = vmatpush.bf16.msra.mxu0 0
        %4577 = vmatpush.bf16.msra.mxu0 0
        %4578 = vmatpush.bf16.msra.mxu0 0
        %4579 = vmatpush.bf16.msra.mxu0 0
        %4580 = vmatpush.bf16.msra.mxu0 0
        %4581 = vmatpush.bf16.msra.mxu0 %v4548
        %4582 = vmatpush.bf16.msra.mxu0 %v4547
        %4583 = vmatmul.bf16.gmra.mxu0 %v4552
        %v4584 = vpop.f32.mrf.mxu0
        %v4585 = vadd.f32 0.0, %v4584
        %v4586 = vpop.f32.mrf.mxu0
        %v4587 = vadd.f32 0.0, %v4586
        %4588 = vmatmul.bf16.gmra.mxu0 %v4555
        %v4589 = vpop.f32.mrf.mxu0
        %v4590 = vadd.f32 0.0, %v4589
        %v4591 = vpop.f32.mrf.mxu0
        %v4592 = vadd.f32 0.0, %v4591
        %4593 = vmatmul.bf16.gmra.mxu0 %v4558
        %v4594 = vpop.f32.mrf.mxu0
        %v4595 = vadd.f32 0.0, %v4594
        %v4596 = vpop.f32.mrf.mxu0
        %v4597 = vadd.f32 0.0, %v4596
        %4598 = vmatmul.bf16.gmra.mxu0 %v4561
        %v4599 = vpop.f32.mrf.mxu0
        %v4600 = vadd.f32 0.0, %v4599
        %v4601 = vpop.f32.mrf.mxu0
        %v4602 = vadd.f32 0.0, %v4601
        %4603 = vmatmul.bf16.gmra.mxu0 %v4564
        %v4604 = vpop.f32.mrf.mxu0
        %v4605 = vadd.f32 0.0, %v4604
        %v4606 = vpop.f32.mrf.mxu0
        %v4607 = vadd.f32 0.0, %v4606
        %4608 = vmatmul.bf16.gmra.mxu0 %v4567
        %v4609 = vpop.f32.mrf.mxu0
        %v4610 = vadd.f32 0.0, %v4609
        %v4611 = vpop.f32.mrf.mxu0
        %v4612 = vadd.f32 0.0, %v4611
        %4613 = vmatmul.bf16.gmra.mxu0 %v4570
        %v4614 = vpop.f32.mrf.mxu0
        %v4615 = vadd.f32 0.0, %v4614
        %v4616 = vpop.f32.mrf.mxu0
        %v4617 = vadd.f32 0.0, %v4616
        %4618 = vmatmul.bf16.gmra.mxu0 %v4573
        %v4619 = vpop.f32.mrf.mxu0
        %v4620 = vadd.f32 0.0, %v4619
        %v4621 = vpop.f32.mrf.mxu0
        %v4622 = vadd.f32 0.0, %v4621
        %4623 = vdwg.mxu0
        %v4624 = vmul.f32 %v4585, %v4585
        %v4625 = vmul.f32 %v4587, %v4587
        %v4626 = vmul.f32 %v4590, %v4590
        %v4627 = vmul.f32 %v4592, %v4592
        %v4628 = vmul.f32 %v4595, %v4595
        %v4629 = vmul.f32 %v4597, %v4597
        %v4630 = vmul.f32 %v4600, %v4600
        %v4631 = vmul.f32 %v4602, %v4602
        %v4632 = vmul.f32 %v4605, %v4605
        %v4633 = vmul.f32 %v4607, %v4607
        %v4634 = vmul.f32 %v4610, %v4610
        %v4635 = vmul.f32 %v4612, %v4612
        %v4636 = vmul.f32 %v4615, %v4615
        %v4637 = vmul.f32 %v4617, %v4617
        %v4638 = vmul.f32 %v4620, %v4620
        %v4639 = vmul.f32 %v4622, %v4622
        %v4640 = vsel %vm1507, %v4624, 0.0
        %4641 = vadd.xlane.f32.xlu0 %v4640
        %v4642 = vpop.xlane.xlu0 %4641
        %v4643 = vsel %vm1507, %v4625, 0.0
        %4644 = vadd.xlane.f32.xlu0 %v4643
        %v4645 = vpop.xlane.xlu0 %4644
        %v4646 = vsel %vm1507, %v4626, 0.0
        %4647 = vadd.xlane.f32.xlu0 %v4646
        %v4648 = vpop.xlane.xlu0 %4647
        %v4649 = vsel %vm1507, %v4627, 0.0
        %4650 = vadd.xlane.f32.xlu0 %v4649
        %v4651 = vpop.xlane.xlu0 %4650
        %v4652 = vsel %vm1507, %v4628, 0.0
        %4653 = vadd.xlane.f32.xlu0 %v4652
        %v4654 = vpop.xlane.xlu0 %4653
        %v4655 = vsel %vm1507, %v4629, 0.0
        %4656 = vadd.xlane.f32.xlu0 %v4655
        %v4657 = vpop.xlane.xlu0 %4656
        %v4658 = vsel %vm1507, %v4630, 0.0
        %4659 = vadd.xlane.f32.xlu0 %v4658
        %v4660 = vpop.xlane.xlu0 %4659
        %v4661 = vsel %vm1507, %v4631, 0.0
        %4662 = vadd.xlane.f32.xlu0 %v4661
        %v4663 = vpop.xlane.xlu0 %4662
        %v4664 = vsel %vm1507, %v4632, 0.0
        %4665 = vadd.xlane.f32.xlu0 %v4664
        %v4666 = vpop.xlane.xlu0 %4665
        %v4667 = vsel %vm1507, %v4633, 0.0
        %4668 = vadd.xlane.f32.xlu0 %v4667
        %v4669 = vpop.xlane.xlu0 %4668
        %v4670 = vsel %vm1507, %v4634, 0.0
        %4671 = vadd.xlane.f32.xlu0 %v4670
        %v4672 = vpop.xlane.xlu0 %4671
        %v4673 = vsel %vm1507, %v4635, 0.0
        %4674 = vadd.xlane.f32.xlu0 %v4673
        %v4675 = vpop.xlane.xlu0 %4674
        %v4676 = vsel %vm1507, %v4636, 0.0
        %4677 = vadd.xlane.f32.xlu0 %v4676
        %v4678 = vpop.xlane.xlu0 %4677
        %v4679 = vsel %vm1507, %v4637, 0.0
        %4680 = vadd.xlane.f32.xlu0 %v4679
        %v4681 = vpop.xlane.xlu0 %4680
        %v4682 = vsel %vm1507, %v4638, 0.0
        %4683 = vadd.xlane.f32.xlu0 %v4682
        %v4684 = vpop.xlane.xlu0 %4683
        %v4685 = vsel %vm1507, %v4639, 0.0
        %4686 = vadd.xlane.f32.xlu0 %v4685
        %v4687 = vpop.xlane.xlu0 %4686
        %v4688 = vadd.f32 %v4642, 1e-12
        %v4689 = vadd.f32 %v4645, 1e-12
        %v4690 = vadd.f32 %v4648, 1e-12
        %v4691 = vadd.f32 %v4651, 1e-12
        %v4692 = vadd.f32 %v4654, 1e-12
        %v4693 = vadd.f32 %v4657, 1e-12
        %v4694 = vadd.f32 %v4660, 1e-12
        %v4695 = vadd.f32 %v4663, 1e-12
        %v4696 = vadd.f32 %v4666, 1e-12
        %v4697 = vadd.f32 %v4669, 1e-12
        %v4698 = vadd.f32 %v4672, 1e-12
        %v4699 = vadd.f32 %v4675, 1e-12
        %v4700 = vadd.f32 %v4678, 1e-12
        %v4701 = vadd.f32 %v4681, 1e-12
        %v4702 = vadd.f32 %v4684, 1e-12
        %v4703 = vadd.f32 %v4687, 1e-12
        %v4704 = vrsqrt.pop %v4688
        %v4705 = vmul.f32 %v4704, %v4688
        %v4706 = vmul.f32 %v4705, %v4704
        %v4707 = vmul.f32 0.5, %v4706
        %v4708 = vsub.f32 1.5, %v4707
        %v4709 = vmul.f32 %v4704, %v4708
        %vm4710 = vweird.f32 %v4688
        %vm4711 = vweird.f32 %v4704
        %vm4712 = vmor %vm4710, %vm4711
        %v4713 = vsel %vm4712, %v4704, %v4709
        %v4714 = vrsqrt.pop %v4689
        %v4715 = vmul.f32 %v4714, %v4689
        %v4716 = vmul.f32 %v4715, %v4714
        %v4717 = vmul.f32 0.5, %v4716
        %v4718 = vsub.f32 1.5, %v4717
        %v4719 = vmul.f32 %v4714, %v4718
        %vm4720 = vweird.f32 %v4689
        %vm4721 = vweird.f32 %v4714
        %vm4722 = vmor %vm4720, %vm4721
        %v4723 = vsel %vm4722, %v4714, %v4719
        %v4724 = vrsqrt.pop %v4690
        %v4725 = vmul.f32 %v4724, %v4690
        %v4726 = vmul.f32 %v4725, %v4724
        %v4727 = vmul.f32 0.5, %v4726
        %v4728 = vsub.f32 1.5, %v4727
        %v4729 = vmul.f32 %v4724, %v4728
        %vm4730 = vweird.f32 %v4690
        %vm4731 = vweird.f32 %v4724
        %vm4732 = vmor %vm4730, %vm4731
        %v4733 = vsel %vm4732, %v4724, %v4729
        %v4734 = vrsqrt.pop %v4691
        %v4735 = vmul.f32 %v4734, %v4691
        %v4736 = vmul.f32 %v4735, %v4734
        %v4737 = vmul.f32 0.5, %v4736
        %v4738 = vsub.f32 1.5, %v4737
        %v4739 = vmul.f32 %v4734, %v4738
        %vm4740 = vweird.f32 %v4691
        %vm4741 = vweird.f32 %v4734
        %vm4742 = vmor %vm4740, %vm4741
        %v4743 = vsel %vm4742, %v4734, %v4739
        %v4744 = vrsqrt.pop %v4692
        %v4745 = vmul.f32 %v4744, %v4692
        %v4746 = vmul.f32 %v4745, %v4744
        %v4747 = vmul.f32 0.5, %v4746
        %v4748 = vsub.f32 1.5, %v4747
        %v4749 = vmul.f32 %v4744, %v4748
        %vm4750 = vweird.f32 %v4692
        %vm4751 = vweird.f32 %v4744
        %vm4752 = vmor %vm4750, %vm4751
        %v4753 = vsel %vm4752, %v4744, %v4749
        %v4754 = vrsqrt.pop %v4693
        %v4755 = vmul.f32 %v4754, %v4693
        %v4756 = vmul.f32 %v4755, %v4754
        %v4757 = vmul.f32 0.5, %v4756
        %v4758 = vsub.f32 1.5, %v4757
        %v4759 = vmul.f32 %v4754, %v4758
        %vm4760 = vweird.f32 %v4693
        %vm4761 = vweird.f32 %v4754
        %vm4762 = vmor %vm4760, %vm4761
        %v4763 = vsel %vm4762, %v4754, %v4759
        %v4764 = vrsqrt.pop %v4694
        %v4765 = vmul.f32 %v4764, %v4694
        %v4766 = vmul.f32 %v4765, %v4764
        %v4767 = vmul.f32 0.5, %v4766
        %v4768 = vsub.f32 1.5, %v4767
        %v4769 = vmul.f32 %v4764, %v4768
        %vm4770 = vweird.f32 %v4694
        %vm4771 = vweird.f32 %v4764
        %vm4772 = vmor %vm4770, %vm4771
        %v4773 = vsel %vm4772, %v4764, %v4769
        %v4774 = vrsqrt.pop %v4695
        %v4775 = vmul.f32 %v4774, %v4695
        %v4776 = vmul.f32 %v4775, %v4774
        %v4777 = vmul.f32 0.5, %v4776
        %v4778 = vsub.f32 1.5, %v4777
        %v4779 = vmul.f32 %v4774, %v4778
        %vm4780 = vweird.f32 %v4695
        %vm4781 = vweird.f32 %v4774
        %vm4782 = vmor %vm4780, %vm4781
        %v4783 = vsel %vm4782, %v4774, %v4779
        %v4784 = vrsqrt.pop %v4696
        %v4785 = vmul.f32 %v4784, %v4696
        %v4786 = vmul.f32 %v4785, %v4784
        %v4787 = vmul.f32 0.5, %v4786
        %v4788 = vsub.f32 1.5, %v4787
        %v4789 = vmul.f32 %v4784, %v4788
        %vm4790 = vweird.f32 %v4696
        %vm4791 = vweird.f32 %v4784
        %vm4792 = vmor %vm4790, %vm4791
        %v4793 = vsel %vm4792, %v4784, %v4789
        %v4794 = vrsqrt.pop %v4697
        %v4795 = vmul.f32 %v4794, %v4697
        %v4796 = vmul.f32 %v4795, %v4794
        %v4797 = vmul.f32 0.5, %v4796
        %v4798 = vsub.f32 1.5, %v4797
        %v4799 = vmul.f32 %v4794, %v4798
        %vm4800 = vweird.f32 %v4697
        %vm4801 = vweird.f32 %v4794
        %vm4802 = vmor %vm4800, %vm4801
        %v4803 = vsel %vm4802, %v4794, %v4799
        %v4804 = vrsqrt.pop %v4698
        %v4805 = vmul.f32 %v4804, %v4698
        %v4806 = vmul.f32 %v4805, %v4804
        %v4807 = vmul.f32 0.5, %v4806
        %v4808 = vsub.f32 1.5, %v4807
        %v4809 = vmul.f32 %v4804, %v4808
        %vm4810 = vweird.f32 %v4698
        %vm4811 = vweird.f32 %v4804
        %vm4812 = vmor %vm4810, %vm4811
        %v4813 = vsel %vm4812, %v4804, %v4809
        %v4814 = vrsqrt.pop %v4699
        %v4815 = vmul.f32 %v4814, %v4699
        %v4816 = vmul.f32 %v4815, %v4814
        %v4817 = vmul.f32 0.5, %v4816
        %v4818 = vsub.f32 1.5, %v4817
        %v4819 = vmul.f32 %v4814, %v4818
        %vm4820 = vweird.f32 %v4699
        %vm4821 = vweird.f32 %v4814
        %vm4822 = vmor %vm4820, %vm4821
        %v4823 = vsel %vm4822, %v4814, %v4819
        %v4824 = vrsqrt.pop %v4700
        %v4825 = vmul.f32 %v4824, %v4700
        %v4826 = vmul.f32 %v4825, %v4824
        %v4827 = vmul.f32 0.5, %v4826
        %v4828 = vsub.f32 1.5, %v4827
        %v4829 = vmul.f32 %v4824, %v4828
        %vm4830 = vweird.f32 %v4700
        %vm4831 = vweird.f32 %v4824
        %vm4832 = vmor %vm4830, %vm4831
        %v4833 = vsel %vm4832, %v4824, %v4829
        %v4834 = vrsqrt.pop %v4701
        %v4835 = vmul.f32 %v4834, %v4701
        %v4836 = vmul.f32 %v4835, %v4834
        %v4837 = vmul.f32 0.5, %v4836
        %v4838 = vsub.f32 1.5, %v4837
        %v4839 = vmul.f32 %v4834, %v4838
        %vm4840 = vweird.f32 %v4701
        %vm4841 = vweird.f32 %v4834
        %vm4842 = vmor %vm4840, %vm4841
        %v4843 = vsel %vm4842, %v4834, %v4839
        %v4844 = vrsqrt.pop %v4702
        %v4845 = vmul.f32 %v4844, %v4702
        %v4846 = vmul.f32 %v4845, %v4844
        %v4847 = vmul.f32 0.5, %v4846
        %v4848 = vsub.f32 1.5, %v4847
        %v4849 = vmul.f32 %v4844, %v4848
        %vm4850 = vweird.f32 %v4702
        %vm4851 = vweird.f32 %v4844
        %vm4852 = vmor %vm4850, %vm4851
        %v4853 = vsel %vm4852, %v4844, %v4849
        %v4854 = vrsqrt.pop %v4703
        %v4855 = vmul.f32 %v4854, %v4703
        %v4856 = vmul.f32 %v4855, %v4854
        %v4857 = vmul.f32 0.5, %v4856
        %v4858 = vsub.f32 1.5, %v4857
        %v4859 = vmul.f32 %v4854, %v4858
        %vm4860 = vweird.f32 %v4703
        %vm4861 = vweird.f32 %v4854
        %vm4862 = vmor %vm4860, %vm4861
        %v4863 = vsel %vm4862, %v4854, %v4859
        %v4864 = vmul.f32 %v4585, %v4713
        %v4865 = vmul.f32 %v4587, %v4723
        %v4866 = vmul.f32 %v4590, %v4733
        %v4867 = vmul.f32 %v4592, %v4743
        %v4868 = vmul.f32 %v4595, %v4753
        %v4869 = vmul.f32 %v4597, %v4763
        %v4870 = vmul.f32 %v4600, %v4773
        %v4871 = vmul.f32 %v4602, %v4783
        %v4872 = vmul.f32 %v4605, %v4793
        %v4873 = vmul.f32 %v4607, %v4803
        %v4874 = vmul.f32 %v4610, %v4813
        %v4875 = vmul.f32 %v4612, %v4823
        %v4876 = vmul.f32 %v4615, %v4833
        %v4877 = vmul.f32 %v4617, %v4843
        %v4878 = vmul.f32 %v4620, %v4853
        %v4879 = vmul.f32 %v4622, %v4863
        %v4881 = vsel %vm1507, %v4864, 0
        %v4884 = vsel %vm1507, %v4865, 0
        %v4887 = vsel %vm1507, %v4866, 0
        %v4890 = vsel %vm1507, %v4867, 0
        %v4893 = vsel %vm1507, %v4868, 0
        %v4896 = vsel %vm1507, %v4869, 0
        %v4899 = vsel %vm1507, %v4870, 0
        %v4902 = vsel %vm1507, %v4871, 0
        %v4905 = vsel %vm1507, %v4872, 0
        %v4908 = vsel %vm1507, %v4873, 0
        %v4911 = vsel %vm1507, %v4874, 0
        %v4914 = vsel %vm1507, %v4875, 0
        %v4917 = vsel %vm1507, %v4876, 0
        %v4920 = vsel %vm1507, %v4877, 0
        %v4923 = vsel %vm1507, %v4878, 0
        %v4926 = vsel %vm1507, %v4879, 0
        %4928 = vmatpush.xpose.msra.mxu0 %v4926
        %4929 = vmatpush.xpose.msra.mxu0 %v4923
        %4930 = vmatpush.xpose.msra.mxu0 %v4920
        %4931 = vmatpush.xpose.msra.mxu0 %v4917
        %4932 = vmatpush.xpose.msra.mxu0 %v4914
        %4933 = vmatpush.xpose.msra.mxu0 %v4911
        %4934 = vmatpush.xpose.msra.mxu0 %v4908
        %4935 = vmatpush.xpose.msra.mxu0 %v4905
        %4936 = vmatpush.xpose.msra.mxu0 %v4902
        %4937 = vmatpush.xpose.msra.mxu0 %v4899
        %4938 = vmatpush.xpose.msra.mxu0 %v4896
        %4939 = vmatpush.xpose.msra.mxu0 %v4893
        %4940 = vmatpush.xpose.msra.mxu0 %v4890
        %4941 = vmatpush.xpose.msra.mxu0 %v4887
        %4942 = vmatpush.xpose.msra.mxu0 %v4884
        %4943 = vmatpush.xpose.msra.mxu0 %v4881
        %4944 = vmatmul.f32.gmra.mxu0 %v1509
        %v4945 = vpop.f32.mrf.mxu0
        %v4946 = vadd.f32 0.0, %v4945
        %4947 = vdwg.mxu0
        %s4948 = sld [smem:[#allocation2]]
        %v4949 = vstv %s4948
        %v4950 = vmul.f32 %v4949, %v4946
        %4951 = vst [vmem:[%s836] sm:$0x1] %v4950
        %s4952 = sand.u32 %s644, 1
        %s4953 = scalar_lea.sflag [#allocation4], %s4952
        %s4954 = sand.u32 %s644, 1
        %s4955 = scalar_lea.vmem [#allocation3], %s4954
        // Predicated region
        $region133: #{custom_clip_forward.1} parent=131 // pred_check
          %p4956 = pneg %p654
        $region134: #{custom_clip_forward.1} parent=131 // pred_check_branch
          %4958 = sbr.rel (%p4956) target = $region136
        $region135: #{custom_clip_forward.1} parent=131 // pred_region
          %4960 = vsyncadd %s4953, 0
          %s4961 = scalar_lea.hbm %s28, %s43
          %s4963 = sshll.u32 %s4955, 4
          %s4964 = int_to_ptr.vmem [resolvable:$true] %s4963
          %s4965 = sshll.u32 %s4961, 4
          %s4966 = int_to_ptr.hbm [resolvable:$true] %s4965
          %4968 = dma.vmem_to_hbm [thread:$0]  %s4964, 16, %s4966, %s4953
        $region136: #{custom_clip_forward.1} parent=131 // pred_fallthru
          _
      $region132: #{custom_clip_forward.1} parent=5 // pred_fallthru
        _
      %p4969 = scmp.le.s32.totalorder 2, %s38
      // Predicated region
      $region137: #{custom_clip_forward.1} parent=5 // pred_check
        %p4970 = pneg %p4969
      $region138: #{custom_clip_forward.1} parent=5 // pred_check_branch
        %4972 = sbr.rel (%p4970) target = $region140
      $region139: #{custom_clip_forward.1} parent=5 // pred_region
        %s4973 = ssub.s32 %s38, 2
        // Predicated region
        $region141: #{custom_clip_forward.1} parent=139 // pred_check
          %p4974 = pneg %p660
        $region142: #{custom_clip_forward.1} parent=139 // pred_check_branch
          %4976 = sbr.rel (%p4974) target = $region144
        $region143: #{custom_clip_forward.1} parent=139 // pred_region
          %s4977 = sand.u32 %s645, 1
          %s4978 = scalar_lea.sflag [#allocation4], %s4977
          %s4979 = sand.u32 %s645, 1
          %s4980 = scalar_lea.vmem [#allocation3], %s4979
          %4982 = dma.done %s4978, 16
        $region144: #{custom_clip_forward.1} parent=139 // pred_fallthru
          _
      $region140: #{custom_clip_forward.1} parent=5 // pred_fallthru
        _
    $region6: #{custom_clip_forward.1} parent=1 // loop_footer
      %s42 = sadd.s32 1, %s38
    $region7: #{custom_clip_forward.1} parent=1 // loop_footer_branch
      %37 = sbr.rel target = $region3
    $region8: #{custom_clip_forward.1} parent=1 // loop_exit
      _
    %4983 = vsyncpa [#allocation4], 1
    %s4984 = scalar_lea.sflag [#allocation4], 1
    %4985 = vsyncpa %s4984, 1

</llo_original>
